<compile_context>
chip_gen: v7x
topology: tpu7x:2x2x1
jax: 0.10.0
libtpu: 0.0.40
codegen_flags: <defaults>
</compile_context>

<pallas_src>
import functools
import math

import numpy as np
import jax
import jax.numpy as jnp
from jax import lax
from jax.experimental import pallas as pl
from jax.experimental.pallas import tpu as pltpu

LANE = 128


def _round_up(x, m):
    return ((x + m - 1) // m) * m


def _const_index_map(ndim):
    return lambda i: (0,) * ndim


# ----------------------------------------------------------------------------
# Kernel: one grid step == one tile of BT examples; everything stays in VMEM.
# Activation layout: rows = channel-major (c*BT + b) sublanes, length on lanes.
# ----------------------------------------------------------------------------
def _make_kernel(conv_meta, fc_relu, bt):
    def kernel(*refs):
        x_ref = refs[0]
        out_ref = refs[-1]
        p = 1

        act = x_ref[...].astype(jnp.float32)          # (BT, gv_length), C_in == 1
        for meta in conv_meta:
            scat_ref = refs[p]                        # (L_rows, K*psz*lpad)
            wmix_ref = refs[p + 1]                    # (K, C_out*BT, C_in*BT)
            bias_ref = refs[p + 2]                    # (C_out*BT, 1)
            p += 3
            shift_ref = None
            if meta["has_shift"]:
                shift_ref = refs[p]                   # (C_out*BT, 1)
                p += 1
            K, psz, lpad = meta["K"], meta["psz"], meta["lpad_out"]
            seg = psz * lpad

            # (1) ONE fused shift+decimate matmul for all (tap k, pool offset q).
            t = jnp.dot(act, scat_ref[...], preferred_element_type=jnp.float32)
            # (2) per-tap channel mix (block-diagonal over the batch tile).
            y = None
            for k in range(K):
                tk = t[:, k * seg:(k + 1) * seg]      # lane-aligned slice
                c = jnp.dot(wmix_ref[k], tk, preferred_element_type=jnp.float32)
                y = c if y is None else y + c         # (C_out*BT, psz*lpad)
            # (3) max over pooling offsets; bias + ReLU hoisted out of the q loop.
            red = y[:, :lpad]
            for q in range(1, psz):
                red = jnp.maximum(red, y[:, q * lpad:(q + 1) * lpad])
            red = jnp.maximum(red + bias_ref[...], 0.0)
            if shift_ref is not None:                 # BN shift (last block's shift
                red = red + shift_ref[...]            # is folded into FC1 bias)
            act = red                                 # (C_out*BT, lpad)

        # channel-major Flatten: (C_last*BT, lpad) -> (BT, C_last*lpad).
        # Pieces are whole vregs (128-lane, BT-sublane) -> pure vreg moves.
        c_last = conv_meta[-1]["c_out"]
        flat = jnp.concatenate(
            [act[c * bt:(c + 1) * bt, :] for c in range(c_last)], axis=1)

        h = flat
        for j in range(len(fc_relu)):
            w_ref = refs[p]
            b_ref = refs[p + 1]
            p += 2
            h = jnp.dot(h, w_ref[...], preferred_element_type=jnp.float32) + b_ref[...]
            if fc_relu[j]:
                h = jnp.maximum(h, 0.0)

        out_ref[...] = h.astype(out_ref.dtype)        # (BT, 128) full unmasked store

    return kernel


# ----------------------------------------------------------------------------
# Wrapper: single pallas_call for the whole forward pass.
# ----------------------------------------------------------------------------
def _forward_impl(conv_meta, fc_relu, out_dim, out_pad, gv, bt, operands, x):
    x = x.reshape(-1, gv).astype(jnp.float32)         # FeatureExtraction view(-1,1,201)
    B = x.shape[0]
    Bp = _round_up(B, bt)
    if Bp != B:
        x = jnp.pad(x, ((0, Bp - B), (0, 0)))

    ops = [x] + list(operands)
    in_specs = [pl.BlockSpec((bt, gv), lambda i: (i, 0))]
    for arr in operands:                              # params resident in VMEM
        in_specs.append(pl.BlockSpec(arr.shape, _const_index_map(arr.ndim)))

    out = pl.pallas_call(
        _make_kernel(conv_meta, fc_relu, bt),
        out_shape=jax.ShapeDtypeStruct((Bp, out_pad), jnp.float32),
        grid=(Bp // bt,),
        in_specs=in_specs,
        out_specs=pl.BlockSpec((bt, out_pad), lambda i: (i, 0)),
        compiler_params=pltpu.CompilerParams(dimension_semantics=("parallel",)),
    )(*ops)
    return out[:B, :out_dim]


def make_forward(raw, cfg, bt=8):
    conv_meta, fc_relu, operands, out_dim, out_pad = pack_operands(raw, cfg, bt)
    gv = cfg["gv_length"]

    def fwd(ops, x):
        return _forward_impl(conv_meta, fc_relu, out_dim, out_pad, gv, bt, ops, x)

    return jax.jit(fwd), operands


# ----------------------------------------------------------------------------
# Host-side operand packing (selection matrices, block-diag channel mix,
# per-row bias/shift columns, padded FC weights, BN folds).
# ----------------------------------------------------------------------------
def pack_operands(raw, cfg, bt):
    gv, K, psz, pst = cfg["gv_length"], cfg["cfs"], cfg["psz"], cfg["pst"]
    pad_left = (K - 1) // 2          # torch 'same': extra pad goes on the right
    eps = 1e-5

    conv_meta, operands = [], []
    n_conv = len(raw["conv"])
    L_valid, L_rows = gv, gv
    last_shift = None
    c_last = 1
    for i, blk in enumerate(raw["conv"]):
        w = np.asarray(blk["w"], np.float32)          # (C_out, C_in, K) torch layout
        b = np.asarray(blk["b"], np.float32)
        gamma = np.asarray(blk["gamma"], np.float32)
        beta = np.asarray(blk["beta"], np.float32)
        mean = np.asarray(blk["mean"], np.float32)
        var = np.asarray(blk["var"], np.float32)
        scale = gamma / np.sqrt(var + eps)
        assert np.all(scale > 0), "BN scale must be > 0 for the ReLU/max-pool fold"
        shift = (beta - mean * scale).astype(np.float32)
        w_eff = (w * scale[:, None, None]).astype(np.float32)
        b_eff = (b * scale).astype(np.float32)

        c_out = w.shape[0]
        L_out = (L_valid - psz) // pst + 1
        lpad_out = _round_up(L_out, LANE)

        # Fused shift + stride decimation selection matrix, segments ordered (k, q),
        # each segment padded to 128 lanes.  Out-of-range taps -> all-zero rows/cols
        # (implicit 'same' zero padding; garbage lanes of the input are never read).
        l = np.arange(L_rows)[:, None]
        pcol = np.arange(lpad_out)[None, :]
        segs = []
        for k in range(K):
            for q in range(psz):
                src = pst * pcol + q + k - pad_left
                sel = (l == src) & (pcol < L_out) & (src >= 0) & (src < L_valid)
                segs.append(sel.astype(np.float32))
        scat = np.concatenate(segs, axis=1)           # (L_rows, K*psz*lpad_out)

        # Per-tap channel mix, block-diagonal over the batch tile.
        eye = np.eye(bt, dtype=np.float32)
        wmix = np.stack([np.kron(w_eff[:, :, k], eye) for k in range(K)], axis=0)
        bias_col = np.repeat(b_eff, bt)[:, None].astype(np.float32)
        shift_col = np.repeat(shift, bt)[:, None].astype(np.float32)

        has_shift = i < n_conv - 1     # last conv block's shift folded into FC1 bias
        conv_meta.append(dict(K=K, psz=psz, lpad_out=lpad_out,
                              c_out=c_out, has_shift=has_shift))
        operands += [jnp.asarray(scat), jnp.asarray(wmix), jnp.asarray(bias_col)]
        if has_shift:
            operands.append(jnp.asarray(shift_col))

        last_shift = shift
        c_last, L_valid, L_rows = c_out, L_out, lpad_out

    lpad_last, L_last = L_rows, L_valid

    fc_relu = []
    n_fc = len(raw["fc"])
    out_dim = out_pad = None
    for bi, blk in enumerate(raw["fc"]):
        w1 = np.asarray(blk["w1"], np.float32)        # (h, in) torch layout
        b1 = np.asarray(blk["b1"], np.float32)
        w2 = np.asarray(blk["w2"], np.float32)        # (out, h)
        b2 = np.asarray(blk["b2"], np.float32)
        if bi == 0:
            h = w1.shape[0]
            w1r = w1.T.reshape(c_last, L_last, h)     # channel-major Flatten fold
            w1pad = np.zeros((c_last, lpad_last, h), np.float32)
            w1pad[:, :L_last, :] = w1r                # zero rows for padded lanes
            w1pad = w1pad.reshape(c_last * lpad_last, h)
            b1_adj = (b1 + np.einsum("c,clh->h", last_shift, w1r)).astype(np.float32)
            operands += [jnp.asarray(w1pad), jnp.asarray(b1_adj[None, :])]
        else:
            operands += [jnp.asarray(w1.T.copy()), jnp.asarray(b1[None, :])]
        fc_relu.append(True)
        if bi == n_fc - 1:                            # pad output features to 128 lanes
            out_dim = w2.shape[0]
            out_pad = _round_up(out_dim, LANE)
            w2pad = np.zeros((w2.shape[1], out_pad), np.float32)
            w2pad[:, :out_dim] = w2.T
            b2pad = np.zeros((1, out_pad), np.float32)
            b2pad[0, :out_dim] = b2
            operands += [jnp.asarray(w2pad), jnp.asarray(b2pad)]
        else:
            operands += [jnp.asarray(w2.T.copy()), jnp.asarray(b2[None, :])]
        fc_relu.append(False)

    return conv_meta, fc_relu, operands, out_dim, out_pad


# ----------------------------------------------------------------------------
# Torch-equivalent parameter init (xavier_uniform weights / zero biases,
# BatchNorm1d defaults) and a pure-JAX reference for the self-check.
# ----------------------------------------------------------------------------
def init_raw_params(key, cfg):
    cbn, cfs, cbff = cfg["cbn"], cfg["cfs"], cfg["cbff"]
    psz, pst = cfg["psz"], cfg["pst"]
    fc_layers_num, fc_units, fc_out = (cfg["fc_layers_num"], cfg["fc_units"],
                                       cfg["fc_output_size"])
    gv = cfg["gv_length"]

    def xavier(k, shape, fan_in, fan_out):
        a = math.sqrt(6.0 / (fan_in + fan_out))
        return jax.random.uniform(k, shape, jnp.float32, -a, a)

    raw = {"conv": [], "fc": []}
    L, c_in = gv, 1
    for i in range(cbn):
        c_out = cbff ** (4 + i)
        key, wk = jax.random.split(key)
        raw["conv"].append(dict(
            w=xavier(wk, (c_out, c_in, cfs), c_in * cfs, c_out * cfs),
            b=jnp.zeros((c_out,), jnp.float32),
            gamma=jnp.ones((c_out,), jnp.float32),
            beta=jnp.zeros((c_out,), jnp.float32),
            mean=jnp.zeros((c_out,), jnp.float32),
            var=jnp.ones((c_out,), jnp.float32)))
        c_in = c_out
        L = (L - psz) // pst + 1

    feat = c_in * L
    sizes = []
    if fc_layers_num == 1:
        sizes.append((feat, fc_units, fc_out))
    else:
        for i in range(fc_layers_num - 1):
            sizes.append((feat if i == 0 else fc_units, fc_units, fc_units))
        sizes.append((fc_units, fc_units, fc_out))
    for (d_in, h, d_out) in sizes:
        key, k1, k2 = jax.random.split(key, 3)
        raw["fc"].append(dict(
            w1=xavier(k1, (h, d_in), d_in, h), b1=jnp.zeros((h,), jnp.float32),
            w2=xavier(k2, (d_out, h), h, d_out), b2=jnp.zeros((d_out,), jnp.float32)))
    return raw


def reference_forward(raw, cfg, x):
    """Pure-JAX reference (inference: Dropout = id, BatchNorm eval)."""
    K, psz, pst, gv = cfg["cfs"], cfg["psz"], cfg["pst"], cfg["gv_length"]
    pad_left = (K - 1) // 2
    eps = 1e-5
    hi = lax.Precision.HIGHEST
    act = x.reshape(-1, 1, gv).astype(jnp.float32)
    for blk in raw["conv"]:
        y = lax.conv_general_dilated(
            act, blk["w"], window_strides=(1,),
            padding=[(pad_left, K - 1 - pad_left)],
            dimension_numbers=("NCH", "OIH", "NCH"), precision=hi)
        y = jnp.maximum(y + blk["b"][None, :, None], 0.0)
        y = lax.reduce_window(y, -jnp.inf, lax.max, (1, 1, psz), (1, 1, pst), "VALID")
        scale = blk["gamma"] / jnp.sqrt(blk["var"] + eps)
        shift = blk["beta"] - blk["mean"] * scale
        act = y * scale[None, :, None] + shift[None, :, None]
    h = act.reshape(act.shape[0], -1)                 # channel-major Flatten
    for blk in raw["fc"]:
        h = jnp.maximum(jnp.dot(h, blk["w1"].T, precision=hi) + blk["b1"], 0.0)
        h = jnp.dot(h, blk["w2"].T, precision=hi) + blk["b2"]
    return h


if __name__ == "__main__":
    # DartVetterFiscale2024(cbn=2, cfs=3, cbff=2, psz=2, pst=2, rho=0.3,
    #                       fc_layers_num=2, fc_units=32, fc_output_size=5)
    cfg = dict(cbn=2, cfs=3, cbff=2, psz=2, pst=2, rho=0.3,
               fc_layers_num=2, fc_units=32, fc_output_size=5, gv_length=201)

    key = jax.random.PRNGKey(0)
    key, pkey, xkey = jax.random.split(key, 3)
    raw = init_raw_params(pkey, cfg)

    BT = 8                                     # examples per grid step (sublane tile)
    fwd, operands = make_forward(raw, cfg, bt=BT)

    B = 12                                     # pads to 16 -> 2 grid steps (keeps both
    x = jax.random.normal(xkey, (B, cfg["gv_length"]), jnp.float32)  # v7x TCs busy)

    out = jax.block_until_ready(fwd(operands, x))
    assert out.shape == (B, cfg["fc_output_size"]), out.shape
    assert bool(jnp.all(jnp.isfinite(out)))

    ref = reference_forward(raw, cfg, x)
    err = float(jnp.max(jnp.abs(out - ref)))
    assert err < 2e-2, f"max abs err vs reference = {err}"
    print("KERNEL_OK")
</pallas_src>

<mosaic_0001>
module attributes {stable_mosaic.version = 11 : i64} {
  func.func @kernel(%arg0: i32, %arg1: memref<8x201xf32, #tpu.memory_space<vmem>>, %arg2: memref<201x768xf32, #tpu.memory_space<vmem>>, %arg3: memref<3x128x8xf32, #tpu.memory_space<vmem>>, %arg4: memref<128x1xf32, #tpu.memory_space<vmem>>, %arg5: memref<128x1xf32, #tpu.memory_space<vmem>>, %arg6: memref<128x768xf32, #tpu.memory_space<vmem>>, %arg7: memref<3x256x128xf32, #tpu.memory_space<vmem>>, %arg8: memref<256x1xf32, #tpu.memory_space<vmem>>, %arg9: memref<4096x32xf32, #tpu.memory_space<vmem>>, %arg10: memref<1x32xf32, #tpu.memory_space<vmem>>, %arg11: memref<32x32xf32, #tpu.memory_space<vmem>>, %arg12: memref<1x32xf32, #tpu.memory_space<vmem>>, %arg13: memref<32x32xf32, #tpu.memory_space<vmem>>, %arg14: memref<1x32xf32, #tpu.memory_space<vmem>>, %arg15: memref<32x128xf32, #tpu.memory_space<vmem>>, %arg16: memref<1x128xf32, #tpu.memory_space<vmem>>, %arg17: memref<8x128xf32, #tpu.memory_space<vmem>>) attributes {dimension_semantics = [#tpu.dimension_semantics<parallel>], iteration_bounds = array<i64: 2>, scalar_prefetch = 0 : i64, scratch_operands = 0 : i64, tpu.core_type = #tpu.core_type<tc>, window_params = [{transform_indices = @transform_0, window_bounds = array<i64: 8, 201>}, {pipeline_mode = #tpu.pipeline_mode<synchronous>, transform_indices = @transform_1, window_bounds = array<i64: 201, 768>}, {pipeline_mode = #tpu.pipeline_mode<synchronous>, transform_indices = @transform_2, window_bounds = array<i64: 3, 128, 8>}, {pipeline_mode = #tpu.pipeline_mode<synchronous>, transform_indices = @transform_3, window_bounds = array<i64: 128, 1>}, {pipeline_mode = #tpu.pipeline_mode<synchronous>, transform_indices = @transform_4, window_bounds = array<i64: 128, 1>}, {pipeline_mode = #tpu.pipeline_mode<synchronous>, transform_indices = @transform_5, window_bounds = array<i64: 128, 768>}, {pipeline_mode = #tpu.pipeline_mode<synchronous>, transform_indices = @transform_6, window_bounds = array<i64: 3, 256, 128>}, {pipeline_mode = #tpu.pipeline_mode<synchronous>, transform_indices = @transform_7, window_bounds = array<i64: 256, 1>}, {pipeline_mode = #tpu.pipeline_mode<synchronous>, transform_indices = @transform_8, window_bounds = array<i64: 4096, 32>}, {pipeline_mode = #tpu.pipeline_mode<synchronous>, transform_indices = @transform_9, window_bounds = array<i64: 1, 32>}, {pipeline_mode = #tpu.pipeline_mode<synchronous>, transform_indices = @transform_10, window_bounds = array<i64: 32, 32>}, {pipeline_mode = #tpu.pipeline_mode<synchronous>, transform_indices = @transform_11, window_bounds = array<i64: 1, 32>}, {pipeline_mode = #tpu.pipeline_mode<synchronous>, transform_indices = @transform_12, window_bounds = array<i64: 32, 32>}, {pipeline_mode = #tpu.pipeline_mode<synchronous>, transform_indices = @transform_13, window_bounds = array<i64: 1, 32>}, {pipeline_mode = #tpu.pipeline_mode<synchronous>, transform_indices = @transform_14, window_bounds = array<i64: 32, 128>}, {pipeline_mode = #tpu.pipeline_mode<synchronous>, transform_indices = @transform_15, window_bounds = array<i64: 1, 128>}, {transform_indices = @transform_16, window_bounds = array<i64: 8, 128>}]} {
    %c0 = arith.constant 0 : index
    %c0_0 = arith.constant 0 : index
    %0 = vector.load %arg1[%c0, %c0_0] : memref<8x201xf32, #tpu.memory_space<vmem>>, vector<8x201xf32>
    %c0_1 = arith.constant 0 : index
    %c0_2 = arith.constant 0 : index
    %1 = vector.load %arg2[%c0_1, %c0_2] : memref<201x768xf32, #tpu.memory_space<vmem>>, vector<201x768xf32>
    %cst = arith.constant dense<0.000000e+00> : vector<8x768xf32>
    %2 = tpu.matmul %0, %1, %cst {dimension_numbers = #tpu.dot_dimension_numbers<[1], [0], [0], [1], [0, 0, 1, 1], [], []>} : vector<8x201xf32>, vector<201x768xf32>, vector<8x768xf32> -> vector<8x768xf32>
    %3 = vector.extract_strided_slice %2 {offsets = [0, 0], sizes = [8, 256], strides = [1, 1]} : vector<8x768xf32> to vector<8x256xf32>
    %c0_3 = arith.constant 0 : index
    %c0_4 = arith.constant 0 : index
    %c0_5 = arith.constant 0 : index
    %4 = vector.load %arg3[%c0_3, %c0_4, %c0_5] : memref<3x128x8xf32, #tpu.memory_space<vmem>>, vector<1x128x8xf32>
    %5 = vector.shape_cast %4 : vector<1x128x8xf32> to vector<128x8xf32>
    %cst_6 = arith.constant dense<0.000000e+00> : vector<128x256xf32>
    %6 = tpu.matmul %5, %3, %cst_6 {dimension_numbers = #tpu.dot_dimension_numbers<[1], [0], [0], [1], [0, 0, 1, 1], [], []>} : vector<128x8xf32>, vector<8x256xf32>, vector<128x256xf32> -> vector<128x256xf32>
    %7 = vector.extract_strided_slice %2 {offsets = [0, 256], sizes = [8, 256], strides = [1, 1]} : vector<8x768xf32> to vector<8x256xf32>
    %c1 = arith.constant 1 : index
    %c0_7 = arith.constant 0 : index
    %c0_8 = arith.constant 0 : index
    %8 = vector.load %arg3[%c1, %c0_7, %c0_8] : memref<3x128x8xf32, #tpu.memory_space<vmem>>, vector<1x128x8xf32>
    %9 = vector.shape_cast %8 : vector<1x128x8xf32> to vector<128x8xf32>
    %cst_9 = arith.constant dense<0.000000e+00> : vector<128x256xf32>
    %10 = tpu.matmul %9, %7, %cst_9 {dimension_numbers = #tpu.dot_dimension_numbers<[1], [0], [0], [1], [0, 0, 1, 1], [], []>} : vector<128x8xf32>, vector<8x256xf32>, vector<128x256xf32> -> vector<128x256xf32>
    %11 = arith.addf %6, %10 : vector<128x256xf32>
    %12 = vector.extract_strided_slice %2 {offsets = [0, 512], sizes = [8, 256], strides = [1, 1]} : vector<8x768xf32> to vector<8x256xf32>
    %c2 = arith.constant 2 : index
    %c0_10 = arith.constant 0 : index
    %c0_11 = arith.constant 0 : index
    %13 = vector.load %arg3[%c2, %c0_10, %c0_11] : memref<3x128x8xf32, #tpu.memory_space<vmem>>, vector<1x128x8xf32>
    %14 = vector.shape_cast %13 : vector<1x128x8xf32> to vector<128x8xf32>
    %cst_12 = arith.constant dense<0.000000e+00> : vector<128x256xf32>
    %15 = tpu.matmul %14, %12, %cst_12 {dimension_numbers = #tpu.dot_dimension_numbers<[1], [0], [0], [1], [0, 0, 1, 1], [], []>} : vector<128x8xf32>, vector<8x256xf32>, vector<128x256xf32> -> vector<128x256xf32>
    %16 = arith.addf %11, %15 : vector<128x256xf32>
    %17 = vector.extract_strided_slice %16 {offsets = [0, 0], sizes = [128, 128], strides = [1, 1]} : vector<128x256xf32> to vector<128x128xf32>
    %18 = vector.extract_strided_slice %16 {offsets = [0, 128], sizes = [128, 128], strides = [1, 1]} : vector<128x256xf32> to vector<128x128xf32>
    %19 = arith.maximumf %17, %18 : vector<128x128xf32>
    %c0_13 = arith.constant 0 : index
    %c0_14 = arith.constant 0 : index
    %20 = vector.load %arg4[%c0_13, %c0_14] : memref<128x1xf32, #tpu.memory_space<vmem>>, vector<128x1xf32>
    %21 = vector.broadcast %20 : vector<128x1xf32> to vector<128x128xf32>
    %22 = arith.addf %19, %21 : vector<128x128xf32>
    %cst_15 = arith.constant 0.000000e+00 : f32
    %23 = vector.broadcast %cst_15 : f32 to vector<128x128xf32>
    %24 = arith.maximumf %22, %23 : vector<128x128xf32>
    %c0_16 = arith.constant 0 : index
    %c0_17 = arith.constant 0 : index
    %25 = vector.load %arg5[%c0_16, %c0_17] : memref<128x1xf32, #tpu.memory_space<vmem>>, vector<128x1xf32>
    %26 = vector.broadcast %25 : vector<128x1xf32> to vector<128x128xf32>
    %27 = arith.addf %24, %26 : vector<128x128xf32>
    %c0_18 = arith.constant 0 : index
    %c0_19 = arith.constant 0 : index
    %28 = vector.load %arg6[%c0_18, %c0_19] : memref<128x768xf32, #tpu.memory_space<vmem>>, vector<128x768xf32>
    %cst_20 = arith.constant dense<0.000000e+00> : vector<128x768xf32>
    %29 = tpu.matmul %27, %28, %cst_20 {dimension_numbers = #tpu.dot_dimension_numbers<[1], [0], [0], [1], [0, 0, 1, 1], [], []>} : vector<128x128xf32>, vector<128x768xf32>, vector<128x768xf32> -> vector<128x768xf32>
    %30 = vector.extract_strided_slice %29 {offsets = [0, 0], sizes = [128, 256], strides = [1, 1]} : vector<128x768xf32> to vector<128x256xf32>
    %c0_21 = arith.constant 0 : index
    %c0_22 = arith.constant 0 : index
    %c0_23 = arith.constant 0 : index
    %31 = vector.load %arg7[%c0_21, %c0_22, %c0_23] : memref<3x256x128xf32, #tpu.memory_space<vmem>>, vector<1x256x128xf32>
    %32 = vector.shape_cast %31 : vector<1x256x128xf32> to vector<256x128xf32>
    %cst_24 = arith.constant dense<0.000000e+00> : vector<256x256xf32>
    %33 = tpu.matmul %32, %30, %cst_24 {dimension_numbers = #tpu.dot_dimension_numbers<[1], [0], [0], [1], [0, 0, 1, 1], [], []>} : vector<256x128xf32>, vector<128x256xf32>, vector<256x256xf32> -> vector<256x256xf32>
    %34 = vector.extract_strided_slice %29 {offsets = [0, 256], sizes = [128, 256], strides = [1, 1]} : vector<128x768xf32> to vector<128x256xf32>
    %c1_25 = arith.constant 1 : index
    %c0_26 = arith.constant 0 : index
    %c0_27 = arith.constant 0 : index
    %35 = vector.load %arg7[%c1_25, %c0_26, %c0_27] : memref<3x256x128xf32, #tpu.memory_space<vmem>>, vector<1x256x128xf32>
    %36 = vector.shape_cast %35 : vector<1x256x128xf32> to vector<256x128xf32>
    %cst_28 = arith.constant dense<0.000000e+00> : vector<256x256xf32>
    %37 = tpu.matmul %36, %34, %cst_28 {dimension_numbers = #tpu.dot_dimension_numbers<[1], [0], [0], [1], [0, 0, 1, 1], [], []>} : vector<256x128xf32>, vector<128x256xf32>, vector<256x256xf32> -> vector<256x256xf32>
    %38 = arith.addf %33, %37 : vector<256x256xf32>
    %39 = vector.extract_strided_slice %29 {offsets = [0, 512], sizes = [128, 256], strides = [1, 1]} : vector<128x768xf32> to vector<128x256xf32>
    %c2_29 = arith.constant 2 : index
    %c0_30 = arith.constant 0 : index
    %c0_31 = arith.constant 0 : index
    %40 = vector.load %arg7[%c2_29, %c0_30, %c0_31] : memref<3x256x128xf32, #tpu.memory_space<vmem>>, vector<1x256x128xf32>
    %41 = vector.shape_cast %40 : vector<1x256x128xf32> to vector<256x128xf32>
    %cst_32 = arith.constant dense<0.000000e+00> : vector<256x256xf32>
    %42 = tpu.matmul %41, %39, %cst_32 {dimension_numbers = #tpu.dot_dimension_numbers<[1], [0], [0], [1], [0, 0, 1, 1], [], []>} : vector<256x128xf32>, vector<128x256xf32>, vector<256x256xf32> -> vector<256x256xf32>
    %43 = arith.addf %38, %42 : vector<256x256xf32>
    %44 = vector.extract_strided_slice %43 {offsets = [0, 0], sizes = [256, 128], strides = [1, 1]} : vector<256x256xf32> to vector<256x128xf32>
    %45 = vector.extract_strided_slice %43 {offsets = [0, 128], sizes = [256, 128], strides = [1, 1]} : vector<256x256xf32> to vector<256x128xf32>
    %46 = arith.maximumf %44, %45 : vector<256x128xf32>
    %c0_33 = arith.constant 0 : index
    %c0_34 = arith.constant 0 : index
    %47 = vector.load %arg8[%c0_33, %c0_34] : memref<256x1xf32, #tpu.memory_space<vmem>>, vector<256x1xf32>
    %48 = vector.broadcast %47 : vector<256x1xf32> to vector<256x128xf32>
    %49 = arith.addf %46, %48 : vector<256x128xf32>
    %cst_35 = arith.constant 0.000000e+00 : f32
    %50 = vector.broadcast %cst_35 : f32 to vector<256x128xf32>
    %51 = arith.maximumf %49, %50 : vector<256x128xf32>
    %52 = vector.extract_strided_slice %51 {offsets = [0, 0], sizes = [8, 128], strides = [1, 1]} : vector<256x128xf32> to vector<8x128xf32>
    %53 = vector.extract_strided_slice %51 {offsets = [8, 0], sizes = [8, 128], strides = [1, 1]} : vector<256x128xf32> to vector<8x128xf32>
    %54 = vector.extract_strided_slice %51 {offsets = [16, 0], sizes = [8, 128], strides = [1, 1]} : vector<256x128xf32> to vector<8x128xf32>
    %55 = vector.extract_strided_slice %51 {offsets = [24, 0], sizes = [8, 128], strides = [1, 1]} : vector<256x128xf32> to vector<8x128xf32>
    %56 = vector.extract_strided_slice %51 {offsets = [32, 0], sizes = [8, 128], strides = [1, 1]} : vector<256x128xf32> to vector<8x128xf32>
    %57 = vector.extract_strided_slice %51 {offsets = [40, 0], sizes = [8, 128], strides = [1, 1]} : vector<256x128xf32> to vector<8x128xf32>
    %58 = vector.extract_strided_slice %51 {offsets = [48, 0], sizes = [8, 128], strides = [1, 1]} : vector<256x128xf32> to vector<8x128xf32>
    %59 = vector.extract_strided_slice %51 {offsets = [56, 0], sizes = [8, 128], strides = [1, 1]} : vector<256x128xf32> to vector<8x128xf32>
    %60 = vector.extract_strided_slice %51 {offsets = [64, 0], sizes = [8, 128], strides = [1, 1]} : vector<256x128xf32> to vector<8x128xf32>
    %61 = vector.extract_strided_slice %51 {offsets = [72, 0], sizes = [8, 128], strides = [1, 1]} : vector<256x128xf32> to vector<8x128xf32>
    %62 = vector.extract_strided_slice %51 {offsets = [80, 0], sizes = [8, 128], strides = [1, 1]} : vector<256x128xf32> to vector<8x128xf32>
    %63 = vector.extract_strided_slice %51 {offsets = [88, 0], sizes = [8, 128], strides = [1, 1]} : vector<256x128xf32> to vector<8x128xf32>
    %64 = vector.extract_strided_slice %51 {offsets = [96, 0], sizes = [8, 128], strides = [1, 1]} : vector<256x128xf32> to vector<8x128xf32>
    %65 = vector.extract_strided_slice %51 {offsets = [104, 0], sizes = [8, 128], strides = [1, 1]} : vector<256x128xf32> to vector<8x128xf32>
    %66 = vector.extract_strided_slice %51 {offsets = [112, 0], sizes = [8, 128], strides = [1, 1]} : vector<256x128xf32> to vector<8x128xf32>
    %67 = vector.extract_strided_slice %51 {offsets = [120, 0], sizes = [8, 128], strides = [1, 1]} : vector<256x128xf32> to vector<8x128xf32>
    %68 = vector.extract_strided_slice %51 {offsets = [128, 0], sizes = [8, 128], strides = [1, 1]} : vector<256x128xf32> to vector<8x128xf32>
    %69 = vector.extract_strided_slice %51 {offsets = [136, 0], sizes = [8, 128], strides = [1, 1]} : vector<256x128xf32> to vector<8x128xf32>
    %70 = vector.extract_strided_slice %51 {offsets = [144, 0], sizes = [8, 128], strides = [1, 1]} : vector<256x128xf32> to vector<8x128xf32>
    %71 = vector.extract_strided_slice %51 {offsets = [152, 0], sizes = [8, 128], strides = [1, 1]} : vector<256x128xf32> to vector<8x128xf32>
    %72 = vector.extract_strided_slice %51 {offsets = [160, 0], sizes = [8, 128], strides = [1, 1]} : vector<256x128xf32> to vector<8x128xf32>
    %73 = vector.extract_strided_slice %51 {offsets = [168, 0], sizes = [8, 128], strides = [1, 1]} : vector<256x128xf32> to vector<8x128xf32>
    %74 = vector.extract_strided_slice %51 {offsets = [176, 0], sizes = [8, 128], strides = [1, 1]} : vector<256x128xf32> to vector<8x128xf32>
    %75 = vector.extract_strided_slice %51 {offsets = [184, 0], sizes = [8, 128], strides = [1, 1]} : vector<256x128xf32> to vector<8x128xf32>
    %76 = vector.extract_strided_slice %51 {offsets = [192, 0], sizes = [8, 128], strides = [1, 1]} : vector<256x128xf32> to vector<8x128xf32>
    %77 = vector.extract_strided_slice %51 {offsets = [200, 0], sizes = [8, 128], strides = [1, 1]} : vector<256x128xf32> to vector<8x128xf32>
    %78 = vector.extract_strided_slice %51 {offsets = [208, 0], sizes = [8, 128], strides = [1, 1]} : vector<256x128xf32> to vector<8x128xf32>
    %79 = vector.extract_strided_slice %51 {offsets = [216, 0], sizes = [8, 128], strides = [1, 1]} : vector<256x128xf32> to vector<8x128xf32>
    %80 = vector.extract_strided_slice %51 {offsets = [224, 0], sizes = [8, 128], strides = [1, 1]} : vector<256x128xf32> to vector<8x128xf32>
    %81 = vector.extract_strided_slice %51 {offsets = [232, 0], sizes = [8, 128], strides = [1, 1]} : vector<256x128xf32> to vector<8x128xf32>
    %82 = vector.extract_strided_slice %51 {offsets = [240, 0], sizes = [8, 128], strides = [1, 1]} : vector<256x128xf32> to vector<8x128xf32>
    %83 = vector.extract_strided_slice %51 {offsets = [248, 0], sizes = [8, 128], strides = [1, 1]} : vector<256x128xf32> to vector<8x128xf32>
    %84 = tpu.concatenate %52, %53, %54, %55, %56, %57, %58, %59, %60, %61, %62, %63, %64, %65, %66, %67 in 1 : vector<8x128xf32>, vector<8x128xf32>, vector<8x128xf32>, vector<8x128xf32>, vector<8x128xf32>, vector<8x128xf32>, vector<8x128xf32>, vector<8x128xf32>, vector<8x128xf32>, vector<8x128xf32>, vector<8x128xf32>, vector<8x128xf32>, vector<8x128xf32>, vector<8x128xf32>, vector<8x128xf32>, vector<8x128xf32> -> vector<8x2048xf32>
    %85 = tpu.concatenate %68, %69, %70, %71, %72, %73, %74, %75, %76, %77, %78, %79, %80, %81, %82, %83 in 1 : vector<8x128xf32>, vector<8x128xf32>, vector<8x128xf32>, vector<8x128xf32>, vector<8x128xf32>, vector<8x128xf32>, vector<8x128xf32>, vector<8x128xf32>, vector<8x128xf32>, vector<8x128xf32>, vector<8x128xf32>, vector<8x128xf32>, vector<8x128xf32>, vector<8x128xf32>, vector<8x128xf32>, vector<8x128xf32> -> vector<8x2048xf32>
    %86 = tpu.concatenate %84, %85 in 1 : vector<8x2048xf32>, vector<8x2048xf32> -> vector<8x4096xf32>
    %c0_36 = arith.constant 0 : index
    %c0_37 = arith.constant 0 : index
    %87 = vector.load %arg9[%c0_36, %c0_37] : memref<4096x32xf32, #tpu.memory_space<vmem>>, vector<4096x32xf32>
    %cst_38 = arith.constant dense<0.000000e+00> : vector<8x32xf32>
    %88 = tpu.matmul %86, %87, %cst_38 {dimension_numbers = #tpu.dot_dimension_numbers<[1], [0], [0], [1], [0, 0, 1, 1], [], []>} : vector<8x4096xf32>, vector<4096x32xf32>, vector<8x32xf32> -> vector<8x32xf32>
    %c0_39 = arith.constant 0 : index
    %c0_40 = arith.constant 0 : index
    %89 = vector.load %arg10[%c0_39, %c0_40] : memref<1x32xf32, #tpu.memory_space<vmem>>, vector<1x32xf32>
    %90 = vector.broadcast %89 : vector<1x32xf32> to vector<8x32xf32>
    %91 = arith.addf %88, %90 : vector<8x32xf32>
    %cst_41 = arith.constant 0.000000e+00 : f32
    %92 = vector.broadcast %cst_41 : f32 to vector<8x32xf32>
    %93 = arith.maximumf %91, %92 : vector<8x32xf32>
    %c0_42 = arith.constant 0 : index
    %c0_43 = arith.constant 0 : index
    %94 = vector.load %arg11[%c0_42, %c0_43] : memref<32x32xf32, #tpu.memory_space<vmem>>, vector<32x32xf32>
    %cst_44 = arith.constant dense<0.000000e+00> : vector<8x32xf32>
    %95 = tpu.matmul %93, %94, %cst_44 {dimension_numbers = #tpu.dot_dimension_numbers<[1], [0], [0], [1], [0, 0, 1, 1], [], []>} : vector<8x32xf32>, vector<32x32xf32>, vector<8x32xf32> -> vector<8x32xf32>
    %c0_45 = arith.constant 0 : index
    %c0_46 = arith.constant 0 : index
    %96 = vector.load %arg12[%c0_45, %c0_46] : memref<1x32xf32, #tpu.memory_space<vmem>>, vector<1x32xf32>
    %97 = vector.broadcast %96 : vector<1x32xf32> to vector<8x32xf32>
    %98 = arith.addf %95, %97 : vector<8x32xf32>
    %c0_47 = arith.constant 0 : index
    %c0_48 = arith.constant 0 : index
    %99 = vector.load %arg13[%c0_47, %c0_48] : memref<32x32xf32, #tpu.memory_space<vmem>>, vector<32x32xf32>
    %cst_49 = arith.constant dense<0.000000e+00> : vector<8x32xf32>
    %100 = tpu.matmul %98, %99, %cst_49 {dimension_numbers = #tpu.dot_dimension_numbers<[1], [0], [0], [1], [0, 0, 1, 1], [], []>} : vector<8x32xf32>, vector<32x32xf32>, vector<8x32xf32> -> vector<8x32xf32>
    %c0_50 = arith.constant 0 : index
    %c0_51 = arith.constant 0 : index
    %101 = vector.load %arg14[%c0_50, %c0_51] : memref<1x32xf32, #tpu.memory_space<vmem>>, vector<1x32xf32>
    %102 = vector.broadcast %101 : vector<1x32xf32> to vector<8x32xf32>
    %103 = arith.addf %100, %102 : vector<8x32xf32>
    %cst_52 = arith.constant 0.000000e+00 : f32
    %104 = vector.broadcast %cst_52 : f32 to vector<8x32xf32>
    %105 = arith.maximumf %103, %104 : vector<8x32xf32>
    %c0_53 = arith.constant 0 : index
    %c0_54 = arith.constant 0 : index
    %106 = vector.load %arg15[%c0_53, %c0_54] : memref<32x128xf32, #tpu.memory_space<vmem>>, vector<32x128xf32>
    %cst_55 = arith.constant dense<0.000000e+00> : vector<8x128xf32>
    %107 = tpu.matmul %105, %106, %cst_55 {dimension_numbers = #tpu.dot_dimension_numbers<[1], [0], [0], [1], [0, 0, 1, 1], [], []>} : vector<8x32xf32>, vector<32x128xf32>, vector<8x128xf32> -> vector<8x128xf32>
    %c0_56 = arith.constant 0 : index
    %c0_57 = arith.constant 0 : index
    %108 = vector.load %arg16[%c0_56, %c0_57] : memref<1x128xf32, #tpu.memory_space<vmem>>, vector<1x128xf32>
    %109 = vector.broadcast %108 : vector<1x128xf32> to vector<8x128xf32>
    %110 = arith.addf %107, %109 : vector<8x128xf32>
    %c0_58 = arith.constant 0 : index
    %c0_59 = arith.constant 0 : index
    %111 = vector.load %arg17[%c0_58, %c0_59] : memref<8x128xf32, #tpu.memory_space<vmem>>, vector<8x128xf32>
    tpu.vector_store %arg17[%c0_58, %c0_59], %110 {strides = array<i32>} : memref<8x128xf32, #tpu.memory_space<vmem>>, vector<8x128xf32>,
    return
  }
  func.func @transform_0(%arg0: i32) -> (i32, i32) {
    %c0_i32 = arith.constant 0 : i32
    %c0_i32_0 = arith.constant 0 : i32
    return %arg0, %c0_i32 : i32, i32
  }
  func.func @transform_1(%arg0: i32) -> (i32, i32) {
    %c0_i32 = arith.constant 0 : i32
    %c0_i32_0 = arith.constant 0 : i32
    %c0_i32_1 = arith.constant 0 : i32
    return %c0_i32, %c0_i32_0 : i32, i32
  }
  func.func @transform_2(%arg0: i32) -> (i32, i32, i32) {
    %c0_i32 = arith.constant 0 : i32
    %c0_i32_0 = arith.constant 0 : i32
    %c0_i32_1 = arith.constant 0 : i32
    %c0_i32_2 = arith.constant 0 : i32
    return %c0_i32, %c0_i32_0, %c0_i32_1 : i32, i32, i32
  }
  func.func @transform_3(%arg0: i32) -> (i32, i32) {
    %c0_i32 = arith.constant 0 : i32
    %c0_i32_0 = arith.constant 0 : i32
    %c0_i32_1 = arith.constant 0 : i32
    return %c0_i32, %c0_i32_0 : i32, i32
  }
  func.func @transform_4(%arg0: i32) -> (i32, i32) {
    %c0_i32 = arith.constant 0 : i32
    %c0_i32_0 = arith.constant 0 : i32
    %c0_i32_1 = arith.constant 0 : i32
    return %c0_i32, %c0_i32_0 : i32, i32
  }
  func.func @transform_5(%arg0: i32) -> (i32, i32) {
    %c0_i32 = arith.constant 0 : i32
    %c0_i32_0 = arith.constant 0 : i32
    %c0_i32_1 = arith.constant 0 : i32
    return %c0_i32, %c0_i32_0 : i32, i32
  }
  func.func @transform_6(%arg0: i32) -> (i32, i32, i32) {
    %c0_i32 = arith.constant 0 : i32
    %c0_i32_0 = arith.constant 0 : i32
    %c0_i32_1 = arith.constant 0 : i32
    %c0_i32_2 = arith.constant 0 : i32
    return %c0_i32, %c0_i32_0, %c0_i32_1 : i32, i32, i32
  }
  func.func @transform_7(%arg0: i32) -> (i32, i32) {
    %c0_i32 = arith.constant 0 : i32
    %c0_i32_0 = arith.constant 0 : i32
    %c0_i32_1 = arith.constant 0 : i32
    return %c0_i32, %c0_i32_0 : i32, i32
  }
  func.func @transform_8(%arg0: i32) -> (i32, i32) {
    %c0_i32 = arith.constant 0 : i32
    %c0_i32_0 = arith.constant 0 : i32
    %c0_i32_1 = arith.constant 0 : i32
    return %c0_i32, %c0_i32_0 : i32, i32
  }
  func.func @transform_9(%arg0: i32) -> (i32, i32) {
    %c0_i32 = arith.constant 0 : i32
    %c0_i32_0 = arith.constant 0 : i32
    %c0_i32_1 = arith.constant 0 : i32
    return %c0_i32, %c0_i32_0 : i32, i32
  }
  func.func @transform_10(%arg0: i32) -> (i32, i32) {
    %c0_i32 = arith.constant 0 : i32
    %c0_i32_0 = arith.constant 0 : i32
    %c0_i32_1 = arith.constant 0 : i32
    return %c0_i32, %c0_i32_0 : i32, i32
  }
  func.func @transform_11(%arg0: i32) -> (i32, i32) {
    %c0_i32 = arith.constant 0 : i32
    %c0_i32_0 = arith.constant 0 : i32
    %c0_i32_1 = arith.constant 0 : i32
    return %c0_i32, %c0_i32_0 : i32, i32
  }
  func.func @transform_12(%arg0: i32) -> (i32, i32) {
    %c0_i32 = arith.constant 0 : i32
    %c0_i32_0 = arith.constant 0 : i32
    %c0_i32_1 = arith.constant 0 : i32
    return %c0_i32, %c0_i32_0 : i32, i32
  }
  func.func @transform_13(%arg0: i32) -> (i32, i32) {
    %c0_i32 = arith.constant 0 : i32
    %c0_i32_0 = arith.constant 0 : i32
    %c0_i32_1 = arith.constant 0 : i32
    return %c0_i32, %c0_i32_0 : i32, i32
  }
  func.func @transform_14(%arg0: i32) -> (i32, i32) {
    %c0_i32 = arith.constant 0 : i32
    %c0_i32_0 = arith.constant 0 : i32
    %c0_i32_1 = arith.constant 0 : i32
    return %c0_i32, %c0_i32_0 : i32, i32
  }
  func.func @transform_15(%arg0: i32) -> (i32, i32) {
    %c0_i32 = arith.constant 0 : i32
    %c0_i32_0 = arith.constant 0 : i32
    %c0_i32_1 = arith.constant 0 : i32
    return %c0_i32, %c0_i32_0 : i32, i32
  }
  func.func @transform_16(%arg0: i32) -> (i32, i32) {
    %c0_i32 = arith.constant 0 : i32
    %c0_i32_0 = arith.constant 0 : i32
    return %arg0, %c0_i32 : i32, i32
  }
}

</mosaic_0001>

<llo_original>
// kernel: fwd.1
$region0: #{fwd.1}
  #allocation0 [shape = 'u32[]', space=smem, size = 0x4, offset = 0x4, fixed_abs, tag = 'smem constant byte address 0x4 - core index']
  #allocation1 [shape = 'u32[144,128]{1,0:T(1,128)}', space=vmem, size = 0x12000, scoped, tag = 'internal scratch']
  %s0 = inlined_call_operand.vmem [shape: f32[16,201], index: 0, kind: input, shape index: {}]
  %s1 = inlined_call_operand.vmem [shape: f32[201,768], index: 1, kind: input, shape index: {}]
  %s2 = inlined_call_operand.vmem [shape: f32[3,128,8], index: 2, kind: input, shape index: {}]
  %s3 = inlined_call_operand.vmem [shape: f32[128,1], index: 3, kind: input, shape index: {}]
  %s4 = inlined_call_operand.vmem [shape: f32[128,1], index: 4, kind: input, shape index: {}]
  %s5 = inlined_call_operand.vmem [shape: f32[128,768], index: 5, kind: input, shape index: {}]
  %s6 = inlined_call_operand.vmem [shape: f32[3,256,128], index: 6, kind: input, shape index: {}]
  %s7 = inlined_call_operand.vmem [shape: f32[256,1], index: 7, kind: input, shape index: {}]
  %s8 = inlined_call_operand.vmem [shape: f32[4096,32], index: 8, kind: input, shape index: {}]
  %s9 = inlined_call_operand.vmem [shape: f32[1,32], index: 9, kind: input, shape index: {}]
  %s10 = inlined_call_operand.vmem [shape: f32[32,32], index: 10, kind: input, shape index: {}]
  %s11 = inlined_call_operand.vmem [shape: f32[1,32], index: 11, kind: input, shape index: {}]
  %s12 = inlined_call_operand.vmem [shape: f32[32,32], index: 12, kind: input, shape index: {}]
  %s13 = inlined_call_operand.vmem [shape: f32[1,32], index: 13, kind: input, shape index: {}]
  %s14 = inlined_call_operand.vmem [shape: f32[32,128], index: 14, kind: input, shape index: {}]
  %s15 = inlined_call_operand.vmem [shape: f32[1,128], index: 15, kind: input, shape index: {}]
  %s16 = inlined_call_operand.vmem [shape: f32[16,128], index: 16, kind: output, shape index: {}]
  %s17 = sld [smem:[#allocation0]]
  $region97: #{fwd.1} parent=0
    _
  %s19 = ssub.s32 1, %s17
  %s20 = scalar_select 0, %s19, %s17
  loop: start=0, step=1, limit=4
  $region2: #{fwd.1} parent=0 // loop_pre_header
    _
  $region3: #{fwd.1} parent=0 // loop_header
    %s22 = sphi 0, %s26
    %p23 = scmp.ge.s32.totalorder %s22, 4
    %s32 = sphi 0, %s34
    %s35 = sphi 0, %s32
    %s36 = sphi 0, %s35
    %s52 = sphi 0, %s36
    %s56 = sphi 0, %s56
    %s58 = sphi 0, %s56
    %s59 = sphi 0, %s58
    %s73 = sphi 0, %s59
    %s77 = sphi 0, %s77
    %s79 = sphi 0, %s77
    %s80 = sphi 0, %s79
    %s94 = sphi 0, %s80
    %s98 = sphi 0, %s98
    %s100 = sphi 0, %s98
    %s101 = sphi 0, %s100
    %s115 = sphi 0, %s101
    %s119 = sphi 0, %s119
    %s121 = sphi 0, %s119
    %s122 = sphi 0, %s121
    %s136 = sphi 0, %s122
    %s140 = sphi 0, %s140
    %s142 = sphi 0, %s140
    %s143 = sphi 0, %s142
    %s157 = sphi 0, %s143
    %s161 = sphi 0, %s161
    %s163 = sphi 0, %s161
    %s164 = sphi 0, %s163
    %s178 = sphi 0, %s164
    %s182 = sphi 0, %s182
    %s184 = sphi 0, %s182
    %s185 = sphi 0, %s184
    %s199 = sphi 0, %s185
    %s203 = sphi 0, %s203
    %s205 = sphi 0, %s203
    %s206 = sphi 0, %s205
    %s220 = sphi 0, %s206
    %s224 = sphi 0, %s224
    %s226 = sphi 0, %s224
    %s227 = sphi 0, %s226
    %s241 = sphi 0, %s227
    %s245 = sphi 0, %s245
    %s247 = sphi 0, %s245
    %s248 = sphi 0, %s247
    %s262 = sphi 0, %s248
    %s266 = sphi 0, %s266
    %s268 = sphi 0, %s266
    %s269 = sphi 0, %s268
    %s283 = sphi 0, %s269
    %s287 = sphi 0, %s287
    %s289 = sphi 0, %s287
    %s290 = sphi 0, %s289
    %s304 = sphi 0, %s290
    %s308 = sphi 0, %s308
    %s310 = sphi 0, %s308
    %s311 = sphi 0, %s310
    %s325 = sphi 0, %s311
    %s329 = sphi 0, %s329
    %s331 = sphi 0, %s329
    %s332 = sphi 0, %s331
    %s346 = sphi 0, %s332
    %s350 = sphi 0, %s350
    %s352 = sphi 0, %s350
    %s353 = sphi 0, %s352
    %s367 = sphi 0, %s353
    %s373 = sphi 0, %s375
    %s376 = sphi 0, %s373
    %s377 = sphi 0, %s376
    %s393 = sphi 0, %s377
  $region4: #{fwd.1} parent=0 // loop_header_branch
    %25 = sbr.rel (%p23) target = $region8
  $region5: #{fwd.1} parent=0 // loop_body
    %s27 = ssub.s32 %s22, 1
    %s28 = ssub.s32 %s22, 2
    %s29 = sadd.s32 %s22, 1
    %s30 = ssub.s32 %s22, %s29
    %p31 = scmp.eq.s32.totalorder %s30, 0
    %s33 = sadd.s32 %s32, 1
    %s34 = scalar_select %p31, %s32, %s33
    %p37 = pneg %p31
    %p38 = scmp.eq.s32.totalorder %s22, 1
    %p39 = por %p37, %p38
    %p40 = scmp.ne.s32.totalorder %s32, %s35
    %p41 = scmp.eq.s32.totalorder %s22, 0
    %p42 = por %p40, %p41
    %p43 = scmp.ne.s32.totalorder %s32, %s35
    %p44 = scmp.eq.s32.totalorder %s27, 1
    %p45 = por %p43, %p44
    %p46 = scmp.ne.s32.totalorder %s35, %s36
    %p47 = scmp.eq.s32.totalorder %s27, 0
    %p48 = por %p46, %p47
    %p49 = scmp.ne.s32.totalorder %s35, %s36
    %p50 = scmp.eq.s32.totalorder %s28, 1
    %p51 = por %p49, %p50
    %p53 = scmp.ne.s32.totalorder %s36, %s52
    %p54 = scmp.eq.s32.totalorder %s28, 0
    %p55 = por %p53, %p54
    %s57 = sadd.s32 %s56, 1
    %p60 = scmp.eq.s32.totalorder %s22, 1
    %p61 = scmp.ne.s32.totalorder %s56, %s58
    %p62 = scmp.eq.s32.totalorder %s22, 0
    %p63 = por %p61, %p62
    %p64 = scmp.ne.s32.totalorder %s56, %s58
    %p65 = scmp.eq.s32.totalorder %s27, 1
    %p66 = por %p64, %p65
    %p67 = scmp.ne.s32.totalorder %s58, %s59
    %p68 = scmp.eq.s32.totalorder %s27, 0
    %p69 = por %p67, %p68
    %p70 = scmp.ne.s32.totalorder %s58, %s59
    %p71 = scmp.eq.s32.totalorder %s28, 1
    %p72 = por %p70, %p71
    %p74 = scmp.ne.s32.totalorder %s59, %s73
    %p75 = scmp.eq.s32.totalorder %s28, 0
    %p76 = por %p74, %p75
    %s78 = sadd.s32 %s77, 1
    %p81 = scmp.eq.s32.totalorder %s22, 1
    %p82 = scmp.ne.s32.totalorder %s77, %s79
    %p83 = scmp.eq.s32.totalorder %s22, 0
    %p84 = por %p82, %p83
    %p85 = scmp.ne.s32.totalorder %s77, %s79
    %p86 = scmp.eq.s32.totalorder %s27, 1
    %p87 = por %p85, %p86
    %p88 = scmp.ne.s32.totalorder %s79, %s80
    %p89 = scmp.eq.s32.totalorder %s27, 0
    %p90 = por %p88, %p89
    %p91 = scmp.ne.s32.totalorder %s79, %s80
    %p92 = scmp.eq.s32.totalorder %s28, 1
    %p93 = por %p91, %p92
    %p95 = scmp.ne.s32.totalorder %s80, %s94
    %p96 = scmp.eq.s32.totalorder %s28, 0
    %p97 = por %p95, %p96
    %s99 = sadd.s32 %s98, 1
    %p102 = scmp.eq.s32.totalorder %s22, 1
    %p103 = scmp.ne.s32.totalorder %s98, %s100
    %p104 = scmp.eq.s32.totalorder %s22, 0
    %p105 = por %p103, %p104
    %p106 = scmp.ne.s32.totalorder %s98, %s100
    %p107 = scmp.eq.s32.totalorder %s27, 1
    %p108 = por %p106, %p107
    %p109 = scmp.ne.s32.totalorder %s100, %s101
    %p110 = scmp.eq.s32.totalorder %s27, 0
    %p111 = por %p109, %p110
    %p112 = scmp.ne.s32.totalorder %s100, %s101
    %p113 = scmp.eq.s32.totalorder %s28, 1
    %p114 = por %p112, %p113
    %p116 = scmp.ne.s32.totalorder %s101, %s115
    %p117 = scmp.eq.s32.totalorder %s28, 0
    %p118 = por %p116, %p117
    %s120 = sadd.s32 %s119, 1
    %p123 = scmp.eq.s32.totalorder %s22, 1
    %p124 = scmp.ne.s32.totalorder %s119, %s121
    %p125 = scmp.eq.s32.totalorder %s22, 0
    %p126 = por %p124, %p125
    %p127 = scmp.ne.s32.totalorder %s119, %s121
    %p128 = scmp.eq.s32.totalorder %s27, 1
    %p129 = por %p127, %p128
    %p130 = scmp.ne.s32.totalorder %s121, %s122
    %p131 = scmp.eq.s32.totalorder %s27, 0
    %p132 = por %p130, %p131
    %p133 = scmp.ne.s32.totalorder %s121, %s122
    %p134 = scmp.eq.s32.totalorder %s28, 1
    %p135 = por %p133, %p134
    %p137 = scmp.ne.s32.totalorder %s122, %s136
    %p138 = scmp.eq.s32.totalorder %s28, 0
    %p139 = por %p137, %p138
    %s141 = sadd.s32 %s140, 1
    %p144 = scmp.eq.s32.totalorder %s22, 1
    %p145 = scmp.ne.s32.totalorder %s140, %s142
    %p146 = scmp.eq.s32.totalorder %s22, 0
    %p147 = por %p145, %p146
    %p148 = scmp.ne.s32.totalorder %s140, %s142
    %p149 = scmp.eq.s32.totalorder %s27, 1
    %p150 = por %p148, %p149
    %p151 = scmp.ne.s32.totalorder %s142, %s143
    %p152 = scmp.eq.s32.totalorder %s27, 0
    %p153 = por %p151, %p152
    %p154 = scmp.ne.s32.totalorder %s142, %s143
    %p155 = scmp.eq.s32.totalorder %s28, 1
    %p156 = por %p154, %p155
    %p158 = scmp.ne.s32.totalorder %s143, %s157
    %p159 = scmp.eq.s32.totalorder %s28, 0
    %p160 = por %p158, %p159
    %s162 = sadd.s32 %s161, 1
    %p165 = scmp.eq.s32.totalorder %s22, 1
    %p166 = scmp.ne.s32.totalorder %s161, %s163
    %p167 = scmp.eq.s32.totalorder %s22, 0
    %p168 = por %p166, %p167
    %p169 = scmp.ne.s32.totalorder %s161, %s163
    %p170 = scmp.eq.s32.totalorder %s27, 1
    %p171 = por %p169, %p170
    %p172 = scmp.ne.s32.totalorder %s163, %s164
    %p173 = scmp.eq.s32.totalorder %s27, 0
    %p174 = por %p172, %p173
    %p175 = scmp.ne.s32.totalorder %s163, %s164
    %p176 = scmp.eq.s32.totalorder %s28, 1
    %p177 = por %p175, %p176
    %p179 = scmp.ne.s32.totalorder %s164, %s178
    %p180 = scmp.eq.s32.totalorder %s28, 0
    %p181 = por %p179, %p180
    %s183 = sadd.s32 %s182, 1
    %p186 = scmp.eq.s32.totalorder %s22, 1
    %p187 = scmp.ne.s32.totalorder %s182, %s184
    %p188 = scmp.eq.s32.totalorder %s22, 0
    %p189 = por %p187, %p188
    %p190 = scmp.ne.s32.totalorder %s182, %s184
    %p191 = scmp.eq.s32.totalorder %s27, 1
    %p192 = por %p190, %p191
    %p193 = scmp.ne.s32.totalorder %s184, %s185
    %p194 = scmp.eq.s32.totalorder %s27, 0
    %p195 = por %p193, %p194
    %p196 = scmp.ne.s32.totalorder %s184, %s185
    %p197 = scmp.eq.s32.totalorder %s28, 1
    %p198 = por %p196, %p197
    %p200 = scmp.ne.s32.totalorder %s185, %s199
    %p201 = scmp.eq.s32.totalorder %s28, 0
    %p202 = por %p200, %p201
    %s204 = sadd.s32 %s203, 1
    %p207 = scmp.eq.s32.totalorder %s22, 1
    %p208 = scmp.ne.s32.totalorder %s203, %s205
    %p209 = scmp.eq.s32.totalorder %s22, 0
    %p210 = por %p208, %p209
    %p211 = scmp.ne.s32.totalorder %s203, %s205
    %p212 = scmp.eq.s32.totalorder %s27, 1
    %p213 = por %p211, %p212
    %p214 = scmp.ne.s32.totalorder %s205, %s206
    %p215 = scmp.eq.s32.totalorder %s27, 0
    %p216 = por %p214, %p215
    %p217 = scmp.ne.s32.totalorder %s205, %s206
    %p218 = scmp.eq.s32.totalorder %s28, 1
    %p219 = por %p217, %p218
    %p221 = scmp.ne.s32.totalorder %s206, %s220
    %p222 = scmp.eq.s32.totalorder %s28, 0
    %p223 = por %p221, %p222
    %s225 = sadd.s32 %s224, 1
    %p228 = scmp.eq.s32.totalorder %s22, 1
    %p229 = scmp.ne.s32.totalorder %s224, %s226
    %p230 = scmp.eq.s32.totalorder %s22, 0
    %p231 = por %p229, %p230
    %p232 = scmp.ne.s32.totalorder %s224, %s226
    %p233 = scmp.eq.s32.totalorder %s27, 1
    %p234 = por %p232, %p233
    %p235 = scmp.ne.s32.totalorder %s226, %s227
    %p236 = scmp.eq.s32.totalorder %s27, 0
    %p237 = por %p235, %p236
    %p238 = scmp.ne.s32.totalorder %s226, %s227
    %p239 = scmp.eq.s32.totalorder %s28, 1
    %p240 = por %p238, %p239
    %p242 = scmp.ne.s32.totalorder %s227, %s241
    %p243 = scmp.eq.s32.totalorder %s28, 0
    %p244 = por %p242, %p243
    %s246 = sadd.s32 %s245, 1
    %p249 = scmp.eq.s32.totalorder %s22, 1
    %p250 = scmp.ne.s32.totalorder %s245, %s247
    %p251 = scmp.eq.s32.totalorder %s22, 0
    %p252 = por %p250, %p251
    %p253 = scmp.ne.s32.totalorder %s245, %s247
    %p254 = scmp.eq.s32.totalorder %s27, 1
    %p255 = por %p253, %p254
    %p256 = scmp.ne.s32.totalorder %s247, %s248
    %p257 = scmp.eq.s32.totalorder %s27, 0
    %p258 = por %p256, %p257
    %p259 = scmp.ne.s32.totalorder %s247, %s248
    %p260 = scmp.eq.s32.totalorder %s28, 1
    %p261 = por %p259, %p260
    %p263 = scmp.ne.s32.totalorder %s248, %s262
    %p264 = scmp.eq.s32.totalorder %s28, 0
    %p265 = por %p263, %p264
    %s267 = sadd.s32 %s266, 1
    %p270 = scmp.eq.s32.totalorder %s22, 1
    %p271 = scmp.ne.s32.totalorder %s266, %s268
    %p272 = scmp.eq.s32.totalorder %s22, 0
    %p273 = por %p271, %p272
    %p274 = scmp.ne.s32.totalorder %s266, %s268
    %p275 = scmp.eq.s32.totalorder %s27, 1
    %p276 = por %p274, %p275
    %p277 = scmp.ne.s32.totalorder %s268, %s269
    %p278 = scmp.eq.s32.totalorder %s27, 0
    %p279 = por %p277, %p278
    %p280 = scmp.ne.s32.totalorder %s268, %s269
    %p281 = scmp.eq.s32.totalorder %s28, 1
    %p282 = por %p280, %p281
    %p284 = scmp.ne.s32.totalorder %s269, %s283
    %p285 = scmp.eq.s32.totalorder %s28, 0
    %p286 = por %p284, %p285
    %s288 = sadd.s32 %s287, 1
    %p291 = scmp.eq.s32.totalorder %s22, 1
    %p292 = scmp.ne.s32.totalorder %s287, %s289
    %p293 = scmp.eq.s32.totalorder %s22, 0
    %p294 = por %p292, %p293
    %p295 = scmp.ne.s32.totalorder %s287, %s289
    %p296 = scmp.eq.s32.totalorder %s27, 1
    %p297 = por %p295, %p296
    %p298 = scmp.ne.s32.totalorder %s289, %s290
    %p299 = scmp.eq.s32.totalorder %s27, 0
    %p300 = por %p298, %p299
    %p301 = scmp.ne.s32.totalorder %s289, %s290
    %p302 = scmp.eq.s32.totalorder %s28, 1
    %p303 = por %p301, %p302
    %p305 = scmp.ne.s32.totalorder %s290, %s304
    %p306 = scmp.eq.s32.totalorder %s28, 0
    %p307 = por %p305, %p306
    %s309 = sadd.s32 %s308, 1
    %p312 = scmp.eq.s32.totalorder %s22, 1
    %p313 = scmp.ne.s32.totalorder %s308, %s310
    %p314 = scmp.eq.s32.totalorder %s22, 0
    %p315 = por %p313, %p314
    %p316 = scmp.ne.s32.totalorder %s308, %s310
    %p317 = scmp.eq.s32.totalorder %s27, 1
    %p318 = por %p316, %p317
    %p319 = scmp.ne.s32.totalorder %s310, %s311
    %p320 = scmp.eq.s32.totalorder %s27, 0
    %p321 = por %p319, %p320
    %p322 = scmp.ne.s32.totalorder %s310, %s311
    %p323 = scmp.eq.s32.totalorder %s28, 1
    %p324 = por %p322, %p323
    %p326 = scmp.ne.s32.totalorder %s311, %s325
    %p327 = scmp.eq.s32.totalorder %s28, 0
    %p328 = por %p326, %p327
    %s330 = sadd.s32 %s329, 1
    %p333 = scmp.eq.s32.totalorder %s22, 1
    %p334 = scmp.ne.s32.totalorder %s329, %s331
    %p335 = scmp.eq.s32.totalorder %s22, 0
    %p336 = por %p334, %p335
    %p337 = scmp.ne.s32.totalorder %s329, %s331
    %p338 = scmp.eq.s32.totalorder %s27, 1
    %p339 = por %p337, %p338
    %p340 = scmp.ne.s32.totalorder %s331, %s332
    %p341 = scmp.eq.s32.totalorder %s27, 0
    %p342 = por %p340, %p341
    %p343 = scmp.ne.s32.totalorder %s331, %s332
    %p344 = scmp.eq.s32.totalorder %s28, 1
    %p345 = por %p343, %p344
    %p347 = scmp.ne.s32.totalorder %s332, %s346
    %p348 = scmp.eq.s32.totalorder %s28, 0
    %p349 = por %p347, %p348
    %s351 = sadd.s32 %s350, 1
    %p354 = scmp.eq.s32.totalorder %s22, 1
    %p355 = scmp.ne.s32.totalorder %s350, %s352
    %p356 = scmp.eq.s32.totalorder %s22, 0
    %p357 = por %p355, %p356
    %p358 = scmp.ne.s32.totalorder %s350, %s352
    %p359 = scmp.eq.s32.totalorder %s27, 1
    %p360 = por %p358, %p359
    %p361 = scmp.ne.s32.totalorder %s352, %s353
    %p362 = scmp.eq.s32.totalorder %s27, 0
    %p363 = por %p361, %p362
    %p364 = scmp.ne.s32.totalorder %s352, %s353
    %p365 = scmp.eq.s32.totalorder %s28, 1
    %p366 = por %p364, %p365
    %p368 = scmp.ne.s32.totalorder %s353, %s367
    %p369 = scmp.eq.s32.totalorder %s28, 0
    %p370 = por %p368, %p369
    %s371 = ssub.s32 %s22, %s29
    %p372 = scmp.eq.s32.totalorder %s371, 0
    %s374 = sadd.s32 %s373, 1
    %s375 = scalar_select %p372, %s373, %s374
    %p378 = pneg %p372
    %p379 = scmp.eq.s32.totalorder %s22, 1
    %p380 = por %p378, %p379
    %p381 = scmp.ne.s32.totalorder %s373, %s376
    %p382 = scmp.eq.s32.totalorder %s22, 0
    %p383 = por %p381, %p382
    %p384 = scmp.ne.s32.totalorder %s373, %s376
    %p385 = scmp.eq.s32.totalorder %s27, 1
    %p386 = por %p384, %p385
    %p387 = scmp.ne.s32.totalorder %s376, %s377
    %p388 = scmp.eq.s32.totalorder %s27, 0
    %p389 = por %p387, %p388
    %p390 = scmp.ne.s32.totalorder %s376, %s377
    %p391 = scmp.eq.s32.totalorder %s28, 1
    %p392 = por %p390, %p391
    %p394 = scmp.ne.s32.totalorder %s377, %s393
    %p395 = scmp.eq.s32.totalorder %s28, 0
    %p396 = por %p394, %p395
    %p397 = scmp.le.s32.totalorder 1, %s22
    %p398 = scmp.lt.s32.totalorder %s22, 3
    %p399 = pnand %p397, %p398
    %p400 = pneg %p399
    // Predicated region
    $region9: #{fwd.1} parent=5 // pred_check
      _
    $region10: #{fwd.1} parent=5 // pred_check_branch
      %402 = sbr.rel (%p399) target = $region12
    $region11: #{fwd.1} parent=5 // pred_region
      %s403 = ssub.s32 %s22, 1
      // Predicated region
      $region13: #{fwd.1} parent=11 // pred_check
        %p404 = pneg %p69
      $region14: #{fwd.1} parent=11 // pred_check_branch
        %406 = sbr.rel (%p404) target = $region16
      $region15: #{fwd.1} parent=11 // pred_region
        _
      $region16: #{fwd.1} parent=11 // pred_fallthru
        _
      // Predicated region
      $region17: #{fwd.1} parent=11 // pred_check
        %p407 = pneg %p90
      $region18: #{fwd.1} parent=11 // pred_check_branch
        %409 = sbr.rel (%p407) target = $region20
      $region19: #{fwd.1} parent=11 // pred_region
        _
      $region20: #{fwd.1} parent=11 // pred_fallthru
        _
      // Predicated region
      $region21: #{fwd.1} parent=11 // pred_check
        %p410 = pneg %p111
      $region22: #{fwd.1} parent=11 // pred_check_branch
        %412 = sbr.rel (%p410) target = $region24
      $region23: #{fwd.1} parent=11 // pred_region
        _
      $region24: #{fwd.1} parent=11 // pred_fallthru
        _
      // Predicated region
      $region25: #{fwd.1} parent=11 // pred_check
        %p413 = pneg %p132
      $region26: #{fwd.1} parent=11 // pred_check_branch
        %415 = sbr.rel (%p413) target = $region28
      $region27: #{fwd.1} parent=11 // pred_region
        _
      $region28: #{fwd.1} parent=11 // pred_fallthru
        _
      // Predicated region
      $region29: #{fwd.1} parent=11 // pred_check
        %p416 = pneg %p153
      $region30: #{fwd.1} parent=11 // pred_check_branch
        %418 = sbr.rel (%p416) target = $region32
      $region31: #{fwd.1} parent=11 // pred_region
        _
      $region32: #{fwd.1} parent=11 // pred_fallthru
        _
      // Predicated region
      $region33: #{fwd.1} parent=11 // pred_check
        %p419 = pneg %p174
      $region34: #{fwd.1} parent=11 // pred_check_branch
        %421 = sbr.rel (%p419) target = $region36
      $region35: #{fwd.1} parent=11 // pred_region
        _
      $region36: #{fwd.1} parent=11 // pred_fallthru
        _
      // Predicated region
      $region37: #{fwd.1} parent=11 // pred_check
        %p422 = pneg %p195
      $region38: #{fwd.1} parent=11 // pred_check_branch
        %424 = sbr.rel (%p422) target = $region40
      $region39: #{fwd.1} parent=11 // pred_region
        _
      $region40: #{fwd.1} parent=11 // pred_fallthru
        _
      // Predicated region
      $region41: #{fwd.1} parent=11 // pred_check
        %p425 = pneg %p216
      $region42: #{fwd.1} parent=11 // pred_check_branch
        %427 = sbr.rel (%p425) target = $region44
      $region43: #{fwd.1} parent=11 // pred_region
        _
      $region44: #{fwd.1} parent=11 // pred_fallthru
        _
      // Predicated region
      $region45: #{fwd.1} parent=11 // pred_check
        %p428 = pneg %p237
      $region46: #{fwd.1} parent=11 // pred_check_branch
        %430 = sbr.rel (%p428) target = $region48
      $region47: #{fwd.1} parent=11 // pred_region
        _
      $region48: #{fwd.1} parent=11 // pred_fallthru
        _
      // Predicated region
      $region49: #{fwd.1} parent=11 // pred_check
        %p431 = pneg %p258
      $region50: #{fwd.1} parent=11 // pred_check_branch
        %433 = sbr.rel (%p431) target = $region52
      $region51: #{fwd.1} parent=11 // pred_region
        _
      $region52: #{fwd.1} parent=11 // pred_fallthru
        _
      // Predicated region
      $region53: #{fwd.1} parent=11 // pred_check
        %p434 = pneg %p279
      $region54: #{fwd.1} parent=11 // pred_check_branch
        %436 = sbr.rel (%p434) target = $region56
      $region55: #{fwd.1} parent=11 // pred_region
        _
      $region56: #{fwd.1} parent=11 // pred_fallthru
        _
      // Predicated region
      $region57: #{fwd.1} parent=11 // pred_check
        %p437 = pneg %p300
      $region58: #{fwd.1} parent=11 // pred_check_branch
        %439 = sbr.rel (%p437) target = $region60
      $region59: #{fwd.1} parent=11 // pred_region
        _
      $region60: #{fwd.1} parent=11 // pred_fallthru
        _
      // Predicated region
      $region61: #{fwd.1} parent=11 // pred_check
        %p440 = pneg %p321
      $region62: #{fwd.1} parent=11 // pred_check_branch
        %442 = sbr.rel (%p440) target = $region64
      $region63: #{fwd.1} parent=11 // pred_region
        _
      $region64: #{fwd.1} parent=11 // pred_fallthru
        _
      // Predicated region
      $region65: #{fwd.1} parent=11 // pred_check
        %p443 = pneg %p342
      $region66: #{fwd.1} parent=11 // pred_check_branch
        %445 = sbr.rel (%p443) target = $region68
      $region67: #{fwd.1} parent=11 // pred_region
        _
      $region68: #{fwd.1} parent=11 // pred_fallthru
        _
      // Predicated region
      $region69: #{fwd.1} parent=11 // pred_check
        %p446 = pneg %p363
      $region70: #{fwd.1} parent=11 // pred_check_branch
        %448 = sbr.rel (%p446) target = $region72
      $region71: #{fwd.1} parent=11 // pred_region
        _
      $region72: #{fwd.1} parent=11 // pred_fallthru
        _
    $region12: #{fwd.1} parent=5 // pred_fallthru
      _
    %p449 = scmp.lt.s32.totalorder %s22, 2
    // Predicated region
    $region73: #{fwd.1} parent=5 // pred_check
      %p450 = pneg %p449
    $region74: #{fwd.1} parent=5 // pred_check_branch
      %452 = sbr.rel (%p450) target = $region76
    $region75: #{fwd.1} parent=5 // pred_region
      // Predicated region
      $region77: #{fwd.1} parent=75 // pred_check
        %p453 = pneg %p42
      $region78: #{fwd.1} parent=75 // pred_check_branch
        %455 = sbr.rel (%p453) target = $region80
      $region79: #{fwd.1} parent=75 // pred_region
        %p456 = scmp.lt.s32.totalorder %s22, 1
        %s457 = scalar_select %p456, %s22, 1
        %s458 = smul.addr %s457, 2
        %s459 = smul.addr %s458, 8
        %s460 = scalar_lea.vmem %s0, %s459
      $region80: #{fwd.1} parent=75 // pred_fallthru
        _
    $region76: #{fwd.1} parent=5 // pred_fallthru
      _
    %p461 = scmp.le.s32.totalorder 1, %s22
    %p462 = scmp.lt.s32.totalorder %s22, 3
    %p463 = pnand %p461, %p462
    %p464 = pneg %p463
    // Predicated region
    $region81: #{fwd.1} parent=5 // pred_check
      _
    $region82: #{fwd.1} parent=5 // pred_check_branch
      %466 = sbr.rel (%p463) target = $region84
    $region83: #{fwd.1} parent=5 // pred_region
      %s467 = ssub.s32 %s22, 1
      %p468 = scmp.lt.s32.totalorder %s27, 1
      %s469 = scalar_select %p468, %s27, 1
      %s470 = smul.addr %s469, 2
      %s471 = smul.addr %s470, 8
      %s472 = scalar_lea.vmem %s0, %s471
      %p473 = pneg %p48
      %p474 = pneg %p45
      %p475 = pneg %p69
      %p476 = pneg %p66
      %p477 = pneg %p90
      %p478 = pneg %p87
      %p479 = pneg %p111
      %p480 = pneg %p108
      %p481 = pneg %p132
      %p482 = pneg %p129
      %p483 = pneg %p153
      %p484 = pneg %p150
      %p485 = pneg %p174
      %p486 = pneg %p171
      %p487 = pneg %p195
      %p488 = pneg %p192
      %p489 = pneg %p216
      %p490 = pneg %p213
      %p491 = pneg %p237
      %p492 = pneg %p234
      %p493 = pneg %p258
      %p494 = pneg %p255
      %p495 = pneg %p279
      %p496 = pneg %p276
      %p497 = pneg %p300
      %p498 = pneg %p297
      %p499 = pneg %p321
      %p500 = pneg %p318
      %p501 = pneg %p342
      %p502 = pneg %p339
      %p503 = pneg %p363
      %p504 = pneg %p360
      %p505 = pneg %p389
      %p506 = pneg %p386
      %p507 = scmp.lt.s32.totalorder %s27, 1
      %s508 = scalar_select %p507, %s27, 1
      %s509 = smul.addr %s508, 8
      %s510 = scalar_lea.vmem %s16, %s509
      %p511 = scmp.lt.s32.totalorder %s27, 1
      %s512 = scalar_select %p511, %s27, 1
      %s513 = smul.addr %s512, 2
      %s514 = smul.addr %s513, 8
      %s515 = scalar_lea.vmem %s0, %s514
      %p516 = scmp.lt.s32.totalorder %s27, 1
      %s517 = scalar_select %p516, %s27, 1
      %s518 = smul.addr %s517, 8
      %s519 = scalar_lea.vmem %s16, %s518
      %v520 = vld [vmem:[%s515] sm:$0xff]
      %v521 = vld [vmem:[%s515 + $0x8] sm:$0xff]
      %v522 = vld [vmem:[%s1] sm:$0xff]
      %v523 = vld [vmem:[%s1 + $0x8] sm:$0xff]
      %v524 = vld [vmem:[%s1 + $0x10] sm:$0xff]
      %v525 = vld [vmem:[%s1 + $0x18] sm:$0xff]
      %v526 = vld [vmem:[%s1 + $0x20] sm:$0xff]
      %v527 = vld [vmem:[%s1 + $0x28] sm:$0xff]
      %v528 = vld [vmem:[%s1 + $0x30] sm:$0xff]
      %v529 = vld [vmem:[%s1 + $0x38] sm:$0xff]
      %v530 = vld [vmem:[%s1 + $0x40] sm:$0xff]
      %v531 = vld [vmem:[%s1 + $0x48] sm:$0xff]
      %v532 = vld [vmem:[%s1 + $0x50] sm:$0xff]
      %v533 = vld [vmem:[%s1 + $0x58] sm:$0xff]
      %v534 = vld [vmem:[%s1 + $0x60] sm:$0xff]
      %v535 = vld [vmem:[%s1 + $0x68] sm:$0xff]
      %v536 = vld [vmem:[%s1 + $0x70] sm:$0xff]
      %v537 = vld [vmem:[%s1 + $0x78] sm:$0xff]
      %v538 = vld [vmem:[%s1 + $0x80] sm:$0xff]
      %v539 = vld [vmem:[%s1 + $0x88] sm:$0xff]
      %v540 = vld [vmem:[%s1 + $0x90] sm:$0xff]
      %v541 = vld [vmem:[%s1 + $0x98] sm:$0xff]
      %v542 = vld [vmem:[%s1 + $0xa0] sm:$0xff]
      %v543 = vld [vmem:[%s1 + $0xa8] sm:$0xff]
      %v544 = vld [vmem:[%s1 + $0xb0] sm:$0xff]
      %v545 = vld [vmem:[%s1 + $0xb8] sm:$0xff]
      %v546 = vld [vmem:[%s1 + $0xc0] sm:$0xff]
      %v547 = vld [vmem:[%s1 + $0xc8] sm:$0xff]
      %v548 = vld [vmem:[%s1 + $0xd0] sm:$0xff]
      %v549 = vld [vmem:[%s1 + $0xd8] sm:$0xff]
      %v550 = vld [vmem:[%s1 + $0xe0] sm:$0xff]
      %v551 = vld [vmem:[%s1 + $0xe8] sm:$0xff]
      %v552 = vld [vmem:[%s1 + $0xf0] sm:$0xff]
      %v553 = vld [vmem:[%s1 + $0xf8] sm:$0xff]
      %v554 = vld [vmem:[%s1 + $0x100] sm:$0xff]
      %v555 = vld [vmem:[%s1 + $0x108] sm:$0xff]
      %v556 = vld [vmem:[%s1 + $0x110] sm:$0xff]
      %v557 = vld [vmem:[%s1 + $0x118] sm:$0xff]
      %v558 = vld [vmem:[%s1 + $0x120] sm:$0xff]
      %v559 = vld [vmem:[%s1 + $0x128] sm:$0xff]
      %v560 = vld [vmem:[%s1 + $0x130] sm:$0xff]
      %v561 = vld [vmem:[%s1 + $0x138] sm:$0xff]
      %v562 = vld [vmem:[%s1 + $0x140] sm:$0xff]
      %v563 = vld [vmem:[%s1 + $0x148] sm:$0xff]
      %v564 = vld [vmem:[%s1 + $0x150] sm:$0xff]
      %v565 = vld [vmem:[%s1 + $0x158] sm:$0xff]
      %v566 = vld [vmem:[%s1 + $0x160] sm:$0xff]
      %v567 = vld [vmem:[%s1 + $0x168] sm:$0xff]
      %v568 = vld [vmem:[%s1 + $0x170] sm:$0xff]
      %v569 = vld [vmem:[%s1 + $0x178] sm:$0xff]
      %v570 = vld [vmem:[%s1 + $0x180] sm:$0xff]
      %v571 = vld [vmem:[%s1 + $0x188] sm:$0xff]
      %v572 = vld [vmem:[%s1 + $0x190] sm:$0xff]
      %v573 = vld [vmem:[%s1 + $0x198] sm:$0xff]
      %v574 = vld [vmem:[%s1 + $0x1a0] sm:$0xff]
      %v575 = vld [vmem:[%s1 + $0x1a8] sm:$0xff]
      %v576 = vld [vmem:[%s1 + $0x1b0] sm:$0xff]
      %v577 = vld [vmem:[%s1 + $0x1b8] sm:$0xff]
      %v578 = vld [vmem:[%s1 + $0x1c0] sm:$0xff]
      %v579 = vld [vmem:[%s1 + $0x1c8] sm:$0xff]
      %v580 = vld [vmem:[%s1 + $0x1d0] sm:$0xff]
      %v581 = vld [vmem:[%s1 + $0x1d8] sm:$0xff]
      %v582 = vld [vmem:[%s1 + $0x1e0] sm:$0xff]
      %v583 = vld [vmem:[%s1 + $0x1e8] sm:$0xff]
      %v584 = vld [vmem:[%s1 + $0x1f0] sm:$0xff]
      %v585 = vld [vmem:[%s1 + $0x1f8] sm:$0xff]
      %v586 = vld [vmem:[%s1 + $0x200] sm:$0xff]
      %v587 = vld [vmem:[%s1 + $0x208] sm:$0xff]
      %v588 = vld [vmem:[%s1 + $0x210] sm:$0xff]
      %v589 = vld [vmem:[%s1 + $0x218] sm:$0xff]
      %v590 = vld [vmem:[%s1 + $0x220] sm:$0xff]
      %v591 = vld [vmem:[%s1 + $0x228] sm:$0xff]
      %v592 = vld [vmem:[%s1 + $0x230] sm:$0xff]
      %v593 = vld [vmem:[%s1 + $0x238] sm:$0xff]
      %v594 = vld [vmem:[%s1 + $0x240] sm:$0xff]
      %v595 = vld [vmem:[%s1 + $0x248] sm:$0xff]
      %v596 = vld [vmem:[%s1 + $0x250] sm:$0xff]
      %v597 = vld [vmem:[%s1 + $0x258] sm:$0xff]
      %v598 = vld [vmem:[%s1 + $0x260] sm:$0xff]
      %v599 = vld [vmem:[%s1 + $0x268] sm:$0xff]
      %v600 = vld [vmem:[%s1 + $0x270] sm:$0xff]
      %v601 = vld [vmem:[%s1 + $0x278] sm:$0xff]
      %v602 = vld [vmem:[%s1 + $0x280] sm:$0xff]
      %v603 = vld [vmem:[%s1 + $0x288] sm:$0xff]
      %v604 = vld [vmem:[%s1 + $0x290] sm:$0xff]
      %v605 = vld [vmem:[%s1 + $0x298] sm:$0xff]
      %v606 = vld [vmem:[%s1 + $0x2a0] sm:$0xff]
      %v607 = vld [vmem:[%s1 + $0x2a8] sm:$0xff]
      %v608 = vld [vmem:[%s1 + $0x2b0] sm:$0xff]
      %v609 = vld [vmem:[%s1 + $0x2b8] sm:$0xff]
      %v610 = vld [vmem:[%s1 + $0x2c0] sm:$0xff]
      %v611 = vld [vmem:[%s1 + $0x2c8] sm:$0xff]
      %v612 = vld [vmem:[%s1 + $0x2d0] sm:$0xff]
      %v613 = vld [vmem:[%s1 + $0x2d8] sm:$0xff]
      %v614 = vld [vmem:[%s1 + $0x2e0] sm:$0xff]
      %v615 = vld [vmem:[%s1 + $0x2e8] sm:$0xff]
      %v616 = vld [vmem:[%s1 + $0x2f0] sm:$0xff]
      %v617 = vld [vmem:[%s1 + $0x2f8] sm:$0xff]
      %v618 = vld [vmem:[%s1 + $0x300] sm:$0xff]
      %v619 = vld [vmem:[%s1 + $0x308] sm:$0xff]
      %v620 = vld [vmem:[%s1 + $0x310] sm:$0xff]
      %v621 = vld [vmem:[%s1 + $0x318] sm:$0xff]
      %v622 = vld [vmem:[%s1 + $0x320] sm:$0xff]
      %v623 = vld [vmem:[%s1 + $0x328] sm:$0xff]
      %v624 = vld [vmem:[%s1 + $0x330] sm:$0xff]
      %v625 = vld [vmem:[%s1 + $0x338] sm:$0xff]
      %v626 = vld [vmem:[%s1 + $0x340] sm:$0xff]
      %v627 = vld [vmem:[%s1 + $0x348] sm:$0xff]
      %v628 = vld [vmem:[%s1 + $0x350] sm:$0xff]
      %v629 = vld [vmem:[%s1 + $0x358] sm:$0xff]
      %v630 = vld [vmem:[%s1 + $0x360] sm:$0xff]
      %v631 = vld [vmem:[%s1 + $0x368] sm:$0xff]
      %v632 = vld [vmem:[%s1 + $0x370] sm:$0xff]
      %v633 = vld [vmem:[%s1 + $0x378] sm:$0xff]
      %v634 = vld [vmem:[%s1 + $0x380] sm:$0xff]
      %v635 = vld [vmem:[%s1 + $0x388] sm:$0xff]
      %v636 = vld [vmem:[%s1 + $0x390] sm:$0xff]
      %v637 = vld [vmem:[%s1 + $0x398] sm:$0xff]
      %v638 = vld [vmem:[%s1 + $0x3a0] sm:$0xff]
      %v639 = vld [vmem:[%s1 + $0x3a8] sm:$0xff]
      %v640 = vld [vmem:[%s1 + $0x3b0] sm:$0xff]
      %v641 = vld [vmem:[%s1 + $0x3b8] sm:$0xff]
      %v642 = vld [vmem:[%s1 + $0x3c0] sm:$0xff]
      %v643 = vld [vmem:[%s1 + $0x3c8] sm:$0xff]
      %v644 = vld [vmem:[%s1 + $0x3d0] sm:$0xff]
      %v645 = vld [vmem:[%s1 + $0x3d8] sm:$0xff]
      %v646 = vld [vmem:[%s1 + $0x3e0] sm:$0xff]
      %v647 = vld [vmem:[%s1 + $0x3e8] sm:$0xff]
      %v648 = vld [vmem:[%s1 + $0x3f0] sm:$0xff]
      %v649 = vld [vmem:[%s1 + $0x3f8] sm:$0xff]
      %v650 = vld [vmem:[%s1 + $0x400] sm:$0xff]
      %v651 = vld [vmem:[%s1 + $0x408] sm:$0xff]
      %v652 = vld [vmem:[%s1 + $0x410] sm:$0xff]
      %v653 = vld [vmem:[%s1 + $0x418] sm:$0xff]
      %v654 = vld [vmem:[%s1 + $0x420] sm:$0xff]
      %v655 = vld [vmem:[%s1 + $0x428] sm:$0xff]
      %v656 = vld [vmem:[%s1 + $0x430] sm:$0xff]
      %v657 = vld [vmem:[%s1 + $0x438] sm:$0xff]
      %v658 = vld [vmem:[%s1 + $0x440] sm:$0xff]
      %v659 = vld [vmem:[%s1 + $0x448] sm:$0xff]
      %v660 = vld [vmem:[%s1 + $0x450] sm:$0xff]
      %v661 = vld [vmem:[%s1 + $0x458] sm:$0xff]
      %v662 = vld [vmem:[%s1 + $0x460] sm:$0xff]
      %v663 = vld [vmem:[%s1 + $0x468] sm:$0xff]
      %v664 = vld [vmem:[%s1 + $0x470] sm:$0xff]
      %v665 = vld [vmem:[%s1 + $0x478] sm:$0xff]
      %v666 = vld [vmem:[%s1 + $0x480] sm:$0xff]
      %v667 = vld [vmem:[%s1 + $0x488] sm:$0xff]
      %v668 = vld [vmem:[%s1 + $0x490] sm:$0xff]
      %v669 = vld [vmem:[%s1 + $0x498] sm:$0xff]
      %v670 = vld [vmem:[%s1 + $0x4a0] sm:$0xff]
      %v671 = vld [vmem:[%s1 + $0x4a8] sm:$0xff]
      %v672 = vld [vmem:[%s1 + $0x4b0] sm:$0x1]
      %v673 = vld [vmem:[%s1 + $0x4b8] sm:$0x1]
      %v674 = vld [vmem:[%s1 + $0x4c0] sm:$0x1]
      %v675 = vld [vmem:[%s1 + $0x4c8] sm:$0x1]
      %v676 = vld [vmem:[%s1 + $0x4d0] sm:$0x1]
      %v677 = vld [vmem:[%s1 + $0x4d8] sm:$0x1]
      %vm678 = vcmask 596992
      %v680 = vsel %vm678, %v521, 0
      %vm682 = vcmask 1040384
      %v684 = vsel %vm682, %v672, 0
      %v687 = vsel %vm682, %v673, 0
      %v690 = vsel %vm682, %v674, 0
      %v693 = vsel %vm682, %v675, 0
      %v696 = vsel %vm682, %v676, 0
      %v699 = vsel %vm682, %v677, 0
      %701 = vmatprep.subr.mxu0 %v523
      %702 = vmatpush1.msra.mxu0 %v522
      %703 = vmatprep.subr.mxu0 %v529
      %704 = vmatpush1.msra.mxu0 %v528
      %705 = vmatprep.subr.mxu0 %v535
      %706 = vmatpush1.msra.mxu0 %v534
      %707 = vmatprep.subr.mxu0 %v541
      %708 = vmatpush1.msra.mxu0 %v540
      %709 = vmatprep.subr.mxu0 %v547
      %710 = vmatpush1.msra.mxu0 %v546
      %711 = vmatprep.subr.mxu0 %v553
      %712 = vmatpush1.msra.mxu0 %v552
      %713 = vmatprep.subr.mxu0 %v559
      %714 = vmatpush1.msra.mxu0 %v558
      %715 = vmatprep.subr.mxu0 %v565
      %716 = vmatpush1.msra.mxu0 %v564
      %717 = vmatprep.subr.mxu0 %v571
      %718 = vmatpush1.msra.mxu0 %v570
      %719 = vmatprep.subr.mxu0 %v577
      %720 = vmatpush1.msra.mxu0 %v576
      %721 = vmatprep.subr.mxu0 %v583
      %722 = vmatpush1.msra.mxu0 %v582
      %723 = vmatprep.subr.mxu0 %v589
      %724 = vmatpush1.msra.mxu0 %v588
      %725 = vmatprep.subr.mxu0 %v595
      %726 = vmatpush1.msra.mxu0 %v594
      %727 = vmatprep.subr.mxu0 %v601
      %728 = vmatpush1.msra.mxu0 %v600
      %729 = vmatprep.subr.mxu0 %v607
      %730 = vmatpush1.msra.mxu0 %v606
      %731 = vmatprep.subr.mxu0 %v613
      %732 = vmatpush1.msra.mxu0 %v612
      %733 = vmatprep.subr.mxu0 %v619
      %734 = vmatpush1.msra.mxu0 %v618
      %735 = vmatprep.subr.mxu0 %v625
      %736 = vmatpush1.msra.mxu0 %v624
      %737 = vmatprep.subr.mxu0 %v631
      %738 = vmatpush1.msra.mxu0 %v630
      %739 = vmatprep.subr.mxu0 %v637
      %740 = vmatpush1.msra.mxu0 %v636
      %741 = vmatprep.subr.mxu0 %v643
      %742 = vmatpush1.msra.mxu0 %v642
      %743 = vmatprep.subr.mxu0 %v649
      %744 = vmatpush1.msra.mxu0 %v648
      %745 = vmatprep.subr.mxu0 %v655
      %746 = vmatpush1.msra.mxu0 %v654
      %747 = vmatprep.subr.mxu0 %v661
      %748 = vmatpush1.msra.mxu0 %v660
      %749 = vmatprep.subr.mxu0 %v667
      %750 = vmatpush1.msra.mxu0 %v666
      %751 = vmatprep.subr.mxu0 %v687
      %752 = vmatpush1.msra.mxu0 %v684
      %753 = vmatprep.subr.mxu0 0.0
      %754 = vmatpush1.msra.mxu0 0.0
      %755 = vmatprep.subr.mxu0 0.0
      %756 = vmatpush1.msra.mxu0 0.0
      %757 = vmatprep.subr.mxu0 0.0
      %758 = vmatpush1.msra.mxu0 0.0
      %759 = vmatprep.subr.mxu0 0.0
      %760 = vmatpush1.msra.mxu0 0.0
      %761 = vmatprep.subr.mxu0 0.0
      %762 = vmatpush1.msra.mxu0 0.0
      %763 = vmatprep.subr.mxu0 0.0
      %764 = vmatpush1.msra.mxu0 0.0
      %765 = vmatprep.mubr.f32.mxu0 %v680
      %766 = vmatmul.mubr.f32.gmra.mrb[0].mxu0 %v520
      %v767 = vpop.f32.mrb[0].mxu0
      %v768 = vadd.f32 0.0, %v767
      %v769 = vpop.f32.mrb[0].mxu0
      %v770 = vadd.f32 0.0, %v769
      %771 = vdwg.mxu0
      %772 = vmatprep.subr.mxu0 %v525
      %773 = vmatpush1.msra.mxu0 %v524
      %774 = vmatprep.subr.mxu0 %v531
      %775 = vmatpush1.msra.mxu0 %v530
      %776 = vmatprep.subr.mxu0 %v537
      %777 = vmatpush1.msra.mxu0 %v536
      %778 = vmatprep.subr.mxu0 %v543
      %779 = vmatpush1.msra.mxu0 %v542
      %780 = vmatprep.subr.mxu0 %v549
      %781 = vmatpush1.msra.mxu0 %v548
      %782 = vmatprep.subr.mxu0 %v555
      %783 = vmatpush1.msra.mxu0 %v554
      %784 = vmatprep.subr.mxu0 %v561
      %785 = vmatpush1.msra.mxu0 %v560
      %786 = vmatprep.subr.mxu0 %v567
      %787 = vmatpush1.msra.mxu0 %v566
      %788 = vmatprep.subr.mxu0 %v573
      %789 = vmatpush1.msra.mxu0 %v572
      %790 = vmatprep.subr.mxu0 %v579
      %791 = vmatpush1.msra.mxu0 %v578
      %792 = vmatprep.subr.mxu0 %v585
      %793 = vmatpush1.msra.mxu0 %v584
      %794 = vmatprep.subr.mxu0 %v591
      %795 = vmatpush1.msra.mxu0 %v590
      %796 = vmatprep.subr.mxu0 %v597
      %797 = vmatpush1.msra.mxu0 %v596
      %798 = vmatprep.subr.mxu0 %v603
      %799 = vmatpush1.msra.mxu0 %v602
      %800 = vmatprep.subr.mxu0 %v609
      %801 = vmatpush1.msra.mxu0 %v608
      %802 = vmatprep.subr.mxu0 %v615
      %803 = vmatpush1.msra.mxu0 %v614
      %804 = vmatprep.subr.mxu0 %v621
      %805 = vmatpush1.msra.mxu0 %v620
      %806 = vmatprep.subr.mxu0 %v627
      %807 = vmatpush1.msra.mxu0 %v626
      %808 = vmatprep.subr.mxu0 %v633
      %809 = vmatpush1.msra.mxu0 %v632
      %810 = vmatprep.subr.mxu0 %v639
      %811 = vmatpush1.msra.mxu0 %v638
      %812 = vmatprep.subr.mxu0 %v645
      %813 = vmatpush1.msra.mxu0 %v644
      %814 = vmatprep.subr.mxu0 %v651
      %815 = vmatpush1.msra.mxu0 %v650
      %816 = vmatprep.subr.mxu0 %v657
      %817 = vmatpush1.msra.mxu0 %v656
      %818 = vmatprep.subr.mxu0 %v663
      %819 = vmatpush1.msra.mxu0 %v662
      %820 = vmatprep.subr.mxu0 %v669
      %821 = vmatpush1.msra.mxu0 %v668
      %822 = vmatprep.subr.mxu0 %v693
      %823 = vmatpush1.msra.mxu0 %v690
      %824 = vmatprep.subr.mxu0 0.0
      %825 = vmatpush1.msra.mxu0 0.0
      %826 = vmatprep.subr.mxu0 0.0
      %827 = vmatpush1.msra.mxu0 0.0
      %828 = vmatprep.subr.mxu0 0.0
      %829 = vmatpush1.msra.mxu0 0.0
      %830 = vmatprep.subr.mxu0 0.0
      %831 = vmatpush1.msra.mxu0 0.0
      %832 = vmatprep.subr.mxu0 0.0
      %833 = vmatpush1.msra.mxu0 0.0
      %834 = vmatprep.subr.mxu0 0.0
      %835 = vmatpush1.msra.mxu0 0.0
      %836 = vmatprep.mubr.f32.mxu0 %v680
      %837 = vmatmul.mubr.f32.gmra.mrb[0].mxu0 %v520
      %v838 = vpop.f32.mrb[0].mxu0
      %v839 = vadd.f32 0.0, %v838
      %v840 = vpop.f32.mrb[0].mxu0
      %v841 = vadd.f32 0.0, %v840
      %842 = vdwg.mxu0
      %843 = vmatprep.subr.mxu0 %v527
      %844 = vmatpush1.msra.mxu0 %v526
      %845 = vmatprep.subr.mxu0 %v533
      %846 = vmatpush1.msra.mxu0 %v532
      %847 = vmatprep.subr.mxu0 %v539
      %848 = vmatpush1.msra.mxu0 %v538
      %849 = vmatprep.subr.mxu0 %v545
      %850 = vmatpush1.msra.mxu0 %v544
      %851 = vmatprep.subr.mxu0 %v551
      %852 = vmatpush1.msra.mxu0 %v550
      %853 = vmatprep.subr.mxu0 %v557
      %854 = vmatpush1.msra.mxu0 %v556
      %855 = vmatprep.subr.mxu0 %v563
      %856 = vmatpush1.msra.mxu0 %v562
      %857 = vmatprep.subr.mxu0 %v569
      %858 = vmatpush1.msra.mxu0 %v568
      %859 = vmatprep.subr.mxu0 %v575
      %860 = vmatpush1.msra.mxu0 %v574
      %861 = vmatprep.subr.mxu0 %v581
      %862 = vmatpush1.msra.mxu0 %v580
      %863 = vmatprep.subr.mxu0 %v587
      %864 = vmatpush1.msra.mxu0 %v586
      %865 = vmatprep.subr.mxu0 %v593
      %866 = vmatpush1.msra.mxu0 %v592
      %867 = vmatprep.subr.mxu0 %v599
      %868 = vmatpush1.msra.mxu0 %v598
      %869 = vmatprep.subr.mxu0 %v605
      %870 = vmatpush1.msra.mxu0 %v604
      %871 = vmatprep.subr.mxu0 %v611
      %872 = vmatpush1.msra.mxu0 %v610
      %873 = vmatprep.subr.mxu0 %v617
      %874 = vmatpush1.msra.mxu0 %v616
      %875 = vmatprep.subr.mxu0 %v623
      %876 = vmatpush1.msra.mxu0 %v622
      %877 = vmatprep.subr.mxu0 %v629
      %878 = vmatpush1.msra.mxu0 %v628
      %879 = vmatprep.subr.mxu0 %v635
      %880 = vmatpush1.msra.mxu0 %v634
      %881 = vmatprep.subr.mxu0 %v641
      %882 = vmatpush1.msra.mxu0 %v640
      %883 = vmatprep.subr.mxu0 %v647
      %884 = vmatpush1.msra.mxu0 %v646
      %885 = vmatprep.subr.mxu0 %v653
      %886 = vmatpush1.msra.mxu0 %v652
      %887 = vmatprep.subr.mxu0 %v659
      %888 = vmatpush1.msra.mxu0 %v658
      %889 = vmatprep.subr.mxu0 %v665
      %890 = vmatpush1.msra.mxu0 %v664
      %891 = vmatprep.subr.mxu0 %v671
      %892 = vmatpush1.msra.mxu0 %v670
      %893 = vmatprep.subr.mxu0 %v699
      %894 = vmatpush1.msra.mxu0 %v696
      %895 = vmatprep.subr.mxu0 0.0
      %896 = vmatpush1.msra.mxu0 0.0
      %897 = vmatprep.subr.mxu0 0.0
      %898 = vmatpush1.msra.mxu0 0.0
      %899 = vmatprep.subr.mxu0 0.0
      %900 = vmatpush1.msra.mxu0 0.0
      %901 = vmatprep.subr.mxu0 0.0
      %902 = vmatpush1.msra.mxu0 0.0
      %903 = vmatprep.subr.mxu0 0.0
      %904 = vmatpush1.msra.mxu0 0.0
      %905 = vmatprep.subr.mxu0 0.0
      %906 = vmatpush1.msra.mxu0 0.0
      %907 = vmatprep.mubr.f32.mxu0 %v680
      %908 = vmatmul.mubr.f32.gmra.mrb[0].mxu0 %v520
      %v909 = vpop.f32.mrb[0].mxu0
      %v910 = vadd.f32 0.0, %v909
      %v911 = vpop.f32.mrb[0].mxu0
      %v912 = vadd.f32 0.0, %v911
      %913 = vdwg.mxu0
      %v914 = vld [vmem:[%s2] sm:$0xff]
      %v915 = vld [vmem:[%s2 + $0x8] sm:$0xff]
      %v916 = vld [vmem:[%s2 + $0x10] sm:$0xff]
      %v917 = vld [vmem:[%s2 + $0x18] sm:$0xff]
      %v918 = vld [vmem:[%s2 + $0x20] sm:$0xff]
      %v919 = vld [vmem:[%s2 + $0x28] sm:$0xff]
      %v920 = vld [vmem:[%s2 + $0x30] sm:$0xff]
      %v921 = vld [vmem:[%s2 + $0x38] sm:$0xff]
      %v922 = vld [vmem:[%s2 + $0x40] sm:$0xff]
      %v923 = vld [vmem:[%s2 + $0x48] sm:$0xff]
      %v924 = vld [vmem:[%s2 + $0x50] sm:$0xff]
      %v925 = vld [vmem:[%s2 + $0x58] sm:$0xff]
      %v926 = vld [vmem:[%s2 + $0x60] sm:$0xff]
      %v927 = vld [vmem:[%s2 + $0x68] sm:$0xff]
      %v928 = vld [vmem:[%s2 + $0x70] sm:$0xff]
      %v929 = vld [vmem:[%s2 + $0x78] sm:$0xff]
      %s930 = scalar_lea.vmem %s2, 128
      %v931 = vld [vmem:[%s930] sm:$0xff]
      %v932 = vld [vmem:[%s930 + $0x8] sm:$0xff]
      %v933 = vld [vmem:[%s930 + $0x10] sm:$0xff]
      %v934 = vld [vmem:[%s930 + $0x18] sm:$0xff]
      %v935 = vld [vmem:[%s930 + $0x20] sm:$0xff]
      %v936 = vld [vmem:[%s930 + $0x28] sm:$0xff]
      %v937 = vld [vmem:[%s930 + $0x30] sm:$0xff]
      %v938 = vld [vmem:[%s930 + $0x38] sm:$0xff]
      %v939 = vld [vmem:[%s930 + $0x40] sm:$0xff]
      %v940 = vld [vmem:[%s930 + $0x48] sm:$0xff]
      %v941 = vld [vmem:[%s930 + $0x50] sm:$0xff]
      %v942 = vld [vmem:[%s930 + $0x58] sm:$0xff]
      %v943 = vld [vmem:[%s930 + $0x60] sm:$0xff]
      %v944 = vld [vmem:[%s930 + $0x68] sm:$0xff]
      %v945 = vld [vmem:[%s930 + $0x70] sm:$0xff]
      %v946 = vld [vmem:[%s930 + $0x78] sm:$0xff]
      %vm947 = vcmask 64512
      %v949 = vsel %vm947, %v931, 0
      %v952 = vsel %vm947, %v932, 0
      %v955 = vsel %vm947, %v933, 0
      %v958 = vsel %vm947, %v934, 0
      %v961 = vsel %vm947, %v935, 0
      %v964 = vsel %vm947, %v936, 0
      %v967 = vsel %vm947, %v937, 0
      %v970 = vsel %vm947, %v938, 0
      %v973 = vsel %vm947, %v939, 0
      %v976 = vsel %vm947, %v940, 0
      %v979 = vsel %vm947, %v941, 0
      %v982 = vsel %vm947, %v942, 0
      %v985 = vsel %vm947, %v943, 0
      %v988 = vsel %vm947, %v944, 0
      %v991 = vsel %vm947, %v945, 0
      %v994 = vsel %vm947, %v946, 0
      %996 = vmatprep.subr.mxu0 %v841
      %997 = vmatpush1.msra.mxu0 %v839
      %998 = vmatprep.subr.mxu0 0.0
      %999 = vmatpush1.msra.mxu0 0.0
      %1000 = vmatprep.subr.mxu0 0.0
      %1001 = vmatpush1.msra.mxu0 0.0
      %1002 = vmatprep.subr.mxu0 0.0
      %1003 = vmatpush1.msra.mxu0 0.0
      %1004 = vmatprep.subr.mxu0 0.0
      %1005 = vmatpush1.msra.mxu0 0.0
      %1006 = vmatprep.subr.mxu0 0.0
      %1007 = vmatpush1.msra.mxu0 0.0
      %1008 = vmatprep.subr.mxu0 0.0
      %1009 = vmatpush1.msra.mxu0 0.0
      %1010 = vmatprep.subr.mxu0 0.0
      %1011 = vmatpush1.msra.mxu0 0.0
      %1012 = vmatprep.subr.mxu0 0.0
      %1013 = vmatpush1.msra.mxu0 0.0
      %1014 = vmatprep.subr.mxu0 0.0
      %1015 = vmatpush1.msra.mxu0 0.0
      %1016 = vmatprep.subr.mxu0 0.0
      %1017 = vmatpush1.msra.mxu0 0.0
      %1018 = vmatprep.subr.mxu0 0.0
      %1019 = vmatpush1.msra.mxu0 0.0
      %1020 = vmatprep.subr.mxu0 0.0
      %1021 = vmatpush1.msra.mxu0 0.0
      %1022 = vmatprep.subr.mxu0 0.0
      %1023 = vmatpush1.msra.mxu0 0.0
      %1024 = vmatprep.subr.mxu0 0.0
      %1025 = vmatpush1.msra.mxu0 0.0
      %1026 = vmatprep.subr.mxu0 0.0
      %1027 = vmatpush1.msra.mxu0 0.0
      %1028 = vmatprep.subr.mxu0 0.0
      %1029 = vmatpush1.msra.mxu0 0.0
      %1030 = vmatprep.subr.mxu0 0.0
      %1031 = vmatpush1.msra.mxu0 0.0
      %1032 = vmatprep.subr.mxu0 0.0
      %1033 = vmatpush1.msra.mxu0 0.0
      %1034 = vmatprep.subr.mxu0 0.0
      %1035 = vmatpush1.msra.mxu0 0.0
      %1036 = vmatprep.subr.mxu0 0.0
      %1037 = vmatpush1.msra.mxu0 0.0
      %1038 = vmatprep.subr.mxu0 0.0
      %1039 = vmatpush1.msra.mxu0 0.0
      %1040 = vmatprep.subr.mxu0 0.0
      %1041 = vmatpush1.msra.mxu0 0.0
      %1042 = vmatprep.subr.mxu0 0.0
      %1043 = vmatpush1.msra.mxu0 0.0
      %1044 = vmatprep.subr.mxu0 0.0
      %1045 = vmatpush1.msra.mxu0 0.0
      %1046 = vmatprep.subr.mxu0 0.0
      %1047 = vmatpush1.msra.mxu0 0.0
      %1048 = vmatprep.subr.mxu0 0.0
      %1049 = vmatpush1.msra.mxu0 0.0
      %1050 = vmatprep.subr.mxu0 0.0
      %1051 = vmatpush1.msra.mxu0 0.0
      %1052 = vmatprep.subr.mxu0 0.0
      %1053 = vmatpush1.msra.mxu0 0.0
      %1054 = vmatprep.subr.mxu0 0.0
      %1055 = vmatpush1.msra.mxu0 0.0
      %1056 = vmatprep.subr.mxu0 0.0
      %1057 = vmatpush1.msra.mxu0 0.0
      %1058 = vmatprep.subr.mxu0 0.0
      %1059 = vmatpush1.msra.mxu0 0.0
      %1060 = vmatprep.mubr.f32.mxu0 0.0
      %1061 = vmatmul.mubr.f32.gmra.mrb[0].mxu0 %v949
      %v1062 = vpop.f32.mrb[0].mxu0
      %v1063 = vadd.f32 0.0, %v1062
      %v1064 = vpop.f32.mrb[0].mxu0
      %v1065 = vadd.f32 0.0, %v1064
      %1066 = vmatprep.mubr.f32.mxu0 0.0
      %1067 = vmatmul.mubr.f32.gmra.mrb[0].mxu0 %v952
      %v1068 = vpop.f32.mrb[0].mxu0
      %v1069 = vadd.f32 0.0, %v1068
      %v1070 = vpop.f32.mrb[0].mxu0
      %v1071 = vadd.f32 0.0, %v1070
      %1072 = vmatprep.mubr.f32.mxu0 0.0
      %1073 = vmatmul.mubr.f32.gmra.mrb[0].mxu0 %v955
      %v1074 = vpop.f32.mrb[0].mxu0
      %v1075 = vadd.f32 0.0, %v1074
      %v1076 = vpop.f32.mrb[0].mxu0
      %v1077 = vadd.f32 0.0, %v1076
      %1078 = vmatprep.mubr.f32.mxu0 0.0
      %1079 = vmatmul.mubr.f32.gmra.mrb[0].mxu0 %v958
      %v1080 = vpop.f32.mrb[0].mxu0
      %v1081 = vadd.f32 0.0, %v1080
      %v1082 = vpop.f32.mrb[0].mxu0
      %v1083 = vadd.f32 0.0, %v1082
      %1084 = vmatprep.mubr.f32.mxu0 0.0
      %1085 = vmatmul.mubr.f32.gmra.mrb[0].mxu0 %v961
      %v1086 = vpop.f32.mrb[0].mxu0
      %v1087 = vadd.f32 0.0, %v1086
      %v1088 = vpop.f32.mrb[0].mxu0
      %v1089 = vadd.f32 0.0, %v1088
      %1090 = vmatprep.mubr.f32.mxu0 0.0
      %1091 = vmatmul.mubr.f32.gmra.mrb[0].mxu0 %v964
      %v1092 = vpop.f32.mrb[0].mxu0
      %v1093 = vadd.f32 0.0, %v1092
      %v1094 = vpop.f32.mrb[0].mxu0
      %v1095 = vadd.f32 0.0, %v1094
      %1096 = vmatprep.mubr.f32.mxu0 0.0
      %1097 = vmatmul.mubr.f32.gmra.mrb[0].mxu0 %v967
      %v1098 = vpop.f32.mrb[0].mxu0
      %v1099 = vadd.f32 0.0, %v1098
      %v1100 = vpop.f32.mrb[0].mxu0
      %v1101 = vadd.f32 0.0, %v1100
      %1102 = vmatprep.mubr.f32.mxu0 0.0
      %1103 = vmatmul.mubr.f32.gmra.mrb[0].mxu0 %v970
      %v1104 = vpop.f32.mrb[0].mxu0
      %v1105 = vadd.f32 0.0, %v1104
      %v1106 = vpop.f32.mrb[0].mxu0
      %v1107 = vadd.f32 0.0, %v1106
      %1108 = vmatprep.mubr.f32.mxu0 0.0
      %1109 = vmatmul.mubr.f32.gmra.mrb[0].mxu0 %v973
      %v1110 = vpop.f32.mrb[0].mxu0
      %v1111 = vadd.f32 0.0, %v1110
      %v1112 = vpop.f32.mrb[0].mxu0
      %v1113 = vadd.f32 0.0, %v1112
      %1114 = vmatprep.mubr.f32.mxu0 0.0
      %1115 = vmatmul.mubr.f32.gmra.mrb[0].mxu0 %v976
      %v1116 = vpop.f32.mrb[0].mxu0
      %v1117 = vadd.f32 0.0, %v1116
      %v1118 = vpop.f32.mrb[0].mxu0
      %v1119 = vadd.f32 0.0, %v1118
      %1120 = vmatprep.mubr.f32.mxu0 0.0
      %1121 = vmatmul.mubr.f32.gmra.mrb[0].mxu0 %v979
      %v1122 = vpop.f32.mrb[0].mxu0
      %v1123 = vadd.f32 0.0, %v1122
      %v1124 = vpop.f32.mrb[0].mxu0
      %v1125 = vadd.f32 0.0, %v1124
      %1126 = vmatprep.mubr.f32.mxu0 0.0
      %1127 = vmatmul.mubr.f32.gmra.mrb[0].mxu0 %v982
      %v1128 = vpop.f32.mrb[0].mxu0
      %v1129 = vadd.f32 0.0, %v1128
      %v1130 = vpop.f32.mrb[0].mxu0
      %v1131 = vadd.f32 0.0, %v1130
      %1132 = vmatprep.mubr.f32.mxu0 0.0
      %1133 = vmatmul.mubr.f32.gmra.mrb[0].mxu0 %v985
      %v1134 = vpop.f32.mrb[0].mxu0
      %v1135 = vadd.f32 0.0, %v1134
      %v1136 = vpop.f32.mrb[0].mxu0
      %v1137 = vadd.f32 0.0, %v1136
      %1138 = vmatprep.mubr.f32.mxu0 0.0
      %1139 = vmatmul.mubr.f32.gmra.mrb[0].mxu0 %v988
      %v1140 = vpop.f32.mrb[0].mxu0
      %v1141 = vadd.f32 0.0, %v1140
      %v1142 = vpop.f32.mrb[0].mxu0
      %v1143 = vadd.f32 0.0, %v1142
      %1144 = vmatprep.mubr.f32.mxu0 0.0
      %1145 = vmatmul.mubr.f32.gmra.mrb[0].mxu0 %v991
      %v1146 = vpop.f32.mrb[0].mxu0
      %v1147 = vadd.f32 0.0, %v1146
      %v1148 = vpop.f32.mrb[0].mxu0
      %v1149 = vadd.f32 0.0, %v1148
      %1150 = vmatprep.mubr.f32.mxu0 0.0
      %1151 = vmatmul.mubr.f32.gmra.mrb[0].mxu0 %v994
      %v1152 = vpop.f32.mrb[0].mxu0
      %v1153 = vadd.f32 0.0, %v1152
      %v1154 = vpop.f32.mrb[0].mxu0
      %v1155 = vadd.f32 0.0, %v1154
      %1156 = vdwg.mxu0
      %v1158 = vsel %vm947, %v914, 0
      %v1161 = vsel %vm947, %v915, 0
      %v1164 = vsel %vm947, %v916, 0
      %v1167 = vsel %vm947, %v917, 0
      %v1170 = vsel %vm947, %v918, 0
      %v1173 = vsel %vm947, %v919, 0
      %v1176 = vsel %vm947, %v920, 0
      %v1179 = vsel %vm947, %v921, 0
      %v1182 = vsel %vm947, %v922, 0
      %v1185 = vsel %vm947, %v923, 0
      %v1188 = vsel %vm947, %v924, 0
      %v1191 = vsel %vm947, %v925, 0
      %v1194 = vsel %vm947, %v926, 0
      %v1197 = vsel %vm947, %v927, 0
      %v1200 = vsel %vm947, %v928, 0
      %v1203 = vsel %vm947, %v929, 0
      %1205 = vmatprep.subr.mxu0 %v770
      %1206 = vmatpush1.msra.mxu0 %v768
      %1207 = vmatprep.subr.mxu0 0.0
      %1208 = vmatpush1.msra.mxu0 0.0
      %1209 = vmatprep.subr.mxu0 0.0
      %1210 = vmatpush1.msra.mxu0 0.0
      %1211 = vmatprep.subr.mxu0 0.0
      %1212 = vmatpush1.msra.mxu0 0.0
      %1213 = vmatprep.subr.mxu0 0.0
      %1214 = vmatpush1.msra.mxu0 0.0
      %1215 = vmatprep.subr.mxu0 0.0
      %1216 = vmatpush1.msra.mxu0 0.0
      %1217 = vmatprep.subr.mxu0 0.0
      %1218 = vmatpush1.msra.mxu0 0.0
      %1219 = vmatprep.subr.mxu0 0.0
      %1220 = vmatpush1.msra.mxu0 0.0
      %1221 = vmatprep.subr.mxu0 0.0
      %1222 = vmatpush1.msra.mxu0 0.0
      %1223 = vmatprep.subr.mxu0 0.0
      %1224 = vmatpush1.msra.mxu0 0.0
      %1225 = vmatprep.subr.mxu0 0.0
      %1226 = vmatpush1.msra.mxu0 0.0
      %1227 = vmatprep.subr.mxu0 0.0
      %1228 = vmatpush1.msra.mxu0 0.0
      %1229 = vmatprep.subr.mxu0 0.0
      %1230 = vmatpush1.msra.mxu0 0.0
      %1231 = vmatprep.subr.mxu0 0.0
      %1232 = vmatpush1.msra.mxu0 0.0
      %1233 = vmatprep.subr.mxu0 0.0
      %1234 = vmatpush1.msra.mxu0 0.0
      %1235 = vmatprep.subr.mxu0 0.0
      %1236 = vmatpush1.msra.mxu0 0.0
      %1237 = vmatprep.subr.mxu0 0.0
      %1238 = vmatpush1.msra.mxu0 0.0
      %1239 = vmatprep.subr.mxu0 0.0
      %1240 = vmatpush1.msra.mxu0 0.0
      %1241 = vmatprep.subr.mxu0 0.0
      %1242 = vmatpush1.msra.mxu0 0.0
      %1243 = vmatprep.subr.mxu0 0.0
      %1244 = vmatpush1.msra.mxu0 0.0
      %1245 = vmatprep.subr.mxu0 0.0
      %1246 = vmatpush1.msra.mxu0 0.0
      %1247 = vmatprep.subr.mxu0 0.0
      %1248 = vmatpush1.msra.mxu0 0.0
      %1249 = vmatprep.subr.mxu0 0.0
      %1250 = vmatpush1.msra.mxu0 0.0
      %1251 = vmatprep.subr.mxu0 0.0
      %1252 = vmatpush1.msra.mxu0 0.0
      %1253 = vmatprep.subr.mxu0 0.0
      %1254 = vmatpush1.msra.mxu0 0.0
      %1255 = vmatprep.subr.mxu0 0.0
      %1256 = vmatpush1.msra.mxu0 0.0
      %1257 = vmatprep.subr.mxu0 0.0
      %1258 = vmatpush1.msra.mxu0 0.0
      %1259 = vmatprep.subr.mxu0 0.0
      %1260 = vmatpush1.msra.mxu0 0.0
      %1261 = vmatprep.subr.mxu0 0.0
      %1262 = vmatpush1.msra.mxu0 0.0
      %1263 = vmatprep.subr.mxu0 0.0
      %1264 = vmatpush1.msra.mxu0 0.0
      %1265 = vmatprep.subr.mxu0 0.0
      %1266 = vmatpush1.msra.mxu0 0.0
      %1267 = vmatprep.subr.mxu0 0.0
      %1268 = vmatpush1.msra.mxu0 0.0
      %1269 = vmatprep.mubr.f32.mxu0 0.0
      %1270 = vmatmul.mubr.f32.gmra.mrb[0].mxu0 %v1158
      %v1271 = vpop.f32.mrb[0].mxu0
      %v1272 = vadd.f32 %v1063, %v1271
      %v1273 = vpop.f32.mrb[0].mxu0
      %v1274 = vadd.f32 %v1065, %v1273
      %1275 = vmatprep.mubr.f32.mxu0 0.0
      %1276 = vmatmul.mubr.f32.gmra.mrb[0].mxu0 %v1161
      %v1277 = vpop.f32.mrb[0].mxu0
      %v1278 = vadd.f32 %v1069, %v1277
      %v1279 = vpop.f32.mrb[0].mxu0
      %v1280 = vadd.f32 %v1071, %v1279
      %1281 = vmatprep.mubr.f32.mxu0 0.0
      %1282 = vmatmul.mubr.f32.gmra.mrb[0].mxu0 %v1164
      %v1283 = vpop.f32.mrb[0].mxu0
      %v1284 = vadd.f32 %v1075, %v1283
      %v1285 = vpop.f32.mrb[0].mxu0
      %v1286 = vadd.f32 %v1077, %v1285
      %1287 = vmatprep.mubr.f32.mxu0 0.0
      %1288 = vmatmul.mubr.f32.gmra.mrb[0].mxu0 %v1167
      %v1289 = vpop.f32.mrb[0].mxu0
      %v1290 = vadd.f32 %v1081, %v1289
      %v1291 = vpop.f32.mrb[0].mxu0
      %v1292 = vadd.f32 %v1083, %v1291
      %1293 = vmatprep.mubr.f32.mxu0 0.0
      %1294 = vmatmul.mubr.f32.gmra.mrb[0].mxu0 %v1170
      %v1295 = vpop.f32.mrb[0].mxu0
      %v1296 = vadd.f32 %v1087, %v1295
      %v1297 = vpop.f32.mrb[0].mxu0
      %v1298 = vadd.f32 %v1089, %v1297
      %1299 = vmatprep.mubr.f32.mxu0 0.0
      %1300 = vmatmul.mubr.f32.gmra.mrb[0].mxu0 %v1173
      %v1301 = vpop.f32.mrb[0].mxu0
      %v1302 = vadd.f32 %v1093, %v1301
      %v1303 = vpop.f32.mrb[0].mxu0
      %v1304 = vadd.f32 %v1095, %v1303
      %1305 = vmatprep.mubr.f32.mxu0 0.0
      %1306 = vmatmul.mubr.f32.gmra.mrb[0].mxu0 %v1176
      %v1307 = vpop.f32.mrb[0].mxu0
      %v1308 = vadd.f32 %v1099, %v1307
      %v1309 = vpop.f32.mrb[0].mxu0
      %v1310 = vadd.f32 %v1101, %v1309
      %1311 = vmatprep.mubr.f32.mxu0 0.0
      %1312 = vmatmul.mubr.f32.gmra.mrb[0].mxu0 %v1179
      %v1313 = vpop.f32.mrb[0].mxu0
      %v1314 = vadd.f32 %v1105, %v1313
      %v1315 = vpop.f32.mrb[0].mxu0
      %v1316 = vadd.f32 %v1107, %v1315
      %1317 = vmatprep.mubr.f32.mxu0 0.0
      %1318 = vmatmul.mubr.f32.gmra.mrb[0].mxu0 %v1182
      %v1319 = vpop.f32.mrb[0].mxu0
      %v1320 = vadd.f32 %v1111, %v1319
      %v1321 = vpop.f32.mrb[0].mxu0
      %v1322 = vadd.f32 %v1113, %v1321
      %1323 = vmatprep.mubr.f32.mxu0 0.0
      %1324 = vmatmul.mubr.f32.gmra.mrb[0].mxu0 %v1185
      %v1325 = vpop.f32.mrb[0].mxu0
      %v1326 = vadd.f32 %v1117, %v1325
      %v1327 = vpop.f32.mrb[0].mxu0
      %v1328 = vadd.f32 %v1119, %v1327
      %1329 = vmatprep.mubr.f32.mxu0 0.0
      %1330 = vmatmul.mubr.f32.gmra.mrb[0].mxu0 %v1188
      %v1331 = vpop.f32.mrb[0].mxu0
      %v1332 = vadd.f32 %v1123, %v1331
      %v1333 = vpop.f32.mrb[0].mxu0
      %v1334 = vadd.f32 %v1125, %v1333
      %1335 = vmatprep.mubr.f32.mxu0 0.0
      %1336 = vmatmul.mubr.f32.gmra.mrb[0].mxu0 %v1191
      %v1337 = vpop.f32.mrb[0].mxu0
      %v1338 = vadd.f32 %v1129, %v1337
      %v1339 = vpop.f32.mrb[0].mxu0
      %v1340 = vadd.f32 %v1131, %v1339
      %1341 = vmatprep.mubr.f32.mxu0 0.0
      %1342 = vmatmul.mubr.f32.gmra.mrb[0].mxu0 %v1194
      %v1343 = vpop.f32.mrb[0].mxu0
      %v1344 = vadd.f32 %v1135, %v1343
      %v1345 = vpop.f32.mrb[0].mxu0
      %v1346 = vadd.f32 %v1137, %v1345
      %1347 = vmatprep.mubr.f32.mxu0 0.0
      %1348 = vmatmul.mubr.f32.gmra.mrb[0].mxu0 %v1197
      %v1349 = vpop.f32.mrb[0].mxu0
      %v1350 = vadd.f32 %v1141, %v1349
      %v1351 = vpop.f32.mrb[0].mxu0
      %v1352 = vadd.f32 %v1143, %v1351
      %1353 = vmatprep.mubr.f32.mxu0 0.0
      %1354 = vmatmul.mubr.f32.gmra.mrb[0].mxu0 %v1200
      %v1355 = vpop.f32.mrb[0].mxu0
      %v1356 = vadd.f32 %v1147, %v1355
      %v1357 = vpop.f32.mrb[0].mxu0
      %v1358 = vadd.f32 %v1149, %v1357
      %1359 = vmatprep.mubr.f32.mxu0 0.0
      %1360 = vmatmul.mubr.f32.gmra.mrb[0].mxu0 %v1203
      %v1361 = vpop.f32.mrb[0].mxu0
      %v1362 = vadd.f32 %v1153, %v1361
      %v1363 = vpop.f32.mrb[0].mxu0
      %v1364 = vadd.f32 %v1155, %v1363
      %1365 = vdwg.mxu0
      %s1366 = scalar_lea.vmem %s2, 256
      %v1367 = vld [vmem:[%s1366] sm:$0xff]
      %v1368 = vld [vmem:[%s1366 + $0x8] sm:$0xff]
      %v1369 = vld [vmem:[%s1366 + $0x10] sm:$0xff]
      %v1370 = vld [vmem:[%s1366 + $0x18] sm:$0xff]
      %v1371 = vld [vmem:[%s1366 + $0x20] sm:$0xff]
      %v1372 = vld [vmem:[%s1366 + $0x28] sm:$0xff]
      %v1373 = vld [vmem:[%s1366 + $0x30] sm:$0xff]
      %v1374 = vld [vmem:[%s1366 + $0x38] sm:$0xff]
      %v1375 = vld [vmem:[%s1366 + $0x40] sm:$0xff]
      %v1376 = vld [vmem:[%s1366 + $0x48] sm:$0xff]
      %v1377 = vld [vmem:[%s1366 + $0x50] sm:$0xff]
      %v1378 = vld [vmem:[%s1366 + $0x58] sm:$0xff]
      %v1379 = vld [vmem:[%s1366 + $0x60] sm:$0xff]
      %v1380 = vld [vmem:[%s1366 + $0x68] sm:$0xff]
      %v1381 = vld [vmem:[%s1366 + $0x70] sm:$0xff]
      %v1382 = vld [vmem:[%s1366 + $0x78] sm:$0xff]
      %v1384 = vsel %vm947, %v1367, 0
      %v1387 = vsel %vm947, %v1368, 0
      %v1390 = vsel %vm947, %v1369, 0
      %v1393 = vsel %vm947, %v1370, 0
      %v1396 = vsel %vm947, %v1371, 0
      %v1399 = vsel %vm947, %v1372, 0
      %v1402 = vsel %vm947, %v1373, 0
      %v1405 = vsel %vm947, %v1374, 0
      %v1408 = vsel %vm947, %v1375, 0
      %v1411 = vsel %vm947, %v1376, 0
      %v1414 = vsel %vm947, %v1377, 0
      %v1417 = vsel %vm947, %v1378, 0
      %v1420 = vsel %vm947, %v1379, 0
      %v1423 = vsel %vm947, %v1380, 0
      %v1426 = vsel %vm947, %v1381, 0
      %v1429 = vsel %vm947, %v1382, 0
      %1431 = vmatprep.subr.mxu0 %v912
      %1432 = vmatpush1.msra.mxu0 %v910
      %1433 = vmatprep.subr.mxu0 0.0
      %1434 = vmatpush1.msra.mxu0 0.0
      %1435 = vmatprep.subr.mxu0 0.0
      %1436 = vmatpush1.msra.mxu0 0.0
      %1437 = vmatprep.subr.mxu0 0.0
      %1438 = vmatpush1.msra.mxu0 0.0
      %1439 = vmatprep.subr.mxu0 0.0
      %1440 = vmatpush1.msra.mxu0 0.0
      %1441 = vmatprep.subr.mxu0 0.0
      %1442 = vmatpush1.msra.mxu0 0.0
      %1443 = vmatprep.subr.mxu0 0.0
      %1444 = vmatpush1.msra.mxu0 0.0
      %1445 = vmatprep.subr.mxu0 0.0
      %1446 = vmatpush1.msra.mxu0 0.0
      %1447 = vmatprep.subr.mxu0 0.0
      %1448 = vmatpush1.msra.mxu0 0.0
      %1449 = vmatprep.subr.mxu0 0.0
      %1450 = vmatpush1.msra.mxu0 0.0
      %1451 = vmatprep.subr.mxu0 0.0
      %1452 = vmatpush1.msra.mxu0 0.0
      %1453 = vmatprep.subr.mxu0 0.0
      %1454 = vmatpush1.msra.mxu0 0.0
      %1455 = vmatprep.subr.mxu0 0.0
      %1456 = vmatpush1.msra.mxu0 0.0
      %1457 = vmatprep.subr.mxu0 0.0
      %1458 = vmatpush1.msra.mxu0 0.0
      %1459 = vmatprep.subr.mxu0 0.0
      %1460 = vmatpush1.msra.mxu0 0.0
      %1461 = vmatprep.subr.mxu0 0.0
      %1462 = vmatpush1.msra.mxu0 0.0
      %1463 = vmatprep.subr.mxu0 0.0
      %1464 = vmatpush1.msra.mxu0 0.0
      %1465 = vmatprep.subr.mxu0 0.0
      %1466 = vmatpush1.msra.mxu0 0.0
      %1467 = vmatprep.subr.mxu0 0.0
      %1468 = vmatpush1.msra.mxu0 0.0
      %1469 = vmatprep.subr.mxu0 0.0
      %1470 = vmatpush1.msra.mxu0 0.0
      %1471 = vmatprep.subr.mxu0 0.0
      %1472 = vmatpush1.msra.mxu0 0.0
      %1473 = vmatprep.subr.mxu0 0.0
      %1474 = vmatpush1.msra.mxu0 0.0
      %1475 = vmatprep.subr.mxu0 0.0
      %1476 = vmatpush1.msra.mxu0 0.0
      %1477 = vmatprep.subr.mxu0 0.0
      %1478 = vmatpush1.msra.mxu0 0.0
      %1479 = vmatprep.subr.mxu0 0.0
      %1480 = vmatpush1.msra.mxu0 0.0
      %1481 = vmatprep.subr.mxu0 0.0
      %1482 = vmatpush1.msra.mxu0 0.0
      %1483 = vmatprep.subr.mxu0 0.0
      %1484 = vmatpush1.msra.mxu0 0.0
      %1485 = vmatprep.subr.mxu0 0.0
      %1486 = vmatpush1.msra.mxu0 0.0
      %1487 = vmatprep.subr.mxu0 0.0
      %1488 = vmatpush1.msra.mxu0 0.0
      %1489 = vmatprep.subr.mxu0 0.0
      %1490 = vmatpush1.msra.mxu0 0.0
      %1491 = vmatprep.subr.mxu0 0.0
      %1492 = vmatpush1.msra.mxu0 0.0
      %1493 = vmatprep.subr.mxu0 0.0
      %1494 = vmatpush1.msra.mxu0 0.0
      %1495 = vmatprep.mubr.f32.mxu0 0.0
      %1496 = vmatmul.mubr.f32.gmra.mrb[0].mxu0 %v1384
      %v1497 = vpop.f32.mrb[0].mxu0
      %v1498 = vadd.f32 0.0, %v1497
      %v1499 = vpop.f32.mrb[0].mxu0
      %v1500 = vadd.f32 0.0, %v1499
      %1501 = vmatprep.mubr.f32.mxu0 0.0
      %1502 = vmatmul.mubr.f32.gmra.mrb[0].mxu0 %v1387
      %v1503 = vpop.f32.mrb[0].mxu0
      %v1504 = vadd.f32 0.0, %v1503
      %v1505 = vpop.f32.mrb[0].mxu0
      %v1506 = vadd.f32 0.0, %v1505
      %1507 = vmatprep.mubr.f32.mxu0 0.0
      %1508 = vmatmul.mubr.f32.gmra.mrb[0].mxu0 %v1390
      %v1509 = vpop.f32.mrb[0].mxu0
      %v1510 = vadd.f32 0.0, %v1509
      %v1511 = vpop.f32.mrb[0].mxu0
      %v1512 = vadd.f32 0.0, %v1511
      %1513 = vmatprep.mubr.f32.mxu0 0.0
      %1514 = vmatmul.mubr.f32.gmra.mrb[0].mxu0 %v1393
      %v1515 = vpop.f32.mrb[0].mxu0
      %v1516 = vadd.f32 0.0, %v1515
      %v1517 = vpop.f32.mrb[0].mxu0
      %v1518 = vadd.f32 0.0, %v1517
      %1519 = vmatprep.mubr.f32.mxu0 0.0
      %1520 = vmatmul.mubr.f32.gmra.mrb[0].mxu0 %v1396
      %v1521 = vpop.f32.mrb[0].mxu0
      %v1522 = vadd.f32 0.0, %v1521
      %v1523 = vpop.f32.mrb[0].mxu0
      %v1524 = vadd.f32 0.0, %v1523
      %1525 = vmatprep.mubr.f32.mxu0 0.0
      %1526 = vmatmul.mubr.f32.gmra.mrb[0].mxu0 %v1399
      %v1527 = vpop.f32.mrb[0].mxu0
      %v1528 = vadd.f32 0.0, %v1527
      %v1529 = vpop.f32.mrb[0].mxu0
      %v1530 = vadd.f32 0.0, %v1529
      %1531 = vmatprep.mubr.f32.mxu0 0.0
      %1532 = vmatmul.mubr.f32.gmra.mrb[0].mxu0 %v1402
      %v1533 = vpop.f32.mrb[0].mxu0
      %v1534 = vadd.f32 0.0, %v1533
      %v1535 = vpop.f32.mrb[0].mxu0
      %v1536 = vadd.f32 0.0, %v1535
      %1537 = vmatprep.mubr.f32.mxu0 0.0
      %1538 = vmatmul.mubr.f32.gmra.mrb[0].mxu0 %v1405
      %v1539 = vpop.f32.mrb[0].mxu0
      %v1540 = vadd.f32 0.0, %v1539
      %v1541 = vpop.f32.mrb[0].mxu0
      %v1542 = vadd.f32 0.0, %v1541
      %1543 = vmatprep.mubr.f32.mxu0 0.0
      %1544 = vmatmul.mubr.f32.gmra.mrb[0].mxu0 %v1408
      %v1545 = vpop.f32.mrb[0].mxu0
      %v1546 = vadd.f32 0.0, %v1545
      %v1547 = vpop.f32.mrb[0].mxu0
      %v1548 = vadd.f32 0.0, %v1547
      %1549 = vmatprep.mubr.f32.mxu0 0.0
      %1550 = vmatmul.mubr.f32.gmra.mrb[0].mxu0 %v1411
      %v1551 = vpop.f32.mrb[0].mxu0
      %v1552 = vadd.f32 0.0, %v1551
      %v1553 = vpop.f32.mrb[0].mxu0
      %v1554 = vadd.f32 0.0, %v1553
      %1555 = vmatprep.mubr.f32.mxu0 0.0
      %1556 = vmatmul.mubr.f32.gmra.mrb[0].mxu0 %v1414
      %v1557 = vpop.f32.mrb[0].mxu0
      %v1558 = vadd.f32 0.0, %v1557
      %v1559 = vpop.f32.mrb[0].mxu0
      %v1560 = vadd.f32 0.0, %v1559
      %1561 = vmatprep.mubr.f32.mxu0 0.0
      %1562 = vmatmul.mubr.f32.gmra.mrb[0].mxu0 %v1417
      %v1563 = vpop.f32.mrb[0].mxu0
      %v1564 = vadd.f32 0.0, %v1563
      %v1565 = vpop.f32.mrb[0].mxu0
      %v1566 = vadd.f32 0.0, %v1565
      %1567 = vmatprep.mubr.f32.mxu0 0.0
      %1568 = vmatmul.mubr.f32.gmra.mrb[0].mxu0 %v1420
      %v1569 = vpop.f32.mrb[0].mxu0
      %v1570 = vadd.f32 0.0, %v1569
      %v1571 = vpop.f32.mrb[0].mxu0
      %v1572 = vadd.f32 0.0, %v1571
      %1573 = vmatprep.mubr.f32.mxu0 0.0
      %1574 = vmatmul.mubr.f32.gmra.mrb[0].mxu0 %v1423
      %v1575 = vpop.f32.mrb[0].mxu0
      %v1576 = vadd.f32 0.0, %v1575
      %v1577 = vpop.f32.mrb[0].mxu0
      %v1578 = vadd.f32 0.0, %v1577
      %1579 = vmatprep.mubr.f32.mxu0 0.0
      %1580 = vmatmul.mubr.f32.gmra.mrb[0].mxu0 %v1426
      %v1581 = vpop.f32.mrb[0].mxu0
      %v1582 = vadd.f32 0.0, %v1581
      %v1583 = vpop.f32.mrb[0].mxu0
      %v1584 = vadd.f32 0.0, %v1583
      %1585 = vmatprep.mubr.f32.mxu0 0.0
      %1586 = vmatmul.mubr.f32.gmra.mrb[0].mxu0 %v1429
      %v1587 = vpop.f32.mrb[0].mxu0
      %v1588 = vadd.f32 0.0, %v1587
      %v1589 = vpop.f32.mrb[0].mxu0
      %v1590 = vadd.f32 0.0, %v1589
      %1591 = vdwg.mxu0
      %v1592 = vadd.f32 %v1272, %v1498
      %v1593 = vadd.f32 %v1274, %v1500
      %v1594 = vadd.f32 %v1278, %v1504
      %v1595 = vadd.f32 %v1280, %v1506
      %v1596 = vadd.f32 %v1284, %v1510
      %v1597 = vadd.f32 %v1286, %v1512
      %v1598 = vadd.f32 %v1290, %v1516
      %v1599 = vadd.f32 %v1292, %v1518
      %v1600 = vadd.f32 %v1296, %v1522
      %v1601 = vadd.f32 %v1298, %v1524
      %v1602 = vadd.f32 %v1302, %v1528
      %v1603 = vadd.f32 %v1304, %v1530
      %v1604 = vadd.f32 %v1308, %v1534
      %v1605 = vadd.f32 %v1310, %v1536
      %v1606 = vadd.f32 %v1314, %v1540
      %v1607 = vadd.f32 %v1316, %v1542
      %v1608 = vadd.f32 %v1320, %v1546
      %v1609 = vadd.f32 %v1322, %v1548
      %v1610 = vadd.f32 %v1326, %v1552
      %v1611 = vadd.f32 %v1328, %v1554
      %v1612 = vadd.f32 %v1332, %v1558
      %v1613 = vadd.f32 %v1334, %v1560
      %v1614 = vadd.f32 %v1338, %v1564
      %v1615 = vadd.f32 %v1340, %v1566
      %v1616 = vadd.f32 %v1344, %v1570
      %v1617 = vadd.f32 %v1346, %v1572
      %v1618 = vadd.f32 %v1350, %v1576
      %v1619 = vadd.f32 %v1352, %v1578
      %v1620 = vadd.f32 %v1356, %v1582
      %v1621 = vadd.f32 %v1358, %v1584
      %v1622 = vadd.f32 %v1362, %v1588
      %v1623 = vadd.f32 %v1364, %v1590
      %v1624 = vmax.f32 %v1592, %v1593
      %v1625 = vmax.f32 %v1594, %v1595
      %v1626 = vmax.f32 %v1596, %v1597
      %v1627 = vmax.f32 %v1598, %v1599
      %v1628 = vmax.f32 %v1600, %v1601
      %v1629 = vmax.f32 %v1602, %v1603
      %v1630 = vmax.f32 %v1604, %v1605
      %v1631 = vmax.f32 %v1606, %v1607
      %v1632 = vmax.f32 %v1608, %v1609
      %v1633 = vmax.f32 %v1610, %v1611
      %v1634 = vmax.f32 %v1612, %v1613
      %v1635 = vmax.f32 %v1614, %v1615
      %v1636 = vmax.f32 %v1616, %v1617
      %v1637 = vmax.f32 %v1618, %v1619
      %v1638 = vmax.f32 %v1620, %v1621
      %v1639 = vmax.f32 %v1622, %v1623
      %v1640 = vld [vmem:[%s3] sm:$0xff]
      %v1641 = vld [vmem:[%s3 + $0x8] sm:$0xff]
      %v1642 = vld [vmem:[%s3 + $0x10] sm:$0xff]
      %v1643 = vld [vmem:[%s3 + $0x18] sm:$0xff]
      %v1644 = vld [vmem:[%s3 + $0x20] sm:$0xff]
      %v1645 = vld [vmem:[%s3 + $0x28] sm:$0xff]
      %v1646 = vld [vmem:[%s3 + $0x30] sm:$0xff]
      %v1647 = vld [vmem:[%s3 + $0x38] sm:$0xff]
      %v1648 = vld [vmem:[%s3 + $0x40] sm:$0xff]
      %v1649 = vld [vmem:[%s3 + $0x48] sm:$0xff]
      %v1650 = vld [vmem:[%s3 + $0x50] sm:$0xff]
      %v1651 = vld [vmem:[%s3 + $0x58] sm:$0xff]
      %v1652 = vld [vmem:[%s3 + $0x60] sm:$0xff]
      %v1653 = vld [vmem:[%s3 + $0x68] sm:$0xff]
      %v1654 = vld [vmem:[%s3 + $0x70] sm:$0xff]
      %v1655 = vld [vmem:[%s3 + $0x78] sm:$0xff]
      %1657 = vset.pattern.permute.xlu0 0
      %1658 = vperm.xlu0 %1657, %v1640
      %v1659 = vpop.permute.xlu0 %1658
      %1662 = vset.pattern.permute.xlu0 0
      %1663 = vperm.xlu0 %1662, %v1641
      %v1664 = vpop.permute.xlu0 %1663
      %1667 = vset.pattern.permute.xlu0 0
      %1668 = vperm.xlu0 %1667, %v1642
      %v1669 = vpop.permute.xlu0 %1668
      %1672 = vset.pattern.permute.xlu0 0
      %1673 = vperm.xlu0 %1672, %v1643
      %v1674 = vpop.permute.xlu0 %1673
      %1677 = vset.pattern.permute.xlu0 0
      %1678 = vperm.xlu0 %1677, %v1644
      %v1679 = vpop.permute.xlu0 %1678
      %1682 = vset.pattern.permute.xlu0 0
      %1683 = vperm.xlu0 %1682, %v1645
      %v1684 = vpop.permute.xlu0 %1683
      %1687 = vset.pattern.permute.xlu0 0
      %1688 = vperm.xlu0 %1687, %v1646
      %v1689 = vpop.permute.xlu0 %1688
      %1692 = vset.pattern.permute.xlu0 0
      %1693 = vperm.xlu0 %1692, %v1647
      %v1694 = vpop.permute.xlu0 %1693
      %1697 = vset.pattern.permute.xlu0 0
      %1698 = vperm.xlu0 %1697, %v1648
      %v1699 = vpop.permute.xlu0 %1698
      %1702 = vset.pattern.permute.xlu0 0
      %1703 = vperm.xlu0 %1702, %v1649
      %v1704 = vpop.permute.xlu0 %1703
      %1707 = vset.pattern.permute.xlu0 0
      %1708 = vperm.xlu0 %1707, %v1650
      %v1709 = vpop.permute.xlu0 %1708
      %1712 = vset.pattern.permute.xlu0 0
      %1713 = vperm.xlu0 %1712, %v1651
      %v1714 = vpop.permute.xlu0 %1713
      %1717 = vset.pattern.permute.xlu0 0
      %1718 = vperm.xlu0 %1717, %v1652
      %v1719 = vpop.permute.xlu0 %1718
      %1722 = vset.pattern.permute.xlu0 0
      %1723 = vperm.xlu0 %1722, %v1653
      %v1724 = vpop.permute.xlu0 %1723
      %1727 = vset.pattern.permute.xlu0 0
      %1728 = vperm.xlu0 %1727, %v1654
      %v1729 = vpop.permute.xlu0 %1728
      %1732 = vset.pattern.permute.xlu0 0
      %1733 = vperm.xlu0 %1732, %v1655
      %v1734 = vpop.permute.xlu0 %1733
      %v1736 = vadd.f32 %v1624, %v1659
      %v1737 = vadd.f32 %v1625, %v1664
      %v1738 = vadd.f32 %v1626, %v1669
      %v1739 = vadd.f32 %v1627, %v1674
      %v1740 = vadd.f32 %v1628, %v1679
      %v1741 = vadd.f32 %v1629, %v1684
      %v1742 = vadd.f32 %v1630, %v1689
      %v1743 = vadd.f32 %v1631, %v1694
      %v1744 = vadd.f32 %v1632, %v1699
      %v1745 = vadd.f32 %v1633, %v1704
      %v1746 = vadd.f32 %v1634, %v1709
      %v1747 = vadd.f32 %v1635, %v1714
      %v1748 = vadd.f32 %v1636, %v1719
      %v1749 = vadd.f32 %v1637, %v1724
      %v1750 = vadd.f32 %v1638, %v1729
      %v1751 = vadd.f32 %v1639, %v1734
      %v1752 = vmax.f32 %v1736, 0.0
      %v1753 = vmax.f32 %v1737, 0.0
      %v1754 = vmax.f32 %v1738, 0.0
      %v1755 = vmax.f32 %v1739, 0.0
      %v1756 = vmax.f32 %v1740, 0.0
      %v1757 = vmax.f32 %v1741, 0.0
      %v1758 = vmax.f32 %v1742, 0.0
      %v1759 = vmax.f32 %v1743, 0.0
      %v1760 = vmax.f32 %v1744, 0.0
      %v1761 = vmax.f32 %v1745, 0.0
      %v1762 = vmax.f32 %v1746, 0.0
      %v1763 = vmax.f32 %v1747, 0.0
      %v1764 = vmax.f32 %v1748, 0.0
      %v1765 = vmax.f32 %v1749, 0.0
      %v1766 = vmax.f32 %v1750, 0.0
      %v1767 = vmax.f32 %v1751, 0.0
      %v1768 = vld [vmem:[%s4] sm:$0xff]
      %v1769 = vld [vmem:[%s4 + $0x8] sm:$0xff]
      %v1770 = vld [vmem:[%s4 + $0x10] sm:$0xff]
      %v1771 = vld [vmem:[%s4 + $0x18] sm:$0xff]
      %v1772 = vld [vmem:[%s4 + $0x20] sm:$0xff]
      %v1773 = vld [vmem:[%s4 + $0x28] sm:$0xff]
      %v1774 = vld [vmem:[%s4 + $0x30] sm:$0xff]
      %v1775 = vld [vmem:[%s4 + $0x38] sm:$0xff]
      %v1776 = vld [vmem:[%s4 + $0x40] sm:$0xff]
      %v1777 = vld [vmem:[%s4 + $0x48] sm:$0xff]
      %v1778 = vld [vmem:[%s4 + $0x50] sm:$0xff]
      %v1779 = vld [vmem:[%s4 + $0x58] sm:$0xff]
      %v1780 = vld [vmem:[%s4 + $0x60] sm:$0xff]
      %v1781 = vld [vmem:[%s4 + $0x68] sm:$0xff]
      %v1782 = vld [vmem:[%s4 + $0x70] sm:$0xff]
      %v1783 = vld [vmem:[%s4 + $0x78] sm:$0xff]
      %1785 = vset.pattern.permute.xlu0 0
      %1786 = vperm.xlu0 %1785, %v1768
      %v1787 = vpop.permute.xlu0 %1786
      %1790 = vset.pattern.permute.xlu0 0
      %1791 = vperm.xlu0 %1790, %v1769
      %v1792 = vpop.permute.xlu0 %1791
      %1795 = vset.pattern.permute.xlu0 0
      %1796 = vperm.xlu0 %1795, %v1770
      %v1797 = vpop.permute.xlu0 %1796
      %1800 = vset.pattern.permute.xlu0 0
      %1801 = vperm.xlu0 %1800, %v1771
      %v1802 = vpop.permute.xlu0 %1801
      %1805 = vset.pattern.permute.xlu0 0
      %1806 = vperm.xlu0 %1805, %v1772
      %v1807 = vpop.permute.xlu0 %1806
      %1810 = vset.pattern.permute.xlu0 0
      %1811 = vperm.xlu0 %1810, %v1773
      %v1812 = vpop.permute.xlu0 %1811
      %1815 = vset.pattern.permute.xlu0 0
      %1816 = vperm.xlu0 %1815, %v1774
      %v1817 = vpop.permute.xlu0 %1816
      %1820 = vset.pattern.permute.xlu0 0
      %1821 = vperm.xlu0 %1820, %v1775
      %v1822 = vpop.permute.xlu0 %1821
      %1825 = vset.pattern.permute.xlu0 0
      %1826 = vperm.xlu0 %1825, %v1776
      %v1827 = vpop.permute.xlu0 %1826
      %1830 = vset.pattern.permute.xlu0 0
      %1831 = vperm.xlu0 %1830, %v1777
      %v1832 = vpop.permute.xlu0 %1831
      %1835 = vset.pattern.permute.xlu0 0
      %1836 = vperm.xlu0 %1835, %v1778
      %v1837 = vpop.permute.xlu0 %1836
      %1840 = vset.pattern.permute.xlu0 0
      %1841 = vperm.xlu0 %1840, %v1779
      %v1842 = vpop.permute.xlu0 %1841
      %1845 = vset.pattern.permute.xlu0 0
      %1846 = vperm.xlu0 %1845, %v1780
      %v1847 = vpop.permute.xlu0 %1846
      %1850 = vset.pattern.permute.xlu0 0
      %1851 = vperm.xlu0 %1850, %v1781
      %v1852 = vpop.permute.xlu0 %1851
      %1855 = vset.pattern.permute.xlu0 0
      %1856 = vperm.xlu0 %1855, %v1782
      %v1857 = vpop.permute.xlu0 %1856
      %1860 = vset.pattern.permute.xlu0 0
      %1861 = vperm.xlu0 %1860, %v1783
      %v1862 = vpop.permute.xlu0 %1861
      %v1864 = vadd.f32 %v1752, %v1787
      %v1865 = vadd.f32 %v1753, %v1792
      %v1866 = vadd.f32 %v1754, %v1797
      %v1867 = vadd.f32 %v1755, %v1802
      %v1868 = vadd.f32 %v1756, %v1807
      %v1869 = vadd.f32 %v1757, %v1812
      %v1870 = vadd.f32 %v1758, %v1817
      %v1871 = vadd.f32 %v1759, %v1822
      %v1872 = vadd.f32 %v1760, %v1827
      %v1873 = vadd.f32 %v1761, %v1832
      %v1874 = vadd.f32 %v1762, %v1837
      %v1875 = vadd.f32 %v1763, %v1842
      %v1876 = vadd.f32 %v1764, %v1847
      %v1877 = vadd.f32 %v1765, %v1852
      %v1878 = vadd.f32 %v1766, %v1857
      %v1879 = vadd.f32 %v1767, %v1862
      %v1880 = vld [vmem:[%s5] sm:$0xff]
      %v1881 = vld [vmem:[%s5 + $0x8] sm:$0xff]
      %v1882 = vld [vmem:[%s5 + $0x10] sm:$0xff]
      %v1883 = vld [vmem:[%s5 + $0x18] sm:$0xff]
      %v1884 = vld [vmem:[%s5 + $0x20] sm:$0xff]
      %v1885 = vld [vmem:[%s5 + $0x28] sm:$0xff]
      %v1886 = vld [vmem:[%s5 + $0x30] sm:$0xff]
      %v1887 = vld [vmem:[%s5 + $0x38] sm:$0xff]
      %v1888 = vld [vmem:[%s5 + $0x40] sm:$0xff]
      %v1889 = vld [vmem:[%s5 + $0x48] sm:$0xff]
      %v1890 = vld [vmem:[%s5 + $0x50] sm:$0xff]
      %v1891 = vld [vmem:[%s5 + $0x58] sm:$0xff]
      %v1892 = vld [vmem:[%s5 + $0x60] sm:$0xff]
      %v1893 = vld [vmem:[%s5 + $0x68] sm:$0xff]
      %v1894 = vld [vmem:[%s5 + $0x70] sm:$0xff]
      %v1895 = vld [vmem:[%s5 + $0x78] sm:$0xff]
      %v1896 = vld [vmem:[%s5 + $0x80] sm:$0xff]
      %v1897 = vld [vmem:[%s5 + $0x88] sm:$0xff]
      %v1898 = vld [vmem:[%s5 + $0x90] sm:$0xff]
      %v1899 = vld [vmem:[%s5 + $0x98] sm:$0xff]
      %v1900 = vld [vmem:[%s5 + $0xa0] sm:$0xff]
      %v1901 = vld [vmem:[%s5 + $0xa8] sm:$0xff]
      %v1902 = vld [vmem:[%s5 + $0xb0] sm:$0xff]
      %v1903 = vld [vmem:[%s5 + $0xb8] sm:$0xff]
      %v1904 = vld [vmem:[%s5 + $0xc0] sm:$0xff]
      %v1905 = vld [vmem:[%s5 + $0xc8] sm:$0xff]
      %v1906 = vld [vmem:[%s5 + $0xd0] sm:$0xff]
      %v1907 = vld [vmem:[%s5 + $0xd8] sm:$0xff]
      %v1908 = vld [vmem:[%s5 + $0xe0] sm:$0xff]
      %v1909 = vld [vmem:[%s5 + $0xe8] sm:$0xff]
      %v1910 = vld [vmem:[%s5 + $0xf0] sm:$0xff]
      %v1911 = vld [vmem:[%s5 + $0xf8] sm:$0xff]
      %v1912 = vld [vmem:[%s5 + $0x100] sm:$0xff]
      %v1913 = vld [vmem:[%s5 + $0x108] sm:$0xff]
      %v1914 = vld [vmem:[%s5 + $0x110] sm:$0xff]
      %v1915 = vld [vmem:[%s5 + $0x118] sm:$0xff]
      %v1916 = vld [vmem:[%s5 + $0x120] sm:$0xff]
      %v1917 = vld [vmem:[%s5 + $0x128] sm:$0xff]
      %v1918 = vld [vmem:[%s5 + $0x130] sm:$0xff]
      %v1919 = vld [vmem:[%s5 + $0x138] sm:$0xff]
      %v1920 = vld [vmem:[%s5 + $0x140] sm:$0xff]
      %v1921 = vld [vmem:[%s5 + $0x148] sm:$0xff]
      %v1922 = vld [vmem:[%s5 + $0x150] sm:$0xff]
      %v1923 = vld [vmem:[%s5 + $0x158] sm:$0xff]
      %v1924 = vld [vmem:[%s5 + $0x160] sm:$0xff]
      %v1925 = vld [vmem:[%s5 + $0x168] sm:$0xff]
      %v1926 = vld [vmem:[%s5 + $0x170] sm:$0xff]
      %v1927 = vld [vmem:[%s5 + $0x178] sm:$0xff]
      %v1928 = vld [vmem:[%s5 + $0x180] sm:$0xff]
      %v1929 = vld [vmem:[%s5 + $0x188] sm:$0xff]
      %v1930 = vld [vmem:[%s5 + $0x190] sm:$0xff]
      %v1931 = vld [vmem:[%s5 + $0x198] sm:$0xff]
      %v1932 = vld [vmem:[%s5 + $0x1a0] sm:$0xff]
      %v1933 = vld [vmem:[%s5 + $0x1a8] sm:$0xff]
      %v1934 = vld [vmem:[%s5 + $0x1b0] sm:$0xff]
      %v1935 = vld [vmem:[%s5 + $0x1b8] sm:$0xff]
      %v1936 = vld [vmem:[%s5 + $0x1c0] sm:$0xff]
      %v1937 = vld [vmem:[%s5 + $0x1c8] sm:$0xff]
      %v1938 = vld [vmem:[%s5 + $0x1d0] sm:$0xff]
      %v1939 = vld [vmem:[%s5 + $0x1d8] sm:$0xff]
      %v1940 = vld [vmem:[%s5 + $0x1e0] sm:$0xff]
      %v1941 = vld [vmem:[%s5 + $0x1e8] sm:$0xff]
      %v1942 = vld [vmem:[%s5 + $0x1f0] sm:$0xff]
      %v1943 = vld [vmem:[%s5 + $0x1f8] sm:$0xff]
      %v1944 = vld [vmem:[%s5 + $0x200] sm:$0xff]
      %v1945 = vld [vmem:[%s5 + $0x208] sm:$0xff]
      %v1946 = vld [vmem:[%s5 + $0x210] sm:$0xff]
      %v1947 = vld [vmem:[%s5 + $0x218] sm:$0xff]
      %v1948 = vld [vmem:[%s5 + $0x220] sm:$0xff]
      %v1949 = vld [vmem:[%s5 + $0x228] sm:$0xff]
      %v1950 = vld [vmem:[%s5 + $0x230] sm:$0xff]
      %v1951 = vld [vmem:[%s5 + $0x238] sm:$0xff]
      %v1952 = vld [vmem:[%s5 + $0x240] sm:$0xff]
      %v1953 = vld [vmem:[%s5 + $0x248] sm:$0xff]
      %v1954 = vld [vmem:[%s5 + $0x250] sm:$0xff]
      %v1955 = vld [vmem:[%s5 + $0x258] sm:$0xff]
      %v1956 = vld [vmem:[%s5 + $0x260] sm:$0xff]
      %v1957 = vld [vmem:[%s5 + $0x268] sm:$0xff]
      %v1958 = vld [vmem:[%s5 + $0x270] sm:$0xff]
      %v1959 = vld [vmem:[%s5 + $0x278] sm:$0xff]
      %v1960 = vld [vmem:[%s5 + $0x280] sm:$0xff]
      %v1961 = vld [vmem:[%s5 + $0x288] sm:$0xff]
      %v1962 = vld [vmem:[%s5 + $0x290] sm:$0xff]
      %v1963 = vld [vmem:[%s5 + $0x298] sm:$0xff]
      %v1964 = vld [vmem:[%s5 + $0x2a0] sm:$0xff]
      %v1965 = vld [vmem:[%s5 + $0x2a8] sm:$0xff]
      %v1966 = vld [vmem:[%s5 + $0x2b0] sm:$0xff]
      %v1967 = vld [vmem:[%s5 + $0x2b8] sm:$0xff]
      %v1968 = vld [vmem:[%s5 + $0x2c0] sm:$0xff]
      %v1969 = vld [vmem:[%s5 + $0x2c8] sm:$0xff]
      %v1970 = vld [vmem:[%s5 + $0x2d0] sm:$0xff]
      %v1971 = vld [vmem:[%s5 + $0x2d8] sm:$0xff]
      %v1972 = vld [vmem:[%s5 + $0x2e0] sm:$0xff]
      %v1973 = vld [vmem:[%s5 + $0x2e8] sm:$0xff]
      %v1974 = vld [vmem:[%s5 + $0x2f0] sm:$0xff]
      %v1975 = vld [vmem:[%s5 + $0x2f8] sm:$0xff]
      %1976 = vmatprep.subr.mxu0 %v1881
      %1977 = vmatpush1.msra.mxu0 %v1880
      %1978 = vmatprep.subr.mxu0 %v1887
      %1979 = vmatpush1.msra.mxu0 %v1886
      %1980 = vmatprep.subr.mxu0 %v1893
      %1981 = vmatpush1.msra.mxu0 %v1892
      %1982 = vmatprep.subr.mxu0 %v1899
      %1983 = vmatpush1.msra.mxu0 %v1898
      %1984 = vmatprep.subr.mxu0 %v1905
      %1985 = vmatpush1.msra.mxu0 %v1904
      %1986 = vmatprep.subr.mxu0 %v1911
      %1987 = vmatpush1.msra.mxu0 %v1910
      %1988 = vmatprep.subr.mxu0 %v1917
      %1989 = vmatpush1.msra.mxu0 %v1916
      %1990 = vmatprep.subr.mxu0 %v1923
      %1991 = vmatpush1.msra.mxu0 %v1922
      %1992 = vmatprep.subr.mxu0 %v1929
      %1993 = vmatpush1.msra.mxu0 %v1928
      %1994 = vmatprep.subr.mxu0 %v1935
      %1995 = vmatpush1.msra.mxu0 %v1934
      %1996 = vmatprep.subr.mxu0 %v1941
      %1997 = vmatpush1.msra.mxu0 %v1940
      %1998 = vmatprep.subr.mxu0 %v1947
      %1999 = vmatpush1.msra.mxu0 %v1946
      %2000 = vmatprep.subr.mxu0 %v1953
      %2001 = vmatpush1.msra.mxu0 %v1952
      %2002 = vmatprep.subr.mxu0 %v1959
      %2003 = vmatpush1.msra.mxu0 %v1958
      %2004 = vmatprep.subr.mxu0 %v1965
      %2005 = vmatpush1.msra.mxu0 %v1964
      %2006 = vmatprep.subr.mxu0 %v1971
      %2007 = vmatpush1.msra.mxu0 %v1970
      %2008 = vmatprep.subr.mxu0 0.0
      %2009 = vmatpush1.msra.mxu0 0.0
      %2010 = vmatprep.subr.mxu0 0.0
      %2011 = vmatpush1.msra.mxu0 0.0
      %2012 = vmatprep.subr.mxu0 0.0
      %2013 = vmatpush1.msra.mxu0 0.0
      %2014 = vmatprep.subr.mxu0 0.0
      %2015 = vmatpush1.msra.mxu0 0.0
      %2016 = vmatprep.subr.mxu0 0.0
      %2017 = vmatpush1.msra.mxu0 0.0
      %2018 = vmatprep.subr.mxu0 0.0
      %2019 = vmatpush1.msra.mxu0 0.0
      %2020 = vmatprep.subr.mxu0 0.0
      %2021 = vmatpush1.msra.mxu0 0.0
      %2022 = vmatprep.subr.mxu0 0.0
      %2023 = vmatpush1.msra.mxu0 0.0
      %2024 = vmatprep.subr.mxu0 0.0
      %2025 = vmatpush1.msra.mxu0 0.0
      %2026 = vmatprep.subr.mxu0 0.0
      %2027 = vmatpush1.msra.mxu0 0.0
      %2028 = vmatprep.subr.mxu0 0.0
      %2029 = vmatpush1.msra.mxu0 0.0
      %2030 = vmatprep.subr.mxu0 0.0
      %2031 = vmatpush1.msra.mxu0 0.0
      %2032 = vmatprep.subr.mxu0 0.0
      %2033 = vmatpush1.msra.mxu0 0.0
      %2034 = vmatprep.subr.mxu0 0.0
      %2035 = vmatpush1.msra.mxu0 0.0
      %2036 = vmatprep.subr.mxu0 0.0
      %2037 = vmatpush1.msra.mxu0 0.0
      %2038 = vmatprep.subr.mxu0 0.0
      %2039 = vmatpush1.msra.mxu0 0.0
      %2040 = vmatprep.mubr.f32.mxu0 0.0
      %2041 = vmatmul.mubr.f32.gmra.mrb[0].mxu0 %v1864
      %v2042 = vpop.f32.mrb[0].mxu0
      %v2043 = vadd.f32 0.0, %v2042
      %v2044 = vpop.f32.mrb[0].mxu0
      %v2045 = vadd.f32 0.0, %v2044
      %2046 = vmatprep.mubr.f32.mxu0 0.0
      %2047 = vmatmul.mubr.f32.gmra.mrb[0].mxu0 %v1865
      %v2048 = vpop.f32.mrb[0].mxu0
      %v2049 = vadd.f32 0.0, %v2048
      %v2050 = vpop.f32.mrb[0].mxu0
      %v2051 = vadd.f32 0.0, %v2050
      %2052 = vmatprep.mubr.f32.mxu0 0.0
      %2053 = vmatmul.mubr.f32.gmra.mrb[0].mxu0 %v1866
      %v2054 = vpop.f32.mrb[0].mxu0
      %v2055 = vadd.f32 0.0, %v2054
      %v2056 = vpop.f32.mrb[0].mxu0
      %v2057 = vadd.f32 0.0, %v2056
      %2058 = vmatprep.mubr.f32.mxu0 0.0
      %2059 = vmatmul.mubr.f32.gmra.mrb[0].mxu0 %v1867
      %v2060 = vpop.f32.mrb[0].mxu0
      %v2061 = vadd.f32 0.0, %v2060
      %v2062 = vpop.f32.mrb[0].mxu0
      %v2063 = vadd.f32 0.0, %v2062
      %2064 = vmatprep.mubr.f32.mxu0 0.0
      %2065 = vmatmul.mubr.f32.gmra.mrb[0].mxu0 %v1868
      %v2066 = vpop.f32.mrb[0].mxu0
      %v2067 = vadd.f32 0.0, %v2066
      %v2068 = vpop.f32.mrb[0].mxu0
      %v2069 = vadd.f32 0.0, %v2068
      %2070 = vmatprep.mubr.f32.mxu0 0.0
      %2071 = vmatmul.mubr.f32.gmra.mrb[0].mxu0 %v1869
      %v2072 = vpop.f32.mrb[0].mxu0
      %v2073 = vadd.f32 0.0, %v2072
      %v2074 = vpop.f32.mrb[0].mxu0
      %v2075 = vadd.f32 0.0, %v2074
      %2076 = vmatprep.mubr.f32.mxu0 0.0
      %2077 = vmatmul.mubr.f32.gmra.mrb[0].mxu0 %v1870
      %v2078 = vpop.f32.mrb[0].mxu0
      %v2079 = vadd.f32 0.0, %v2078
      %v2080 = vpop.f32.mrb[0].mxu0
      %v2081 = vadd.f32 0.0, %v2080
      %2082 = vmatprep.mubr.f32.mxu0 0.0
      %2083 = vmatmul.mubr.f32.gmra.mrb[0].mxu0 %v1871
      %v2084 = vpop.f32.mrb[0].mxu0
      %v2085 = vadd.f32 0.0, %v2084
      %v2086 = vpop.f32.mrb[0].mxu0
      %v2087 = vadd.f32 0.0, %v2086
      %2088 = vmatprep.mubr.f32.mxu0 0.0
      %2089 = vmatmul.mubr.f32.gmra.mrb[0].mxu0 %v1872
      %v2090 = vpop.f32.mrb[0].mxu0
      %v2091 = vadd.f32 0.0, %v2090
      %v2092 = vpop.f32.mrb[0].mxu0
      %v2093 = vadd.f32 0.0, %v2092
      %2094 = vmatprep.mubr.f32.mxu0 0.0
      %2095 = vmatmul.mubr.f32.gmra.mrb[0].mxu0 %v1873
      %v2096 = vpop.f32.mrb[0].mxu0
      %v2097 = vadd.f32 0.0, %v2096
      %v2098 = vpop.f32.mrb[0].mxu0
      %v2099 = vadd.f32 0.0, %v2098
      %2100 = vmatprep.mubr.f32.mxu0 0.0
      %2101 = vmatmul.mubr.f32.gmra.mrb[0].mxu0 %v1874
      %v2102 = vpop.f32.mrb[0].mxu0
      %v2103 = vadd.f32 0.0, %v2102
      %v2104 = vpop.f32.mrb[0].mxu0
      %v2105 = vadd.f32 0.0, %v2104
      %2106 = vmatprep.mubr.f32.mxu0 0.0
      %2107 = vmatmul.mubr.f32.gmra.mrb[0].mxu0 %v1875
      %v2108 = vpop.f32.mrb[0].mxu0
      %v2109 = vadd.f32 0.0, %v2108
      %v2110 = vpop.f32.mrb[0].mxu0
      %v2111 = vadd.f32 0.0, %v2110
      %2112 = vmatprep.mubr.f32.mxu0 0.0
      %2113 = vmatmul.mubr.f32.gmra.mrb[0].mxu0 %v1876
      %v2114 = vpop.f32.mrb[0].mxu0
      %v2115 = vadd.f32 0.0, %v2114
      %v2116 = vpop.f32.mrb[0].mxu0
      %v2117 = vadd.f32 0.0, %v2116
      %2118 = vmatprep.mubr.f32.mxu0 0.0
      %2119 = vmatmul.mubr.f32.gmra.mrb[0].mxu0 %v1877
      %v2120 = vpop.f32.mrb[0].mxu0
      %v2121 = vadd.f32 0.0, %v2120
      %v2122 = vpop.f32.mrb[0].mxu0
      %v2123 = vadd.f32 0.0, %v2122
      %2124 = vmatprep.mubr.f32.mxu0 0.0
      %2125 = vmatmul.mubr.f32.gmra.mrb[0].mxu0 %v1878
      %v2126 = vpop.f32.mrb[0].mxu0
      %v2127 = vadd.f32 0.0, %v2126
      %v2128 = vpop.f32.mrb[0].mxu0
      %v2129 = vadd.f32 0.0, %v2128
      %2130 = vmatprep.mubr.f32.mxu0 0.0
      %2131 = vmatmul.mubr.f32.gmra.mrb[0].mxu0 %v1879
      %v2132 = vpop.f32.mrb[0].mxu0
      %v2133 = vadd.f32 0.0, %v2132
      %v2134 = vpop.f32.mrb[0].mxu0
      %v2135 = vadd.f32 0.0, %v2134
      %2136 = vdwg.mxu0
      %2137 = vmatprep.subr.mxu0 %v1883
      %2138 = vmatpush1.msra.mxu0 %v1882
      %2139 = vmatprep.subr.mxu0 %v1889
      %2140 = vmatpush1.msra.mxu0 %v1888
      %2141 = vmatprep.subr.mxu0 %v1895
      %2142 = vmatpush1.msra.mxu0 %v1894
      %2143 = vmatprep.subr.mxu0 %v1901
      %2144 = vmatpush1.msra.mxu0 %v1900
      %2145 = vmatprep.subr.mxu0 %v1907
      %2146 = vmatpush1.msra.mxu0 %v1906
      %2147 = vmatprep.subr.mxu0 %v1913
      %2148 = vmatpush1.msra.mxu0 %v1912
      %2149 = vmatprep.subr.mxu0 %v1919
      %2150 = vmatpush1.msra.mxu0 %v1918
      %2151 = vmatprep.subr.mxu0 %v1925
      %2152 = vmatpush1.msra.mxu0 %v1924
      %2153 = vmatprep.subr.mxu0 %v1931
      %2154 = vmatpush1.msra.mxu0 %v1930
      %2155 = vmatprep.subr.mxu0 %v1937
      %2156 = vmatpush1.msra.mxu0 %v1936
      %2157 = vmatprep.subr.mxu0 %v1943
      %2158 = vmatpush1.msra.mxu0 %v1942
      %2159 = vmatprep.subr.mxu0 %v1949
      %2160 = vmatpush1.msra.mxu0 %v1948
      %2161 = vmatprep.subr.mxu0 %v1955
      %2162 = vmatpush1.msra.mxu0 %v1954
      %2163 = vmatprep.subr.mxu0 %v1961
      %2164 = vmatpush1.msra.mxu0 %v1960
      %2165 = vmatprep.subr.mxu0 %v1967
      %2166 = vmatpush1.msra.mxu0 %v1966
      %2167 = vmatprep.subr.mxu0 %v1973
      %2168 = vmatpush1.msra.mxu0 %v1972
      %2169 = vmatprep.subr.mxu0 0.0
      %2170 = vmatpush1.msra.mxu0 0.0
      %2171 = vmatprep.subr.mxu0 0.0
      %2172 = vmatpush1.msra.mxu0 0.0
      %2173 = vmatprep.subr.mxu0 0.0
      %2174 = vmatpush1.msra.mxu0 0.0
      %2175 = vmatprep.subr.mxu0 0.0
      %2176 = vmatpush1.msra.mxu0 0.0
      %2177 = vmatprep.subr.mxu0 0.0
      %2178 = vmatpush1.msra.mxu0 0.0
      %2179 = vmatprep.subr.mxu0 0.0
      %2180 = vmatpush1.msra.mxu0 0.0
      %2181 = vmatprep.subr.mxu0 0.0
      %2182 = vmatpush1.msra.mxu0 0.0
      %2183 = vmatprep.subr.mxu0 0.0
      %2184 = vmatpush1.msra.mxu0 0.0
      %2185 = vmatprep.subr.mxu0 0.0
      %2186 = vmatpush1.msra.mxu0 0.0
      %2187 = vmatprep.subr.mxu0 0.0
      %2188 = vmatpush1.msra.mxu0 0.0
      %2189 = vmatprep.subr.mxu0 0.0
      %2190 = vmatpush1.msra.mxu0 0.0
      %2191 = vmatprep.subr.mxu0 0.0
      %2192 = vmatpush1.msra.mxu0 0.0
      %2193 = vmatprep.subr.mxu0 0.0
      %2194 = vmatpush1.msra.mxu0 0.0
      %2195 = vmatprep.subr.mxu0 0.0
      %2196 = vmatpush1.msra.mxu0 0.0
      %2197 = vmatprep.subr.mxu0 0.0
      %2198 = vmatpush1.msra.mxu0 0.0
      %2199 = vmatprep.subr.mxu0 0.0
      %2200 = vmatpush1.msra.mxu0 0.0
      %2201 = vmatprep.mubr.f32.mxu0 0.0
      %2202 = vmatmul.mubr.f32.gmra.mrb[0].mxu0 %v1864
      %v2203 = vpop.f32.mrb[0].mxu0
      %v2204 = vadd.f32 0.0, %v2203
      %v2205 = vpop.f32.mrb[0].mxu0
      %v2206 = vadd.f32 0.0, %v2205
      %2207 = vmatprep.mubr.f32.mxu0 0.0
      %2208 = vmatmul.mubr.f32.gmra.mrb[0].mxu0 %v1865
      %v2209 = vpop.f32.mrb[0].mxu0
      %v2210 = vadd.f32 0.0, %v2209
      %v2211 = vpop.f32.mrb[0].mxu0
      %v2212 = vadd.f32 0.0, %v2211
      %2213 = vmatprep.mubr.f32.mxu0 0.0
      %2214 = vmatmul.mubr.f32.gmra.mrb[0].mxu0 %v1866
      %v2215 = vpop.f32.mrb[0].mxu0
      %v2216 = vadd.f32 0.0, %v2215
      %v2217 = vpop.f32.mrb[0].mxu0
      %v2218 = vadd.f32 0.0, %v2217
      %2219 = vmatprep.mubr.f32.mxu0 0.0
      %2220 = vmatmul.mubr.f32.gmra.mrb[0].mxu0 %v1867
      %v2221 = vpop.f32.mrb[0].mxu0
      %v2222 = vadd.f32 0.0, %v2221
      %v2223 = vpop.f32.mrb[0].mxu0
      %v2224 = vadd.f32 0.0, %v2223
      %2225 = vmatprep.mubr.f32.mxu0 0.0
      %2226 = vmatmul.mubr.f32.gmra.mrb[0].mxu0 %v1868
      %v2227 = vpop.f32.mrb[0].mxu0
      %v2228 = vadd.f32 0.0, %v2227
      %v2229 = vpop.f32.mrb[0].mxu0
      %v2230 = vadd.f32 0.0, %v2229
      %2231 = vmatprep.mubr.f32.mxu0 0.0
      %2232 = vmatmul.mubr.f32.gmra.mrb[0].mxu0 %v1869
      %v2233 = vpop.f32.mrb[0].mxu0
      %v2234 = vadd.f32 0.0, %v2233
      %v2235 = vpop.f32.mrb[0].mxu0
      %v2236 = vadd.f32 0.0, %v2235
      %2237 = vmatprep.mubr.f32.mxu0 0.0
      %2238 = vmatmul.mubr.f32.gmra.mrb[0].mxu0 %v1870
      %v2239 = vpop.f32.mrb[0].mxu0
      %v2240 = vadd.f32 0.0, %v2239
      %v2241 = vpop.f32.mrb[0].mxu0
      %v2242 = vadd.f32 0.0, %v2241
      %2243 = vmatprep.mubr.f32.mxu0 0.0
      %2244 = vmatmul.mubr.f32.gmra.mrb[0].mxu0 %v1871
      %v2245 = vpop.f32.mrb[0].mxu0
      %v2246 = vadd.f32 0.0, %v2245
      %v2247 = vpop.f32.mrb[0].mxu0
      %v2248 = vadd.f32 0.0, %v2247
      %2249 = vmatprep.mubr.f32.mxu0 0.0
      %2250 = vmatmul.mubr.f32.gmra.mrb[0].mxu0 %v1872
      %v2251 = vpop.f32.mrb[0].mxu0
      %v2252 = vadd.f32 0.0, %v2251
      %v2253 = vpop.f32.mrb[0].mxu0
      %v2254 = vadd.f32 0.0, %v2253
      %2255 = vmatprep.mubr.f32.mxu0 0.0
      %2256 = vmatmul.mubr.f32.gmra.mrb[0].mxu0 %v1873
      %v2257 = vpop.f32.mrb[0].mxu0
      %v2258 = vadd.f32 0.0, %v2257
      %v2259 = vpop.f32.mrb[0].mxu0
      %v2260 = vadd.f32 0.0, %v2259
      %2261 = vmatprep.mubr.f32.mxu0 0.0
      %2262 = vmatmul.mubr.f32.gmra.mrb[0].mxu0 %v1874
      %v2263 = vpop.f32.mrb[0].mxu0
      %v2264 = vadd.f32 0.0, %v2263
      %v2265 = vpop.f32.mrb[0].mxu0
      %v2266 = vadd.f32 0.0, %v2265
      %2267 = vmatprep.mubr.f32.mxu0 0.0
      %2268 = vmatmul.mubr.f32.gmra.mrb[0].mxu0 %v1875
      %v2269 = vpop.f32.mrb[0].mxu0
      %v2270 = vadd.f32 0.0, %v2269
      %v2271 = vpop.f32.mrb[0].mxu0
      %v2272 = vadd.f32 0.0, %v2271
      %2273 = vmatprep.mubr.f32.mxu0 0.0
      %2274 = vmatmul.mubr.f32.gmra.mrb[0].mxu0 %v1876
      %v2275 = vpop.f32.mrb[0].mxu0
      %v2276 = vadd.f32 0.0, %v2275
      %v2277 = vpop.f32.mrb[0].mxu0
      %v2278 = vadd.f32 0.0, %v2277
      %2279 = vmatprep.mubr.f32.mxu0 0.0
      %2280 = vmatmul.mubr.f32.gmra.mrb[0].mxu0 %v1877
      %v2281 = vpop.f32.mrb[0].mxu0
      %v2282 = vadd.f32 0.0, %v2281
      %v2283 = vpop.f32.mrb[0].mxu0
      %v2284 = vadd.f32 0.0, %v2283
      %2285 = vmatprep.mubr.f32.mxu0 0.0
      %2286 = vmatmul.mubr.f32.gmra.mrb[0].mxu0 %v1878
      %v2287 = vpop.f32.mrb[0].mxu0
      %v2288 = vadd.f32 0.0, %v2287
      %v2289 = vpop.f32.mrb[0].mxu0
      %v2290 = vadd.f32 0.0, %v2289
      %2291 = vmatprep.mubr.f32.mxu0 0.0
      %2292 = vmatmul.mubr.f32.gmra.mrb[0].mxu0 %v1879
      %v2293 = vpop.f32.mrb[0].mxu0
      %v2294 = vadd.f32 0.0, %v2293
      %v2295 = vpop.f32.mrb[0].mxu0
      %v2296 = vadd.f32 0.0, %v2295
      %2297 = vdwg.mxu0
      %2298 = vmatprep.subr.mxu0 %v1885
      %2299 = vmatpush1.msra.mxu0 %v1884
      %2300 = vmatprep.subr.mxu0 %v1891
      %2301 = vmatpush1.msra.mxu0 %v1890
      %2302 = vmatprep.subr.mxu0 %v1897
      %2303 = vmatpush1.msra.mxu0 %v1896
      %2304 = vmatprep.subr.mxu0 %v1903
      %2305 = vmatpush1.msra.mxu0 %v1902
      %2306 = vmatprep.subr.mxu0 %v1909
      %2307 = vmatpush1.msra.mxu0 %v1908
      %2308 = vmatprep.subr.mxu0 %v1915
      %2309 = vmatpush1.msra.mxu0 %v1914
      %2310 = vmatprep.subr.mxu0 %v1921
      %2311 = vmatpush1.msra.mxu0 %v1920
      %2312 = vmatprep.subr.mxu0 %v1927
      %2313 = vmatpush1.msra.mxu0 %v1926
      %2314 = vmatprep.subr.mxu0 %v1933
      %2315 = vmatpush1.msra.mxu0 %v1932
      %2316 = vmatprep.subr.mxu0 %v1939
      %2317 = vmatpush1.msra.mxu0 %v1938
      %2318 = vmatprep.subr.mxu0 %v1945
      %2319 = vmatpush1.msra.mxu0 %v1944
      %2320 = vmatprep.subr.mxu0 %v1951
      %2321 = vmatpush1.msra.mxu0 %v1950
      %2322 = vmatprep.subr.mxu0 %v1957
      %2323 = vmatpush1.msra.mxu0 %v1956
      %2324 = vmatprep.subr.mxu0 %v1963
      %2325 = vmatpush1.msra.mxu0 %v1962
      %2326 = vmatprep.subr.mxu0 %v1969
      %2327 = vmatpush1.msra.mxu0 %v1968
      %2328 = vmatprep.subr.mxu0 %v1975
      %2329 = vmatpush1.msra.mxu0 %v1974
      %2330 = vmatprep.subr.mxu0 0.0
      %2331 = vmatpush1.msra.mxu0 0.0
      %2332 = vmatprep.subr.mxu0 0.0
      %2333 = vmatpush1.msra.mxu0 0.0
      %2334 = vmatprep.subr.mxu0 0.0
      %2335 = vmatpush1.msra.mxu0 0.0
      %2336 = vmatprep.subr.mxu0 0.0
      %2337 = vmatpush1.msra.mxu0 0.0
      %2338 = vmatprep.subr.mxu0 0.0
      %2339 = vmatpush1.msra.mxu0 0.0
      %2340 = vmatprep.subr.mxu0 0.0
      %2341 = vmatpush1.msra.mxu0 0.0
      %2342 = vmatprep.subr.mxu0 0.0
      %2343 = vmatpush1.msra.mxu0 0.0
      %2344 = vmatprep.subr.mxu0 0.0
      %2345 = vmatpush1.msra.mxu0 0.0
      %2346 = vmatprep.subr.mxu0 0.0
      %2347 = vmatpush1.msra.mxu0 0.0
      %2348 = vmatprep.subr.mxu0 0.0
      %2349 = vmatpush1.msra.mxu0 0.0
      %2350 = vmatprep.subr.mxu0 0.0
      %2351 = vmatpush1.msra.mxu0 0.0
      %2352 = vmatprep.subr.mxu0 0.0
      %2353 = vmatpush1.msra.mxu0 0.0
      %2354 = vmatprep.subr.mxu0 0.0
      %2355 = vmatpush1.msra.mxu0 0.0
      %2356 = vmatprep.subr.mxu0 0.0
      %2357 = vmatpush1.msra.mxu0 0.0
      %2358 = vmatprep.subr.mxu0 0.0
      %2359 = vmatpush1.msra.mxu0 0.0
      %2360 = vmatprep.subr.mxu0 0.0
      %2361 = vmatpush1.msra.mxu0 0.0
      %2362 = vmatprep.mubr.f32.mxu0 0.0
      %2363 = vmatmul.mubr.f32.gmra.mrb[0].mxu0 %v1864
      %v2364 = vpop.f32.mrb[0].mxu0
      %v2365 = vadd.f32 0.0, %v2364
      %v2366 = vpop.f32.mrb[0].mxu0
      %v2367 = vadd.f32 0.0, %v2366
      %2368 = vmatprep.mubr.f32.mxu0 0.0
      %2369 = vmatmul.mubr.f32.gmra.mrb[0].mxu0 %v1865
      %v2370 = vpop.f32.mrb[0].mxu0
      %v2371 = vadd.f32 0.0, %v2370
      %v2372 = vpop.f32.mrb[0].mxu0
      %v2373 = vadd.f32 0.0, %v2372
      %2374 = vmatprep.mubr.f32.mxu0 0.0
      %2375 = vmatmul.mubr.f32.gmra.mrb[0].mxu0 %v1866
      %v2376 = vpop.f32.mrb[0].mxu0
      %v2377 = vadd.f32 0.0, %v2376
      %v2378 = vpop.f32.mrb[0].mxu0
      %v2379 = vadd.f32 0.0, %v2378
      %2380 = vmatprep.mubr.f32.mxu0 0.0
      %2381 = vmatmul.mubr.f32.gmra.mrb[0].mxu0 %v1867
      %v2382 = vpop.f32.mrb[0].mxu0
      %v2383 = vadd.f32 0.0, %v2382
      %v2384 = vpop.f32.mrb[0].mxu0
      %v2385 = vadd.f32 0.0, %v2384
      %2386 = vmatprep.mubr.f32.mxu0 0.0
      %2387 = vmatmul.mubr.f32.gmra.mrb[0].mxu0 %v1868
      %v2388 = vpop.f32.mrb[0].mxu0
      %v2389 = vadd.f32 0.0, %v2388
      %v2390 = vpop.f32.mrb[0].mxu0
      %v2391 = vadd.f32 0.0, %v2390
      %2392 = vmatprep.mubr.f32.mxu0 0.0
      %2393 = vmatmul.mubr.f32.gmra.mrb[0].mxu0 %v1869
      %v2394 = vpop.f32.mrb[0].mxu0
      %v2395 = vadd.f32 0.0, %v2394
      %v2396 = vpop.f32.mrb[0].mxu0
      %v2397 = vadd.f32 0.0, %v2396
      %2398 = vmatprep.mubr.f32.mxu0 0.0
      %2399 = vmatmul.mubr.f32.gmra.mrb[0].mxu0 %v1870
      %v2400 = vpop.f32.mrb[0].mxu0
      %v2401 = vadd.f32 0.0, %v2400
      %v2402 = vpop.f32.mrb[0].mxu0
      %v2403 = vadd.f32 0.0, %v2402
      %2404 = vmatprep.mubr.f32.mxu0 0.0
      %2405 = vmatmul.mubr.f32.gmra.mrb[0].mxu0 %v1871
      %v2406 = vpop.f32.mrb[0].mxu0
      %v2407 = vadd.f32 0.0, %v2406
      %v2408 = vpop.f32.mrb[0].mxu0
      %v2409 = vadd.f32 0.0, %v2408
      %2410 = vmatprep.mubr.f32.mxu0 0.0
      %2411 = vmatmul.mubr.f32.gmra.mrb[0].mxu0 %v1872
      %v2412 = vpop.f32.mrb[0].mxu0
      %v2413 = vadd.f32 0.0, %v2412
      %v2414 = vpop.f32.mrb[0].mxu0
      %v2415 = vadd.f32 0.0, %v2414
      %2416 = vmatprep.mubr.f32.mxu0 0.0
      %2417 = vmatmul.mubr.f32.gmra.mrb[0].mxu0 %v1873
      %v2418 = vpop.f32.mrb[0].mxu0
      %v2419 = vadd.f32 0.0, %v2418
      %v2420 = vpop.f32.mrb[0].mxu0
      %v2421 = vadd.f32 0.0, %v2420
      %2422 = vmatprep.mubr.f32.mxu0 0.0
      %2423 = vmatmul.mubr.f32.gmra.mrb[0].mxu0 %v1874
      %v2424 = vpop.f32.mrb[0].mxu0
      %v2425 = vadd.f32 0.0, %v2424
      %v2426 = vpop.f32.mrb[0].mxu0
      %v2427 = vadd.f32 0.0, %v2426
      %2428 = vmatprep.mubr.f32.mxu0 0.0
      %2429 = vmatmul.mubr.f32.gmra.mrb[0].mxu0 %v1875
      %v2430 = vpop.f32.mrb[0].mxu0
      %v2431 = vadd.f32 0.0, %v2430
      %v2432 = vpop.f32.mrb[0].mxu0
      %v2433 = vadd.f32 0.0, %v2432
      %2434 = vmatprep.mubr.f32.mxu0 0.0
      %2435 = vmatmul.mubr.f32.gmra.mrb[0].mxu0 %v1876
      %v2436 = vpop.f32.mrb[0].mxu0
      %v2437 = vadd.f32 0.0, %v2436
      %v2438 = vpop.f32.mrb[0].mxu0
      %v2439 = vadd.f32 0.0, %v2438
      %2440 = vmatprep.mubr.f32.mxu0 0.0
      %2441 = vmatmul.mubr.f32.gmra.mrb[0].mxu0 %v1877
      %v2442 = vpop.f32.mrb[0].mxu0
      %v2443 = vadd.f32 0.0, %v2442
      %v2444 = vpop.f32.mrb[0].mxu0
      %v2445 = vadd.f32 0.0, %v2444
      %2446 = vmatprep.mubr.f32.mxu0 0.0
      %2447 = vmatmul.mubr.f32.gmra.mrb[0].mxu0 %v1878
      %v2448 = vpop.f32.mrb[0].mxu0
      %v2449 = vadd.f32 0.0, %v2448
      %v2450 = vpop.f32.mrb[0].mxu0
      %v2451 = vadd.f32 0.0, %v2450
      %2452 = vmatprep.mubr.f32.mxu0 0.0
      %2453 = vmatmul.mubr.f32.gmra.mrb[0].mxu0 %v1879
      %v2454 = vpop.f32.mrb[0].mxu0
      %v2455 = vadd.f32 0.0, %v2454
      %v2456 = vpop.f32.mrb[0].mxu0
      %v2457 = vadd.f32 0.0, %v2456
      %2458 = vdwg.mxu0
      %v2459 = vld [vmem:[%s6] sm:$0xff]
      %v2460 = vld [vmem:[%s6 + $0x8] sm:$0xff]
      %v2461 = vld [vmem:[%s6 + $0x10] sm:$0xff]
      %v2462 = vld [vmem:[%s6 + $0x18] sm:$0xff]
      %v2463 = vld [vmem:[%s6 + $0x20] sm:$0xff]
      %v2464 = vld [vmem:[%s6 + $0x28] sm:$0xff]
      %v2465 = vld [vmem:[%s6 + $0x30] sm:$0xff]
      %v2466 = vld [vmem:[%s6 + $0x38] sm:$0xff]
      %v2467 = vld [vmem:[%s6 + $0x40] sm:$0xff]
      %v2468 = vld [vmem:[%s6 + $0x48] sm:$0xff]
      %v2469 = vld [vmem:[%s6 + $0x50] sm:$0xff]
      %v2470 = vld [vmem:[%s6 + $0x58] sm:$0xff]
      %v2471 = vld [vmem:[%s6 + $0x60] sm:$0xff]
      %v2472 = vld [vmem:[%s6 + $0x68] sm:$0xff]
      %v2473 = vld [vmem:[%s6 + $0x70] sm:$0xff]
      %v2474 = vld [vmem:[%s6 + $0x78] sm:$0xff]
      %v2475 = vld [vmem:[%s6 + $0x80] sm:$0xff]
      %v2476 = vld [vmem:[%s6 + $0x88] sm:$0xff]
      %v2477 = vld [vmem:[%s6 + $0x90] sm:$0xff]
      %v2478 = vld [vmem:[%s6 + $0x98] sm:$0xff]
      %v2479 = vld [vmem:[%s6 + $0xa0] sm:$0xff]
      %v2480 = vld [vmem:[%s6 + $0xa8] sm:$0xff]
      %v2481 = vld [vmem:[%s6 + $0xb0] sm:$0xff]
      %v2482 = vld [vmem:[%s6 + $0xb8] sm:$0xff]
      %v2483 = vld [vmem:[%s6 + $0xc0] sm:$0xff]
      %v2484 = vld [vmem:[%s6 + $0xc8] sm:$0xff]
      %v2485 = vld [vmem:[%s6 + $0xd0] sm:$0xff]
      %v2486 = vld [vmem:[%s6 + $0xd8] sm:$0xff]
      %v2487 = vld [vmem:[%s6 + $0xe0] sm:$0xff]
      %v2488 = vld [vmem:[%s6 + $0xe8] sm:$0xff]
      %v2489 = vld [vmem:[%s6 + $0xf0] sm:$0xff]
      %v2490 = vld [vmem:[%s6 + $0xf8] sm:$0xff]
      %s2491 = scalar_lea.vmem %s6, 256
      %v2492 = vld [vmem:[%s2491] sm:$0xff]
      %v2493 = vld [vmem:[%s2491 + $0x8] sm:$0xff]
      %v2494 = vld [vmem:[%s2491 + $0x10] sm:$0xff]
      %v2495 = vld [vmem:[%s2491 + $0x18] sm:$0xff]
      %v2496 = vld [vmem:[%s2491 + $0x20] sm:$0xff]
      %v2497 = vld [vmem:[%s2491 + $0x28] sm:$0xff]
      %v2498 = vld [vmem:[%s2491 + $0x30] sm:$0xff]
      %v2499 = vld [vmem:[%s2491 + $0x38] sm:$0xff]
      %v2500 = vld [vmem:[%s2491 + $0x40] sm:$0xff]
      %v2501 = vld [vmem:[%s2491 + $0x48] sm:$0xff]
      %v2502 = vld [vmem:[%s2491 + $0x50] sm:$0xff]
      %v2503 = vld [vmem:[%s2491 + $0x58] sm:$0xff]
      %v2504 = vld [vmem:[%s2491 + $0x60] sm:$0xff]
      %v2505 = vld [vmem:[%s2491 + $0x68] sm:$0xff]
      %v2506 = vld [vmem:[%s2491 + $0x70] sm:$0xff]
      %v2507 = vld [vmem:[%s2491 + $0x78] sm:$0xff]
      %v2508 = vld [vmem:[%s2491 + $0x80] sm:$0xff]
      %v2509 = vld [vmem:[%s2491 + $0x88] sm:$0xff]
      %v2510 = vld [vmem:[%s2491 + $0x90] sm:$0xff]
      %v2511 = vld [vmem:[%s2491 + $0x98] sm:$0xff]
      %v2512 = vld [vmem:[%s2491 + $0xa0] sm:$0xff]
      %v2513 = vld [vmem:[%s2491 + $0xa8] sm:$0xff]
      %v2514 = vld [vmem:[%s2491 + $0xb0] sm:$0xff]
      %v2515 = vld [vmem:[%s2491 + $0xb8] sm:$0xff]
      %v2516 = vld [vmem:[%s2491 + $0xc0] sm:$0xff]
      %v2517 = vld [vmem:[%s2491 + $0xc8] sm:$0xff]
      %v2518 = vld [vmem:[%s2491 + $0xd0] sm:$0xff]
      %v2519 = vld [vmem:[%s2491 + $0xd8] sm:$0xff]
      %v2520 = vld [vmem:[%s2491 + $0xe0] sm:$0xff]
      %v2521 = vld [vmem:[%s2491 + $0xe8] sm:$0xff]
      %v2522 = vld [vmem:[%s2491 + $0xf0] sm:$0xff]
      %v2523 = vld [vmem:[%s2491 + $0xf8] sm:$0xff]
      %2524 = vmatprep.subr.mxu0 %v2206
      %2525 = vmatpush1.msra.mxu0 %v2204
      %2526 = vmatprep.subr.mxu0 %v2212
      %2527 = vmatpush1.msra.mxu0 %v2210
      %2528 = vmatprep.subr.mxu0 %v2218
      %2529 = vmatpush1.msra.mxu0 %v2216
      %2530 = vmatprep.subr.mxu0 %v2224
      %2531 = vmatpush1.msra.mxu0 %v2222
      %2532 = vmatprep.subr.mxu0 %v2230
      %2533 = vmatpush1.msra.mxu0 %v2228
      %2534 = vmatprep.subr.mxu0 %v2236
      %2535 = vmatpush1.msra.mxu0 %v2234
      %2536 = vmatprep.subr.mxu0 %v2242
      %2537 = vmatpush1.msra.mxu0 %v2240
      %2538 = vmatprep.subr.mxu0 %v2248
      %2539 = vmatpush1.msra.mxu0 %v2246
      %2540 = vmatprep.subr.mxu0 %v2254
      %2541 = vmatpush1.msra.mxu0 %v2252
      %2542 = vmatprep.subr.mxu0 %v2260
      %2543 = vmatpush1.msra.mxu0 %v2258
      %2544 = vmatprep.subr.mxu0 %v2266
      %2545 = vmatpush1.msra.mxu0 %v2264
      %2546 = vmatprep.subr.mxu0 %v2272
      %2547 = vmatpush1.msra.mxu0 %v2270
      %2548 = vmatprep.subr.mxu0 %v2278
      %2549 = vmatpush1.msra.mxu0 %v2276
      %2550 = vmatprep.subr.mxu0 %v2284
      %2551 = vmatpush1.msra.mxu0 %v2282
      %2552 = vmatprep.subr.mxu0 %v2290
      %2553 = vmatpush1.msra.mxu0 %v2288
      %2554 = vmatprep.subr.mxu0 %v2296
      %2555 = vmatpush1.msra.mxu0 %v2294
      %2556 = vmatprep.subr.mxu0 0.0
      %2557 = vmatpush1.msra.mxu0 0.0
      %2558 = vmatprep.subr.mxu0 0.0
      %2559 = vmatpush1.msra.mxu0 0.0
      %2560 = vmatprep.subr.mxu0 0.0
      %2561 = vmatpush1.msra.mxu0 0.0
      %2562 = vmatprep.subr.mxu0 0.0
      %2563 = vmatpush1.msra.mxu0 0.0
      %2564 = vmatprep.subr.mxu0 0.0
      %2565 = vmatpush1.msra.mxu0 0.0
      %2566 = vmatprep.subr.mxu0 0.0
      %2567 = vmatpush1.msra.mxu0 0.0
      %2568 = vmatprep.subr.mxu0 0.0
      %2569 = vmatpush1.msra.mxu0 0.0
      %2570 = vmatprep.subr.mxu0 0.0
      %2571 = vmatpush1.msra.mxu0 0.0
      %2572 = vmatprep.subr.mxu0 0.0
      %2573 = vmatpush1.msra.mxu0 0.0
      %2574 = vmatprep.subr.mxu0 0.0
      %2575 = vmatpush1.msra.mxu0 0.0
      %2576 = vmatprep.subr.mxu0 0.0
      %2577 = vmatpush1.msra.mxu0 0.0
      %2578 = vmatprep.subr.mxu0 0.0
      %2579 = vmatpush1.msra.mxu0 0.0
      %2580 = vmatprep.subr.mxu0 0.0
      %2581 = vmatpush1.msra.mxu0 0.0
      %2582 = vmatprep.subr.mxu0 0.0
      %2583 = vmatpush1.msra.mxu0 0.0
      %2584 = vmatprep.subr.mxu0 0.0
      %2585 = vmatpush1.msra.mxu0 0.0
      %2586 = vmatprep.subr.mxu0 0.0
      %2587 = vmatpush1.msra.mxu0 0.0
      %2588 = vmatprep.mubr.f32.mxu0 0.0
      %2589 = vmatmul.mubr.f32.gmra.mrb[0].mxu0 %v2492
      %v2590 = vpop.f32.mrb[0].mxu0
      %v2591 = vadd.f32 0.0, %v2590
      %v2592 = vpop.f32.mrb[0].mxu0
      %v2593 = vadd.f32 0.0, %v2592
      %2594 = vmatprep.mubr.f32.mxu0 0.0
      %2595 = vmatmul.mubr.f32.gmra.mrb[0].mxu0 %v2493
      %v2596 = vpop.f32.mrb[0].mxu0
      %v2597 = vadd.f32 0.0, %v2596
      %v2598 = vpop.f32.mrb[0].mxu0
      %v2599 = vadd.f32 0.0, %v2598
      %2600 = vmatprep.mubr.f32.mxu0 0.0
      %2601 = vmatmul.mubr.f32.gmra.mrb[0].mxu0 %v2494
      %v2602 = vpop.f32.mrb[0].mxu0
      %v2603 = vadd.f32 0.0, %v2602
      %v2604 = vpop.f32.mrb[0].mxu0
      %v2605 = vadd.f32 0.0, %v2604
      %2606 = vmatprep.mubr.f32.mxu0 0.0
      %2607 = vmatmul.mubr.f32.gmra.mrb[0].mxu0 %v2495
      %v2608 = vpop.f32.mrb[0].mxu0
      %v2609 = vadd.f32 0.0, %v2608
      %v2610 = vpop.f32.mrb[0].mxu0
      %v2611 = vadd.f32 0.0, %v2610
      %2612 = vmatprep.mubr.f32.mxu0 0.0
      %2613 = vmatmul.mubr.f32.gmra.mrb[0].mxu0 %v2496
      %v2614 = vpop.f32.mrb[0].mxu0
      %v2615 = vadd.f32 0.0, %v2614
      %v2616 = vpop.f32.mrb[0].mxu0
      %v2617 = vadd.f32 0.0, %v2616
      %2618 = vmatprep.mubr.f32.mxu0 0.0
      %2619 = vmatmul.mubr.f32.gmra.mrb[0].mxu0 %v2497
      %v2620 = vpop.f32.mrb[0].mxu0
      %v2621 = vadd.f32 0.0, %v2620
      %v2622 = vpop.f32.mrb[0].mxu0
      %v2623 = vadd.f32 0.0, %v2622
      %2624 = vmatprep.mubr.f32.mxu0 0.0
      %2625 = vmatmul.mubr.f32.gmra.mrb[0].mxu0 %v2498
      %v2626 = vpop.f32.mrb[0].mxu0
      %v2627 = vadd.f32 0.0, %v2626
      %v2628 = vpop.f32.mrb[0].mxu0
      %v2629 = vadd.f32 0.0, %v2628
      %2630 = vmatprep.mubr.f32.mxu0 0.0
      %2631 = vmatmul.mubr.f32.gmra.mrb[0].mxu0 %v2499
      %v2632 = vpop.f32.mrb[0].mxu0
      %v2633 = vadd.f32 0.0, %v2632
      %v2634 = vpop.f32.mrb[0].mxu0
      %v2635 = vadd.f32 0.0, %v2634
      %2636 = vmatprep.mubr.f32.mxu0 0.0
      %2637 = vmatmul.mubr.f32.gmra.mrb[0].mxu0 %v2500
      %v2638 = vpop.f32.mrb[0].mxu0
      %v2639 = vadd.f32 0.0, %v2638
      %v2640 = vpop.f32.mrb[0].mxu0
      %v2641 = vadd.f32 0.0, %v2640
      %2642 = vmatprep.mubr.f32.mxu0 0.0
      %2643 = vmatmul.mubr.f32.gmra.mrb[0].mxu0 %v2501
      %v2644 = vpop.f32.mrb[0].mxu0
      %v2645 = vadd.f32 0.0, %v2644
      %v2646 = vpop.f32.mrb[0].mxu0
      %v2647 = vadd.f32 0.0, %v2646
      %2648 = vmatprep.mubr.f32.mxu0 0.0
      %2649 = vmatmul.mubr.f32.gmra.mrb[0].mxu0 %v2502
      %v2650 = vpop.f32.mrb[0].mxu0
      %v2651 = vadd.f32 0.0, %v2650
      %v2652 = vpop.f32.mrb[0].mxu0
      %v2653 = vadd.f32 0.0, %v2652
      %2654 = vmatprep.mubr.f32.mxu0 0.0
      %2655 = vmatmul.mubr.f32.gmra.mrb[0].mxu0 %v2503
      %v2656 = vpop.f32.mrb[0].mxu0
      %v2657 = vadd.f32 0.0, %v2656
      %v2658 = vpop.f32.mrb[0].mxu0
      %v2659 = vadd.f32 0.0, %v2658
      %2660 = vmatprep.mubr.f32.mxu0 0.0
      %2661 = vmatmul.mubr.f32.gmra.mrb[0].mxu0 %v2504
      %v2662 = vpop.f32.mrb[0].mxu0
      %v2663 = vadd.f32 0.0, %v2662
      %v2664 = vpop.f32.mrb[0].mxu0
      %v2665 = vadd.f32 0.0, %v2664
      %2666 = vmatprep.mubr.f32.mxu0 0.0
      %2667 = vmatmul.mubr.f32.gmra.mrb[0].mxu0 %v2505
      %v2668 = vpop.f32.mrb[0].mxu0
      %v2669 = vadd.f32 0.0, %v2668
      %v2670 = vpop.f32.mrb[0].mxu0
      %v2671 = vadd.f32 0.0, %v2670
      %2672 = vmatprep.mubr.f32.mxu0 0.0
      %2673 = vmatmul.mubr.f32.gmra.mrb[0].mxu0 %v2506
      %v2674 = vpop.f32.mrb[0].mxu0
      %v2675 = vadd.f32 0.0, %v2674
      %v2676 = vpop.f32.mrb[0].mxu0
      %v2677 = vadd.f32 0.0, %v2676
      %2678 = vmatprep.mubr.f32.mxu0 0.0
      %2679 = vmatmul.mubr.f32.gmra.mrb[0].mxu0 %v2507
      %v2680 = vpop.f32.mrb[0].mxu0
      %v2681 = vadd.f32 0.0, %v2680
      %v2682 = vpop.f32.mrb[0].mxu0
      %v2683 = vadd.f32 0.0, %v2682
      %2684 = vmatprep.mubr.f32.mxu0 0.0
      %2685 = vmatmul.mubr.f32.gmra.mrb[0].mxu0 %v2508
      %v2686 = vpop.f32.mrb[0].mxu0
      %v2687 = vadd.f32 0.0, %v2686
      %v2688 = vpop.f32.mrb[0].mxu0
      %v2689 = vadd.f32 0.0, %v2688
      %2690 = vmatprep.mubr.f32.mxu0 0.0
      %2691 = vmatmul.mubr.f32.gmra.mrb[0].mxu0 %v2509
      %v2692 = vpop.f32.mrb[0].mxu0
      %v2693 = vadd.f32 0.0, %v2692
      %v2694 = vpop.f32.mrb[0].mxu0
      %v2695 = vadd.f32 0.0, %v2694
      %2696 = vmatprep.mubr.f32.mxu0 0.0
      %2697 = vmatmul.mubr.f32.gmra.mrb[0].mxu0 %v2510
      %v2698 = vpop.f32.mrb[0].mxu0
      %v2699 = vadd.f32 0.0, %v2698
      %v2700 = vpop.f32.mrb[0].mxu0
      %v2701 = vadd.f32 0.0, %v2700
      %2702 = vmatprep.mubr.f32.mxu0 0.0
      %2703 = vmatmul.mubr.f32.gmra.mrb[0].mxu0 %v2511
      %v2704 = vpop.f32.mrb[0].mxu0
      %v2705 = vadd.f32 0.0, %v2704
      %v2706 = vpop.f32.mrb[0].mxu0
      %v2707 = vadd.f32 0.0, %v2706
      %2708 = vmatprep.mubr.f32.mxu0 0.0
      %2709 = vmatmul.mubr.f32.gmra.mrb[0].mxu0 %v2512
      %v2710 = vpop.f32.mrb[0].mxu0
      %v2711 = vadd.f32 0.0, %v2710
      %v2712 = vpop.f32.mrb[0].mxu0
      %v2713 = vadd.f32 0.0, %v2712
      %2714 = vmatprep.mubr.f32.mxu0 0.0
      %2715 = vmatmul.mubr.f32.gmra.mrb[0].mxu0 %v2513
      %v2716 = vpop.f32.mrb[0].mxu0
      %v2717 = vadd.f32 0.0, %v2716
      %v2718 = vpop.f32.mrb[0].mxu0
      %v2719 = vadd.f32 0.0, %v2718
      %2720 = vmatprep.mubr.f32.mxu0 0.0
      %2721 = vmatmul.mubr.f32.gmra.mrb[0].mxu0 %v2514
      %v2722 = vpop.f32.mrb[0].mxu0
      %v2723 = vadd.f32 0.0, %v2722
      %v2724 = vpop.f32.mrb[0].mxu0
      %v2725 = vadd.f32 0.0, %v2724
      %2726 = vmatprep.mubr.f32.mxu0 0.0
      %2727 = vmatmul.mubr.f32.gmra.mrb[0].mxu0 %v2515
      %v2728 = vpop.f32.mrb[0].mxu0
      %v2729 = vadd.f32 0.0, %v2728
      %v2730 = vpop.f32.mrb[0].mxu0
      %v2731 = vadd.f32 0.0, %v2730
      %2732 = vmatprep.mubr.f32.mxu0 0.0
      %2733 = vmatmul.mubr.f32.gmra.mrb[0].mxu0 %v2516
      %v2734 = vpop.f32.mrb[0].mxu0
      %v2735 = vadd.f32 0.0, %v2734
      %v2736 = vpop.f32.mrb[0].mxu0
      %v2737 = vadd.f32 0.0, %v2736
      %2738 = vmatprep.mubr.f32.mxu0 0.0
      %2739 = vmatmul.mubr.f32.gmra.mrb[0].mxu0 %v2517
      %v2740 = vpop.f32.mrb[0].mxu0
      %v2741 = vadd.f32 0.0, %v2740
      %v2742 = vpop.f32.mrb[0].mxu0
      %v2743 = vadd.f32 0.0, %v2742
      %2744 = vmatprep.mubr.f32.mxu0 0.0
      %2745 = vmatmul.mubr.f32.gmra.mrb[0].mxu0 %v2518
      %v2746 = vpop.f32.mrb[0].mxu0
      %v2747 = vadd.f32 0.0, %v2746
      %v2748 = vpop.f32.mrb[0].mxu0
      %v2749 = vadd.f32 0.0, %v2748
      %2750 = vmatprep.mubr.f32.mxu0 0.0
      %2751 = vmatmul.mubr.f32.gmra.mrb[0].mxu0 %v2519
      %v2752 = vpop.f32.mrb[0].mxu0
      %v2753 = vadd.f32 0.0, %v2752
      %v2754 = vpop.f32.mrb[0].mxu0
      %v2755 = vadd.f32 0.0, %v2754
      %2756 = vmatprep.mubr.f32.mxu0 0.0
      %2757 = vmatmul.mubr.f32.gmra.mrb[0].mxu0 %v2520
      %v2758 = vpop.f32.mrb[0].mxu0
      %v2759 = vadd.f32 0.0, %v2758
      %v2760 = vpop.f32.mrb[0].mxu0
      %v2761 = vadd.f32 0.0, %v2760
      %2762 = vmatprep.mubr.f32.mxu0 0.0
      %2763 = vmatmul.mubr.f32.gmra.mrb[0].mxu0 %v2521
      %v2764 = vpop.f32.mrb[0].mxu0
      %v2765 = vadd.f32 0.0, %v2764
      %v2766 = vpop.f32.mrb[0].mxu0
      %v2767 = vadd.f32 0.0, %v2766
      %2768 = vmatprep.mubr.f32.mxu0 0.0
      %2769 = vmatmul.mubr.f32.gmra.mrb[0].mxu0 %v2522
      %v2770 = vpop.f32.mrb[0].mxu0
      %v2771 = vadd.f32 0.0, %v2770
      %v2772 = vpop.f32.mrb[0].mxu0
      %v2773 = vadd.f32 0.0, %v2772
      %2774 = vmatprep.mubr.f32.mxu0 0.0
      %2775 = vmatmul.mubr.f32.gmra.mrb[0].mxu0 %v2523
      %v2776 = vpop.f32.mrb[0].mxu0
      %v2777 = vadd.f32 0.0, %v2776
      %v2778 = vpop.f32.mrb[0].mxu0
      %v2779 = vadd.f32 0.0, %v2778
      %2780 = vdwg.mxu0
      %2781 = vmatprep.subr.mxu0 %v2045
      %2782 = vmatpush1.msra.mxu0 %v2043
      %2783 = vmatprep.subr.mxu0 %v2051
      %2784 = vmatpush1.msra.mxu0 %v2049
      %2785 = vmatprep.subr.mxu0 %v2057
      %2786 = vmatpush1.msra.mxu0 %v2055
      %2787 = vmatprep.subr.mxu0 %v2063
      %2788 = vmatpush1.msra.mxu0 %v2061
      %2789 = vmatprep.subr.mxu0 %v2069
      %2790 = vmatpush1.msra.mxu0 %v2067
      %2791 = vmatprep.subr.mxu0 %v2075
      %2792 = vmatpush1.msra.mxu0 %v2073
      %2793 = vmatprep.subr.mxu0 %v2081
      %2794 = vmatpush1.msra.mxu0 %v2079
      %2795 = vmatprep.subr.mxu0 %v2087
      %2796 = vmatpush1.msra.mxu0 %v2085
      %2797 = vmatprep.subr.mxu0 %v2093
      %2798 = vmatpush1.msra.mxu0 %v2091
      %2799 = vmatprep.subr.mxu0 %v2099
      %2800 = vmatpush1.msra.mxu0 %v2097
      %2801 = vmatprep.subr.mxu0 %v2105
      %2802 = vmatpush1.msra.mxu0 %v2103
      %2803 = vmatprep.subr.mxu0 %v2111
      %2804 = vmatpush1.msra.mxu0 %v2109
      %2805 = vmatprep.subr.mxu0 %v2117
      %2806 = vmatpush1.msra.mxu0 %v2115
      %2807 = vmatprep.subr.mxu0 %v2123
      %2808 = vmatpush1.msra.mxu0 %v2121
      %2809 = vmatprep.subr.mxu0 %v2129
      %2810 = vmatpush1.msra.mxu0 %v2127
      %2811 = vmatprep.subr.mxu0 %v2135
      %2812 = vmatpush1.msra.mxu0 %v2133
      %2813 = vmatprep.subr.mxu0 0.0
      %2814 = vmatpush1.msra.mxu0 0.0
      %2815 = vmatprep.subr.mxu0 0.0
      %2816 = vmatpush1.msra.mxu0 0.0
      %2817 = vmatprep.subr.mxu0 0.0
      %2818 = vmatpush1.msra.mxu0 0.0
      %2819 = vmatprep.subr.mxu0 0.0
      %2820 = vmatpush1.msra.mxu0 0.0
      %2821 = vmatprep.subr.mxu0 0.0
      %2822 = vmatpush1.msra.mxu0 0.0
      %2823 = vmatprep.subr.mxu0 0.0
      %2824 = vmatpush1.msra.mxu0 0.0
      %2825 = vmatprep.subr.mxu0 0.0
      %2826 = vmatpush1.msra.mxu0 0.0
      %2827 = vmatprep.subr.mxu0 0.0
      %2828 = vmatpush1.msra.mxu0 0.0
      %2829 = vmatprep.subr.mxu0 0.0
      %2830 = vmatpush1.msra.mxu0 0.0
      %2831 = vmatprep.subr.mxu0 0.0
      %2832 = vmatpush1.msra.mxu0 0.0
      %2833 = vmatprep.subr.mxu0 0.0
      %2834 = vmatpush1.msra.mxu0 0.0
      %2835 = vmatprep.subr.mxu0 0.0
      %2836 = vmatpush1.msra.mxu0 0.0
      %2837 = vmatprep.subr.mxu0 0.0
      %2838 = vmatpush1.msra.mxu0 0.0
      %2839 = vmatprep.subr.mxu0 0.0
      %2840 = vmatpush1.msra.mxu0 0.0
      %2841 = vmatprep.subr.mxu0 0.0
      %2842 = vmatpush1.msra.mxu0 0.0
      %2843 = vmatprep.subr.mxu0 0.0
      %2844 = vmatpush1.msra.mxu0 0.0
      %2845 = vmatprep.mubr.f32.mxu0 0.0
      %2846 = vmatmul.mubr.f32.gmra.mrb[0].mxu0 %v2459
      %v2847 = vpop.f32.mrb[0].mxu0
      %v2848 = vadd.f32 %v2591, %v2847
      %v2849 = vpop.f32.mrb[0].mxu0
      %v2850 = vadd.f32 %v2593, %v2849
      %2851 = vmatprep.mubr.f32.mxu0 0.0
      %2852 = vmatmul.mubr.f32.gmra.mrb[0].mxu0 %v2460
      %v2853 = vpop.f32.mrb[0].mxu0
      %v2854 = vadd.f32 %v2597, %v2853
      %v2855 = vpop.f32.mrb[0].mxu0
      %v2856 = vadd.f32 %v2599, %v2855
      %2857 = vmatprep.mubr.f32.mxu0 0.0
      %2858 = vmatmul.mubr.f32.gmra.mrb[0].mxu0 %v2461
      %v2859 = vpop.f32.mrb[0].mxu0
      %v2860 = vadd.f32 %v2603, %v2859
      %v2861 = vpop.f32.mrb[0].mxu0
      %v2862 = vadd.f32 %v2605, %v2861
      %2863 = vmatprep.mubr.f32.mxu0 0.0
      %2864 = vmatmul.mubr.f32.gmra.mrb[0].mxu0 %v2462
      %v2865 = vpop.f32.mrb[0].mxu0
      %v2866 = vadd.f32 %v2609, %v2865
      %v2867 = vpop.f32.mrb[0].mxu0
      %v2868 = vadd.f32 %v2611, %v2867
      %2869 = vmatprep.mubr.f32.mxu0 0.0
      %2870 = vmatmul.mubr.f32.gmra.mrb[0].mxu0 %v2463
      %v2871 = vpop.f32.mrb[0].mxu0
      %v2872 = vadd.f32 %v2615, %v2871
      %v2873 = vpop.f32.mrb[0].mxu0
      %v2874 = vadd.f32 %v2617, %v2873
      %2875 = vmatprep.mubr.f32.mxu0 0.0
      %2876 = vmatmul.mubr.f32.gmra.mrb[0].mxu0 %v2464
      %v2877 = vpop.f32.mrb[0].mxu0
      %v2878 = vadd.f32 %v2621, %v2877
      %v2879 = vpop.f32.mrb[0].mxu0
      %v2880 = vadd.f32 %v2623, %v2879
      %2881 = vmatprep.mubr.f32.mxu0 0.0
      %2882 = vmatmul.mubr.f32.gmra.mrb[0].mxu0 %v2465
      %v2883 = vpop.f32.mrb[0].mxu0
      %v2884 = vadd.f32 %v2627, %v2883
      %v2885 = vpop.f32.mrb[0].mxu0
      %v2886 = vadd.f32 %v2629, %v2885
      %2887 = vmatprep.mubr.f32.mxu0 0.0
      %2888 = vmatmul.mubr.f32.gmra.mrb[0].mxu0 %v2466
      %v2889 = vpop.f32.mrb[0].mxu0
      %v2890 = vadd.f32 %v2633, %v2889
      %v2891 = vpop.f32.mrb[0].mxu0
      %v2892 = vadd.f32 %v2635, %v2891
      %2893 = vmatprep.mubr.f32.mxu0 0.0
      %2894 = vmatmul.mubr.f32.gmra.mrb[0].mxu0 %v2467
      %v2895 = vpop.f32.mrb[0].mxu0
      %v2896 = vadd.f32 %v2639, %v2895
      %v2897 = vpop.f32.mrb[0].mxu0
      %v2898 = vadd.f32 %v2641, %v2897
      %2899 = vmatprep.mubr.f32.mxu0 0.0
      %2900 = vmatmul.mubr.f32.gmra.mrb[0].mxu0 %v2468
      %v2901 = vpop.f32.mrb[0].mxu0
      %v2902 = vadd.f32 %v2645, %v2901
      %v2903 = vpop.f32.mrb[0].mxu0
      %v2904 = vadd.f32 %v2647, %v2903
      %2905 = vmatprep.mubr.f32.mxu0 0.0
      %2906 = vmatmul.mubr.f32.gmra.mrb[0].mxu0 %v2469
      %v2907 = vpop.f32.mrb[0].mxu0
      %v2908 = vadd.f32 %v2651, %v2907
      %v2909 = vpop.f32.mrb[0].mxu0
      %v2910 = vadd.f32 %v2653, %v2909
      %2911 = vmatprep.mubr.f32.mxu0 0.0
      %2912 = vmatmul.mubr.f32.gmra.mrb[0].mxu0 %v2470
      %v2913 = vpop.f32.mrb[0].mxu0
      %v2914 = vadd.f32 %v2657, %v2913
      %v2915 = vpop.f32.mrb[0].mxu0
      %v2916 = vadd.f32 %v2659, %v2915
      %2917 = vmatprep.mubr.f32.mxu0 0.0
      %2918 = vmatmul.mubr.f32.gmra.mrb[0].mxu0 %v2471
      %v2919 = vpop.f32.mrb[0].mxu0
      %v2920 = vadd.f32 %v2663, %v2919
      %v2921 = vpop.f32.mrb[0].mxu0
      %v2922 = vadd.f32 %v2665, %v2921
      %2923 = vmatprep.mubr.f32.mxu0 0.0
      %2924 = vmatmul.mubr.f32.gmra.mrb[0].mxu0 %v2472
      %v2925 = vpop.f32.mrb[0].mxu0
      %v2926 = vadd.f32 %v2669, %v2925
      %v2927 = vpop.f32.mrb[0].mxu0
      %v2928 = vadd.f32 %v2671, %v2927
      %2929 = vmatprep.mubr.f32.mxu0 0.0
      %2930 = vmatmul.mubr.f32.gmra.mrb[0].mxu0 %v2473
      %v2931 = vpop.f32.mrb[0].mxu0
      %v2932 = vadd.f32 %v2675, %v2931
      %v2933 = vpop.f32.mrb[0].mxu0
      %v2934 = vadd.f32 %v2677, %v2933
      %2935 = vmatprep.mubr.f32.mxu0 0.0
      %2936 = vmatmul.mubr.f32.gmra.mrb[0].mxu0 %v2474
      %v2937 = vpop.f32.mrb[0].mxu0
      %v2938 = vadd.f32 %v2681, %v2937
      %v2939 = vpop.f32.mrb[0].mxu0
      %v2940 = vadd.f32 %v2683, %v2939
      %2941 = vmatprep.mubr.f32.mxu0 0.0
      %2942 = vmatmul.mubr.f32.gmra.mrb[0].mxu0 %v2475
      %v2943 = vpop.f32.mrb[0].mxu0
      %v2944 = vadd.f32 %v2687, %v2943
      %v2945 = vpop.f32.mrb[0].mxu0
      %v2946 = vadd.f32 %v2689, %v2945
      %2947 = vmatprep.mubr.f32.mxu0 0.0
      %2948 = vmatmul.mubr.f32.gmra.mrb[0].mxu0 %v2476
      %v2949 = vpop.f32.mrb[0].mxu0
      %v2950 = vadd.f32 %v2693, %v2949
      %v2951 = vpop.f32.mrb[0].mxu0
      %v2952 = vadd.f32 %v2695, %v2951
      %2953 = vmatprep.mubr.f32.mxu0 0.0
      %2954 = vmatmul.mubr.f32.gmra.mrb[0].mxu0 %v2477
      %v2955 = vpop.f32.mrb[0].mxu0
      %v2956 = vadd.f32 %v2699, %v2955
      %v2957 = vpop.f32.mrb[0].mxu0
      %v2958 = vadd.f32 %v2701, %v2957
      %2959 = vmatprep.mubr.f32.mxu0 0.0
      %2960 = vmatmul.mubr.f32.gmra.mrb[0].mxu0 %v2478
      %v2961 = vpop.f32.mrb[0].mxu0
      %v2962 = vadd.f32 %v2705, %v2961
      %v2963 = vpop.f32.mrb[0].mxu0
      %v2964 = vadd.f32 %v2707, %v2963
      %2965 = vmatprep.mubr.f32.mxu0 0.0
      %2966 = vmatmul.mubr.f32.gmra.mrb[0].mxu0 %v2479
      %v2967 = vpop.f32.mrb[0].mxu0
      %v2968 = vadd.f32 %v2711, %v2967
      %v2969 = vpop.f32.mrb[0].mxu0
      %v2970 = vadd.f32 %v2713, %v2969
      %2971 = vmatprep.mubr.f32.mxu0 0.0
      %2972 = vmatmul.mubr.f32.gmra.mrb[0].mxu0 %v2480
      %v2973 = vpop.f32.mrb[0].mxu0
      %v2974 = vadd.f32 %v2717, %v2973
      %v2975 = vpop.f32.mrb[0].mxu0
      %v2976 = vadd.f32 %v2719, %v2975
      %2977 = vmatprep.mubr.f32.mxu0 0.0
      %2978 = vmatmul.mubr.f32.gmra.mrb[0].mxu0 %v2481
      %v2979 = vpop.f32.mrb[0].mxu0
      %v2980 = vadd.f32 %v2723, %v2979
      %v2981 = vpop.f32.mrb[0].mxu0
      %v2982 = vadd.f32 %v2725, %v2981
      %2983 = vmatprep.mubr.f32.mxu0 0.0
      %2984 = vmatmul.mubr.f32.gmra.mrb[0].mxu0 %v2482
      %v2985 = vpop.f32.mrb[0].mxu0
      %v2986 = vadd.f32 %v2729, %v2985
      %v2987 = vpop.f32.mrb[0].mxu0
      %v2988 = vadd.f32 %v2731, %v2987
      %2989 = vmatprep.mubr.f32.mxu0 0.0
      %2990 = vmatmul.mubr.f32.gmra.mrb[0].mxu0 %v2483
      %v2991 = vpop.f32.mrb[0].mxu0
      %v2992 = vadd.f32 %v2735, %v2991
      %v2993 = vpop.f32.mrb[0].mxu0
      %v2994 = vadd.f32 %v2737, %v2993
      %2995 = vmatprep.mubr.f32.mxu0 0.0
      %2996 = vmatmul.mubr.f32.gmra.mrb[0].mxu0 %v2484
      %v2997 = vpop.f32.mrb[0].mxu0
      %v2998 = vadd.f32 %v2741, %v2997
      %v2999 = vpop.f32.mrb[0].mxu0
      %v3000 = vadd.f32 %v2743, %v2999
      %3001 = vmatprep.mubr.f32.mxu0 0.0
      %3002 = vmatmul.mubr.f32.gmra.mrb[0].mxu0 %v2485
      %v3003 = vpop.f32.mrb[0].mxu0
      %v3004 = vadd.f32 %v2747, %v3003
      %v3005 = vpop.f32.mrb[0].mxu0
      %v3006 = vadd.f32 %v2749, %v3005
      %3007 = vmatprep.mubr.f32.mxu0 0.0
      %3008 = vmatmul.mubr.f32.gmra.mrb[0].mxu0 %v2486
      %v3009 = vpop.f32.mrb[0].mxu0
      %v3010 = vadd.f32 %v2753, %v3009
      %v3011 = vpop.f32.mrb[0].mxu0
      %v3012 = vadd.f32 %v2755, %v3011
      %3013 = vmatprep.mubr.f32.mxu0 0.0
      %3014 = vmatmul.mubr.f32.gmra.mrb[0].mxu0 %v2487
      %v3015 = vpop.f32.mrb[0].mxu0
      %v3016 = vadd.f32 %v2759, %v3015
      %v3017 = vpop.f32.mrb[0].mxu0
      %v3018 = vadd.f32 %v2761, %v3017
      %3019 = vmatprep.mubr.f32.mxu0 0.0
      %3020 = vmatmul.mubr.f32.gmra.mrb[0].mxu0 %v2488
      %v3021 = vpop.f32.mrb[0].mxu0
      %v3022 = vadd.f32 %v2765, %v3021
      %v3023 = vpop.f32.mrb[0].mxu0
      %v3024 = vadd.f32 %v2767, %v3023
      %3025 = vmatprep.mubr.f32.mxu0 0.0
      %3026 = vmatmul.mubr.f32.gmra.mrb[0].mxu0 %v2489
      %v3027 = vpop.f32.mrb[0].mxu0
      %v3028 = vadd.f32 %v2771, %v3027
      %v3029 = vpop.f32.mrb[0].mxu0
      %v3030 = vadd.f32 %v2773, %v3029
      %3031 = vmatprep.mubr.f32.mxu0 0.0
      %3032 = vmatmul.mubr.f32.gmra.mrb[0].mxu0 %v2490
      %v3033 = vpop.f32.mrb[0].mxu0
      %v3034 = vadd.f32 %v2777, %v3033
      %v3035 = vpop.f32.mrb[0].mxu0
      %v3036 = vadd.f32 %v2779, %v3035
      %3037 = vdwg.mxu0
      %s3038 = scalar_lea.vmem %s6, 512
      %v3039 = vld [vmem:[%s3038] sm:$0xff]
      %v3040 = vld [vmem:[%s3038 + $0x8] sm:$0xff]
      %v3041 = vld [vmem:[%s3038 + $0x10] sm:$0xff]
      %v3042 = vld [vmem:[%s3038 + $0x18] sm:$0xff]
      %v3043 = vld [vmem:[%s3038 + $0x20] sm:$0xff]
      %v3044 = vld [vmem:[%s3038 + $0x28] sm:$0xff]
      %v3045 = vld [vmem:[%s3038 + $0x30] sm:$0xff]
      %v3046 = vld [vmem:[%s3038 + $0x38] sm:$0xff]
      %v3047 = vld [vmem:[%s3038 + $0x40] sm:$0xff]
      %v3048 = vld [vmem:[%s3038 + $0x48] sm:$0xff]
      %v3049 = vld [vmem:[%s3038 + $0x50] sm:$0xff]
      %v3050 = vld [vmem:[%s3038 + $0x58] sm:$0xff]
      %v3051 = vld [vmem:[%s3038 + $0x60] sm:$0xff]
      %v3052 = vld [vmem:[%s3038 + $0x68] sm:$0xff]
      %v3053 = vld [vmem:[%s3038 + $0x70] sm:$0xff]
      %v3054 = vld [vmem:[%s3038 + $0x78] sm:$0xff]
      %v3055 = vld [vmem:[%s3038 + $0x80] sm:$0xff]
      %v3056 = vld [vmem:[%s3038 + $0x88] sm:$0xff]
      %v3057 = vld [vmem:[%s3038 + $0x90] sm:$0xff]
      %v3058 = vld [vmem:[%s3038 + $0x98] sm:$0xff]
      %v3059 = vld [vmem:[%s3038 + $0xa0] sm:$0xff]
      %v3060 = vld [vmem:[%s3038 + $0xa8] sm:$0xff]
      %v3061 = vld [vmem:[%s3038 + $0xb0] sm:$0xff]
      %v3062 = vld [vmem:[%s3038 + $0xb8] sm:$0xff]
      %v3063 = vld [vmem:[%s3038 + $0xc0] sm:$0xff]
      %v3064 = vld [vmem:[%s3038 + $0xc8] sm:$0xff]
      %v3065 = vld [vmem:[%s3038 + $0xd0] sm:$0xff]
      %v3066 = vld [vmem:[%s3038 + $0xd8] sm:$0xff]
      %v3067 = vld [vmem:[%s3038 + $0xe0] sm:$0xff]
      %v3068 = vld [vmem:[%s3038 + $0xe8] sm:$0xff]
      %v3069 = vld [vmem:[%s3038 + $0xf0] sm:$0xff]
      %v3070 = vld [vmem:[%s3038 + $0xf8] sm:$0xff]
      %3071 = vmatprep.subr.mxu0 %v2367
      %3072 = vmatpush1.msra.mxu0 %v2365
      %3073 = vmatprep.subr.mxu0 %v2373
      %3074 = vmatpush1.msra.mxu0 %v2371
      %3075 = vmatprep.subr.mxu0 %v2379
      %3076 = vmatpush1.msra.mxu0 %v2377
      %3077 = vmatprep.subr.mxu0 %v2385
      %3078 = vmatpush1.msra.mxu0 %v2383
      %3079 = vmatprep.subr.mxu0 %v2391
      %3080 = vmatpush1.msra.mxu0 %v2389
      %3081 = vmatprep.subr.mxu0 %v2397
      %3082 = vmatpush1.msra.mxu0 %v2395
      %3083 = vmatprep.subr.mxu0 %v2403
      %3084 = vmatpush1.msra.mxu0 %v2401
      %3085 = vmatprep.subr.mxu0 %v2409
      %3086 = vmatpush1.msra.mxu0 %v2407
      %3087 = vmatprep.subr.mxu0 %v2415
      %3088 = vmatpush1.msra.mxu0 %v2413
      %3089 = vmatprep.subr.mxu0 %v2421
      %3090 = vmatpush1.msra.mxu0 %v2419
      %3091 = vmatprep.subr.mxu0 %v2427
      %3092 = vmatpush1.msra.mxu0 %v2425
      %3093 = vmatprep.subr.mxu0 %v2433
      %3094 = vmatpush1.msra.mxu0 %v2431
      %3095 = vmatprep.subr.mxu0 %v2439
      %3096 = vmatpush1.msra.mxu0 %v2437
      %3097 = vmatprep.subr.mxu0 %v2445
      %3098 = vmatpush1.msra.mxu0 %v2443
      %3099 = vmatprep.subr.mxu0 %v2451
      %3100 = vmatpush1.msra.mxu0 %v2449
      %3101 = vmatprep.subr.mxu0 %v2457
      %3102 = vmatpush1.msra.mxu0 %v2455
      %3103 = vmatprep.subr.mxu0 0.0
      %3104 = vmatpush1.msra.mxu0 0.0
      %3105 = vmatprep.subr.mxu0 0.0
      %3106 = vmatpush1.msra.mxu0 0.0
      %3107 = vmatprep.subr.mxu0 0.0
      %3108 = vmatpush1.msra.mxu0 0.0
      %3109 = vmatprep.subr.mxu0 0.0
      %3110 = vmatpush1.msra.mxu0 0.0
      %3111 = vmatprep.subr.mxu0 0.0
      %3112 = vmatpush1.msra.mxu0 0.0
      %3113 = vmatprep.subr.mxu0 0.0
      %3114 = vmatpush1.msra.mxu0 0.0
      %3115 = vmatprep.subr.mxu0 0.0
      %3116 = vmatpush1.msra.mxu0 0.0
      %3117 = vmatprep.subr.mxu0 0.0
      %3118 = vmatpush1.msra.mxu0 0.0
      %3119 = vmatprep.subr.mxu0 0.0
      %3120 = vmatpush1.msra.mxu0 0.0
      %3121 = vmatprep.subr.mxu0 0.0
      %3122 = vmatpush1.msra.mxu0 0.0
      %3123 = vmatprep.subr.mxu0 0.0
      %3124 = vmatpush1.msra.mxu0 0.0
      %3125 = vmatprep.subr.mxu0 0.0
      %3126 = vmatpush1.msra.mxu0 0.0
      %3127 = vmatprep.subr.mxu0 0.0
      %3128 = vmatpush1.msra.mxu0 0.0
      %3129 = vmatprep.subr.mxu0 0.0
      %3130 = vmatpush1.msra.mxu0 0.0
      %3131 = vmatprep.subr.mxu0 0.0
      %3132 = vmatpush1.msra.mxu0 0.0
      %3133 = vmatprep.subr.mxu0 0.0
      %3134 = vmatpush1.msra.mxu0 0.0
      %3135 = vmatprep.mubr.f32.mxu0 0.0
      %3136 = vmatmul.mubr.f32.gmra.mrb[0].mxu0 %v3039
      %v3137 = vpop.f32.mrb[0].mxu0
      %v3138 = vadd.f32 0.0, %v3137
      %v3139 = vpop.f32.mrb[0].mxu0
      %v3140 = vadd.f32 0.0, %v3139
      %3141 = vmatprep.mubr.f32.mxu0 0.0
      %3142 = vmatmul.mubr.f32.gmra.mrb[0].mxu0 %v3040
      %v3143 = vpop.f32.mrb[0].mxu0
      %v3144 = vadd.f32 0.0, %v3143
      %v3145 = vpop.f32.mrb[0].mxu0
      %v3146 = vadd.f32 0.0, %v3145
      %3147 = vmatprep.mubr.f32.mxu0 0.0
      %3148 = vmatmul.mubr.f32.gmra.mrb[0].mxu0 %v3041
      %v3149 = vpop.f32.mrb[0].mxu0
      %v3150 = vadd.f32 0.0, %v3149
      %v3151 = vpop.f32.mrb[0].mxu0
      %v3152 = vadd.f32 0.0, %v3151
      %3153 = vmatprep.mubr.f32.mxu0 0.0
      %3154 = vmatmul.mubr.f32.gmra.mrb[0].mxu0 %v3042
      %v3155 = vpop.f32.mrb[0].mxu0
      %v3156 = vadd.f32 0.0, %v3155
      %v3157 = vpop.f32.mrb[0].mxu0
      %v3158 = vadd.f32 0.0, %v3157
      %3159 = vmatprep.mubr.f32.mxu0 0.0
      %3160 = vmatmul.mubr.f32.gmra.mrb[0].mxu0 %v3043
      %v3161 = vpop.f32.mrb[0].mxu0
      %v3162 = vadd.f32 0.0, %v3161
      %v3163 = vpop.f32.mrb[0].mxu0
      %v3164 = vadd.f32 0.0, %v3163
      %3165 = vmatprep.mubr.f32.mxu0 0.0
      %3166 = vmatmul.mubr.f32.gmra.mrb[0].mxu0 %v3044
      %v3167 = vpop.f32.mrb[0].mxu0
      %v3168 = vadd.f32 0.0, %v3167
      %v3169 = vpop.f32.mrb[0].mxu0
      %v3170 = vadd.f32 0.0, %v3169
      %3171 = vmatprep.mubr.f32.mxu0 0.0
      %3172 = vmatmul.mubr.f32.gmra.mrb[0].mxu0 %v3045
      %v3173 = vpop.f32.mrb[0].mxu0
      %v3174 = vadd.f32 0.0, %v3173
      %v3175 = vpop.f32.mrb[0].mxu0
      %v3176 = vadd.f32 0.0, %v3175
      %3177 = vmatprep.mubr.f32.mxu0 0.0
      %3178 = vmatmul.mubr.f32.gmra.mrb[0].mxu0 %v3046
      %v3179 = vpop.f32.mrb[0].mxu0
      %v3180 = vadd.f32 0.0, %v3179
      %v3181 = vpop.f32.mrb[0].mxu0
      %v3182 = vadd.f32 0.0, %v3181
      %3183 = vmatprep.mubr.f32.mxu0 0.0
      %3184 = vmatmul.mubr.f32.gmra.mrb[0].mxu0 %v3047
      %v3185 = vpop.f32.mrb[0].mxu0
      %v3186 = vadd.f32 0.0, %v3185
      %v3187 = vpop.f32.mrb[0].mxu0
      %v3188 = vadd.f32 0.0, %v3187
      %3189 = vmatprep.mubr.f32.mxu0 0.0
      %3190 = vmatmul.mubr.f32.gmra.mrb[0].mxu0 %v3048
      %v3191 = vpop.f32.mrb[0].mxu0
      %v3192 = vadd.f32 0.0, %v3191
      %v3193 = vpop.f32.mrb[0].mxu0
      %v3194 = vadd.f32 0.0, %v3193
      %3195 = vmatprep.mubr.f32.mxu0 0.0
      %3196 = vmatmul.mubr.f32.gmra.mrb[0].mxu0 %v3049
      %v3197 = vpop.f32.mrb[0].mxu0
      %v3198 = vadd.f32 0.0, %v3197
      %v3199 = vpop.f32.mrb[0].mxu0
      %v3200 = vadd.f32 0.0, %v3199
      %3201 = vmatprep.mubr.f32.mxu0 0.0
      %3202 = vmatmul.mubr.f32.gmra.mrb[0].mxu0 %v3050
      %v3203 = vpop.f32.mrb[0].mxu0
      %v3204 = vadd.f32 0.0, %v3203
      %v3205 = vpop.f32.mrb[0].mxu0
      %v3206 = vadd.f32 0.0, %v3205
      %3207 = vmatprep.mubr.f32.mxu0 0.0
      %3208 = vmatmul.mubr.f32.gmra.mrb[0].mxu0 %v3051
      %v3209 = vpop.f32.mrb[0].mxu0
      %v3210 = vadd.f32 0.0, %v3209
      %v3211 = vpop.f32.mrb[0].mxu0
      %v3212 = vadd.f32 0.0, %v3211
      %3213 = vmatprep.mubr.f32.mxu0 0.0
      %3214 = vmatmul.mubr.f32.gmra.mrb[0].mxu0 %v3052
      %v3215 = vpop.f32.mrb[0].mxu0
      %v3216 = vadd.f32 0.0, %v3215
      %v3217 = vpop.f32.mrb[0].mxu0
      %v3218 = vadd.f32 0.0, %v3217
      %3219 = vmatprep.mubr.f32.mxu0 0.0
      %3220 = vmatmul.mubr.f32.gmra.mrb[0].mxu0 %v3053
      %v3221 = vpop.f32.mrb[0].mxu0
      %v3222 = vadd.f32 0.0, %v3221
      %v3223 = vpop.f32.mrb[0].mxu0
      %v3224 = vadd.f32 0.0, %v3223
      %3225 = vmatprep.mubr.f32.mxu0 0.0
      %3226 = vmatmul.mubr.f32.gmra.mrb[0].mxu0 %v3054
      %v3227 = vpop.f32.mrb[0].mxu0
      %v3228 = vadd.f32 0.0, %v3227
      %v3229 = vpop.f32.mrb[0].mxu0
      %v3230 = vadd.f32 0.0, %v3229
      %3231 = vmatprep.mubr.f32.mxu0 0.0
      %3232 = vmatmul.mubr.f32.gmra.mrb[0].mxu0 %v3055
      %v3233 = vpop.f32.mrb[0].mxu0
      %v3234 = vadd.f32 0.0, %v3233
      %v3235 = vpop.f32.mrb[0].mxu0
      %v3236 = vadd.f32 0.0, %v3235
      %3237 = vmatprep.mubr.f32.mxu0 0.0
      %3238 = vmatmul.mubr.f32.gmra.mrb[0].mxu0 %v3056
      %v3239 = vpop.f32.mrb[0].mxu0
      %v3240 = vadd.f32 0.0, %v3239
      %v3241 = vpop.f32.mrb[0].mxu0
      %v3242 = vadd.f32 0.0, %v3241
      %3243 = vmatprep.mubr.f32.mxu0 0.0
      %3244 = vmatmul.mubr.f32.gmra.mrb[0].mxu0 %v3057
      %v3245 = vpop.f32.mrb[0].mxu0
      %v3246 = vadd.f32 0.0, %v3245
      %v3247 = vpop.f32.mrb[0].mxu0
      %v3248 = vadd.f32 0.0, %v3247
      %3249 = vmatprep.mubr.f32.mxu0 0.0
      %3250 = vmatmul.mubr.f32.gmra.mrb[0].mxu0 %v3058
      %v3251 = vpop.f32.mrb[0].mxu0
      %v3252 = vadd.f32 0.0, %v3251
      %v3253 = vpop.f32.mrb[0].mxu0
      %v3254 = vadd.f32 0.0, %v3253
      %3255 = vmatprep.mubr.f32.mxu0 0.0
      %3256 = vmatmul.mubr.f32.gmra.mrb[0].mxu0 %v3059
      %v3257 = vpop.f32.mrb[0].mxu0
      %v3258 = vadd.f32 0.0, %v3257
      %v3259 = vpop.f32.mrb[0].mxu0
      %v3260 = vadd.f32 0.0, %v3259
      %3261 = vmatprep.mubr.f32.mxu0 0.0
      %3262 = vmatmul.mubr.f32.gmra.mrb[0].mxu0 %v3060
      %v3263 = vpop.f32.mrb[0].mxu0
      %v3264 = vadd.f32 0.0, %v3263
      %v3265 = vpop.f32.mrb[0].mxu0
      %v3266 = vadd.f32 0.0, %v3265
      %3267 = vmatprep.mubr.f32.mxu0 0.0
      %3268 = vmatmul.mubr.f32.gmra.mrb[0].mxu0 %v3061
      %v3269 = vpop.f32.mrb[0].mxu0
      %v3270 = vadd.f32 0.0, %v3269
      %v3271 = vpop.f32.mrb[0].mxu0
      %v3272 = vadd.f32 0.0, %v3271
      %3273 = vmatprep.mubr.f32.mxu0 0.0
      %3274 = vmatmul.mubr.f32.gmra.mrb[0].mxu0 %v3062
      %v3275 = vpop.f32.mrb[0].mxu0
      %v3276 = vadd.f32 0.0, %v3275
      %v3277 = vpop.f32.mrb[0].mxu0
      %v3278 = vadd.f32 0.0, %v3277
      %3279 = vmatprep.mubr.f32.mxu0 0.0
      %3280 = vmatmul.mubr.f32.gmra.mrb[0].mxu0 %v3063
      %v3281 = vpop.f32.mrb[0].mxu0
      %v3282 = vadd.f32 0.0, %v3281
      %v3283 = vpop.f32.mrb[0].mxu0
      %v3284 = vadd.f32 0.0, %v3283
      %3285 = vmatprep.mubr.f32.mxu0 0.0
      %3286 = vmatmul.mubr.f32.gmra.mrb[0].mxu0 %v3064
      %v3287 = vpop.f32.mrb[0].mxu0
      %v3288 = vadd.f32 0.0, %v3287
      %v3289 = vpop.f32.mrb[0].mxu0
      %v3290 = vadd.f32 0.0, %v3289
      %3291 = vmatprep.mubr.f32.mxu0 0.0
      %3292 = vmatmul.mubr.f32.gmra.mrb[0].mxu0 %v3065
      %v3293 = vpop.f32.mrb[0].mxu0
      %v3294 = vadd.f32 0.0, %v3293
      %v3295 = vpop.f32.mrb[0].mxu0
      %v3296 = vadd.f32 0.0, %v3295
      %3297 = vmatprep.mubr.f32.mxu0 0.0
      %3298 = vmatmul.mubr.f32.gmra.mrb[0].mxu0 %v3066
      %v3299 = vpop.f32.mrb[0].mxu0
      %v3300 = vadd.f32 0.0, %v3299
      %v3301 = vpop.f32.mrb[0].mxu0
      %v3302 = vadd.f32 0.0, %v3301
      %3303 = vmatprep.mubr.f32.mxu0 0.0
      %3304 = vmatmul.mubr.f32.gmra.mrb[0].mxu0 %v3067
      %v3305 = vpop.f32.mrb[0].mxu0
      %v3306 = vadd.f32 0.0, %v3305
      %v3307 = vpop.f32.mrb[0].mxu0
      %v3308 = vadd.f32 0.0, %v3307
      %3309 = vmatprep.mubr.f32.mxu0 0.0
      %3310 = vmatmul.mubr.f32.gmra.mrb[0].mxu0 %v3068
      %v3311 = vpop.f32.mrb[0].mxu0
      %v3312 = vadd.f32 0.0, %v3311
      %v3313 = vpop.f32.mrb[0].mxu0
      %v3314 = vadd.f32 0.0, %v3313
      %3315 = vmatprep.mubr.f32.mxu0 0.0
      %3316 = vmatmul.mubr.f32.gmra.mrb[0].mxu0 %v3069
      %v3317 = vpop.f32.mrb[0].mxu0
      %v3318 = vadd.f32 0.0, %v3317
      %v3319 = vpop.f32.mrb[0].mxu0
      %v3320 = vadd.f32 0.0, %v3319
      %3321 = vmatprep.mubr.f32.mxu0 0.0
      %3322 = vmatmul.mubr.f32.gmra.mrb[0].mxu0 %v3070
      %v3323 = vpop.f32.mrb[0].mxu0
      %v3324 = vadd.f32 0.0, %v3323
      %v3325 = vpop.f32.mrb[0].mxu0
      %v3326 = vadd.f32 0.0, %v3325
      %3327 = vdwg.mxu0
      %v3328 = vadd.f32 %v2848, %v3138
      %v3329 = vadd.f32 %v2850, %v3140
      %v3330 = vadd.f32 %v2854, %v3144
      %v3331 = vadd.f32 %v2856, %v3146
      %v3332 = vadd.f32 %v2860, %v3150
      %v3333 = vadd.f32 %v2862, %v3152
      %v3334 = vadd.f32 %v2866, %v3156
      %v3335 = vadd.f32 %v2868, %v3158
      %v3336 = vadd.f32 %v2872, %v3162
      %v3337 = vadd.f32 %v2874, %v3164
      %v3338 = vadd.f32 %v2878, %v3168
      %v3339 = vadd.f32 %v2880, %v3170
      %v3340 = vadd.f32 %v2884, %v3174
      %v3341 = vadd.f32 %v2886, %v3176
      %v3342 = vadd.f32 %v2890, %v3180
      %v3343 = vadd.f32 %v2892, %v3182
      %v3344 = vadd.f32 %v2896, %v3186
      %v3345 = vadd.f32 %v2898, %v3188
      %v3346 = vadd.f32 %v2902, %v3192
      %v3347 = vadd.f32 %v2904, %v3194
      %v3348 = vadd.f32 %v2908, %v3198
      %v3349 = vadd.f32 %v2910, %v3200
      %v3350 = vadd.f32 %v2914, %v3204
      %v3351 = vadd.f32 %v2916, %v3206
      %v3352 = vadd.f32 %v2920, %v3210
      %v3353 = vadd.f32 %v2922, %v3212
      %v3354 = vadd.f32 %v2926, %v3216
      %v3355 = vadd.f32 %v2928, %v3218
      %v3356 = vadd.f32 %v2932, %v3222
      %v3357 = vadd.f32 %v2934, %v3224
      %v3358 = vadd.f32 %v2938, %v3228
      %v3359 = vadd.f32 %v2940, %v3230
      %v3360 = vadd.f32 %v2944, %v3234
      %v3361 = vadd.f32 %v2946, %v3236
      %v3362 = vadd.f32 %v2950, %v3240
      %v3363 = vadd.f32 %v2952, %v3242
      %v3364 = vadd.f32 %v2956, %v3246
      %v3365 = vadd.f32 %v2958, %v3248
      %v3366 = vadd.f32 %v2962, %v3252
      %v3367 = vadd.f32 %v2964, %v3254
      %v3368 = vadd.f32 %v2968, %v3258
      %v3369 = vadd.f32 %v2970, %v3260
      %v3370 = vadd.f32 %v2974, %v3264
      %v3371 = vadd.f32 %v2976, %v3266
      %v3372 = vadd.f32 %v2980, %v3270
      %v3373 = vadd.f32 %v2982, %v3272
      %v3374 = vadd.f32 %v2986, %v3276
      %v3375 = vadd.f32 %v2988, %v3278
      %v3376 = vadd.f32 %v2992, %v3282
      %v3377 = vadd.f32 %v2994, %v3284
      %v3378 = vadd.f32 %v2998, %v3288
      %v3379 = vadd.f32 %v3000, %v3290
      %v3380 = vadd.f32 %v3004, %v3294
      %v3381 = vadd.f32 %v3006, %v3296
      %v3382 = vadd.f32 %v3010, %v3300
      %v3383 = vadd.f32 %v3012, %v3302
      %v3384 = vadd.f32 %v3016, %v3306
      %v3385 = vadd.f32 %v3018, %v3308
      %v3386 = vadd.f32 %v3022, %v3312
      %v3387 = vadd.f32 %v3024, %v3314
      %v3388 = vadd.f32 %v3028, %v3318
      %v3389 = vadd.f32 %v3030, %v3320
      %v3390 = vadd.f32 %v3034, %v3324
      %v3391 = vadd.f32 %v3036, %v3326
      %v3392 = vmax.f32 %v3328, %v3329
      %v3393 = vmax.f32 %v3330, %v3331
      %v3394 = vmax.f32 %v3332, %v3333
      %v3395 = vmax.f32 %v3334, %v3335
      %v3396 = vmax.f32 %v3336, %v3337
      %v3397 = vmax.f32 %v3338, %v3339
      %v3398 = vmax.f32 %v3340, %v3341
      %v3399 = vmax.f32 %v3342, %v3343
      %v3400 = vmax.f32 %v3344, %v3345
      %v3401 = vmax.f32 %v3346, %v3347
      %v3402 = vmax.f32 %v3348, %v3349
      %v3403 = vmax.f32 %v3350, %v3351
      %v3404 = vmax.f32 %v3352, %v3353
      %v3405 = vmax.f32 %v3354, %v3355
      %v3406 = vmax.f32 %v3356, %v3357
      %v3407 = vmax.f32 %v3358, %v3359
      %v3408 = vmax.f32 %v3360, %v3361
      %v3409 = vmax.f32 %v3362, %v3363
      %v3410 = vmax.f32 %v3364, %v3365
      %v3411 = vmax.f32 %v3366, %v3367
      %v3412 = vmax.f32 %v3368, %v3369
      %v3413 = vmax.f32 %v3370, %v3371
      %v3414 = vmax.f32 %v3372, %v3373
      %v3415 = vmax.f32 %v3374, %v3375
      %v3416 = vmax.f32 %v3376, %v3377
      %v3417 = vmax.f32 %v3378, %v3379
      %v3418 = vmax.f32 %v3380, %v3381
      %v3419 = vmax.f32 %v3382, %v3383
      %v3420 = vmax.f32 %v3384, %v3385
      %v3421 = vmax.f32 %v3386, %v3387
      %v3422 = vmax.f32 %v3388, %v3389
      %v3423 = vmax.f32 %v3390, %v3391
      %v3424 = vld [vmem:[%s7] sm:$0xff]
      %v3425 = vld [vmem:[%s7 + $0x8] sm:$0xff]
      %v3426 = vld [vmem:[%s7 + $0x10] sm:$0xff]
      %v3427 = vld [vmem:[%s7 + $0x18] sm:$0xff]
      %v3428 = vld [vmem:[%s7 + $0x20] sm:$0xff]
      %v3429 = vld [vmem:[%s7 + $0x28] sm:$0xff]
      %v3430 = vld [vmem:[%s7 + $0x30] sm:$0xff]
      %v3431 = vld [vmem:[%s7 + $0x38] sm:$0xff]
      %v3432 = vld [vmem:[%s7 + $0x40] sm:$0xff]
      %v3433 = vld [vmem:[%s7 + $0x48] sm:$0xff]
      %v3434 = vld [vmem:[%s7 + $0x50] sm:$0xff]
      %v3435 = vld [vmem:[%s7 + $0x58] sm:$0xff]
      %v3436 = vld [vmem:[%s7 + $0x60] sm:$0xff]
      %v3437 = vld [vmem:[%s7 + $0x68] sm:$0xff]
      %v3438 = vld [vmem:[%s7 + $0x70] sm:$0xff]
      %v3439 = vld [vmem:[%s7 + $0x78] sm:$0xff]
      %v3440 = vld [vmem:[%s7 + $0x80] sm:$0xff]
      %v3441 = vld [vmem:[%s7 + $0x88] sm:$0xff]
      %v3442 = vld [vmem:[%s7 + $0x90] sm:$0xff]
      %v3443 = vld [vmem:[%s7 + $0x98] sm:$0xff]
      %v3444 = vld [vmem:[%s7 + $0xa0] sm:$0xff]
      %v3445 = vld [vmem:[%s7 + $0xa8] sm:$0xff]
      %v3446 = vld [vmem:[%s7 + $0xb0] sm:$0xff]
      %v3447 = vld [vmem:[%s7 + $0xb8] sm:$0xff]
      %v3448 = vld [vmem:[%s7 + $0xc0] sm:$0xff]
      %v3449 = vld [vmem:[%s7 + $0xc8] sm:$0xff]
      %v3450 = vld [vmem:[%s7 + $0xd0] sm:$0xff]
      %v3451 = vld [vmem:[%s7 + $0xd8] sm:$0xff]
      %v3452 = vld [vmem:[%s7 + $0xe0] sm:$0xff]
      %v3453 = vld [vmem:[%s7 + $0xe8] sm:$0xff]
      %v3454 = vld [vmem:[%s7 + $0xf0] sm:$0xff]
      %v3455 = vld [vmem:[%s7 + $0xf8] sm:$0xff]
      %3457 = vset.pattern.permute.xlu0 0
      %3458 = vperm.xlu0 %3457, %v3424
      %v3459 = vpop.permute.xlu0 %3458
      %3462 = vset.pattern.permute.xlu0 0
      %3463 = vperm.xlu0 %3462, %v3425
      %v3464 = vpop.permute.xlu0 %3463
      %3467 = vset.pattern.permute.xlu0 0
      %3468 = vperm.xlu0 %3467, %v3426
      %v3469 = vpop.permute.xlu0 %3468
      %3472 = vset.pattern.permute.xlu0 0
      %3473 = vperm.xlu0 %3472, %v3427
      %v3474 = vpop.permute.xlu0 %3473
      %3477 = vset.pattern.permute.xlu0 0
      %3478 = vperm.xlu0 %3477, %v3428
      %v3479 = vpop.permute.xlu0 %3478
      %3482 = vset.pattern.permute.xlu0 0
      %3483 = vperm.xlu0 %3482, %v3429
      %v3484 = vpop.permute.xlu0 %3483
      %3487 = vset.pattern.permute.xlu0 0
      %3488 = vperm.xlu0 %3487, %v3430
      %v3489 = vpop.permute.xlu0 %3488
      %3492 = vset.pattern.permute.xlu0 0
      %3493 = vperm.xlu0 %3492, %v3431
      %v3494 = vpop.permute.xlu0 %3493
      %3497 = vset.pattern.permute.xlu0 0
      %3498 = vperm.xlu0 %3497, %v3432
      %v3499 = vpop.permute.xlu0 %3498
      %3502 = vset.pattern.permute.xlu0 0
      %3503 = vperm.xlu0 %3502, %v3433
      %v3504 = vpop.permute.xlu0 %3503
      %3507 = vset.pattern.permute.xlu0 0
      %3508 = vperm.xlu0 %3507, %v3434
      %v3509 = vpop.permute.xlu0 %3508
      %3512 = vset.pattern.permute.xlu0 0
      %3513 = vperm.xlu0 %3512, %v3435
      %v3514 = vpop.permute.xlu0 %3513
      %3517 = vset.pattern.permute.xlu0 0
      %3518 = vperm.xlu0 %3517, %v3436
      %v3519 = vpop.permute.xlu0 %3518
      %3522 = vset.pattern.permute.xlu0 0
      %3523 = vperm.xlu0 %3522, %v3437
      %v3524 = vpop.permute.xlu0 %3523
      %3527 = vset.pattern.permute.xlu0 0
      %3528 = vperm.xlu0 %3527, %v3438
      %v3529 = vpop.permute.xlu0 %3528
      %3532 = vset.pattern.permute.xlu0 0
      %3533 = vperm.xlu0 %3532, %v3439
      %v3534 = vpop.permute.xlu0 %3533
      %3537 = vset.pattern.permute.xlu0 0
      %3538 = vperm.xlu0 %3537, %v3440
      %v3539 = vpop.permute.xlu0 %3538
      %3542 = vset.pattern.permute.xlu0 0
      %3543 = vperm.xlu0 %3542, %v3441
      %v3544 = vpop.permute.xlu0 %3543
      %3547 = vset.pattern.permute.xlu0 0
      %3548 = vperm.xlu0 %3547, %v3442
      %v3549 = vpop.permute.xlu0 %3548
      %3552 = vset.pattern.permute.xlu0 0
      %3553 = vperm.xlu0 %3552, %v3443
      %v3554 = vpop.permute.xlu0 %3553
      %3557 = vset.pattern.permute.xlu0 0
      %3558 = vperm.xlu0 %3557, %v3444
      %v3559 = vpop.permute.xlu0 %3558
      %3562 = vset.pattern.permute.xlu0 0
      %3563 = vperm.xlu0 %3562, %v3445
      %v3564 = vpop.permute.xlu0 %3563
      %3567 = vset.pattern.permute.xlu0 0
      %3568 = vperm.xlu0 %3567, %v3446
      %v3569 = vpop.permute.xlu0 %3568
      %3572 = vset.pattern.permute.xlu0 0
      %3573 = vperm.xlu0 %3572, %v3447
      %v3574 = vpop.permute.xlu0 %3573
      %3577 = vset.pattern.permute.xlu0 0
      %3578 = vperm.xlu0 %3577, %v3448
      %v3579 = vpop.permute.xlu0 %3578
      %3582 = vset.pattern.permute.xlu0 0
      %3583 = vperm.xlu0 %3582, %v3449
      %v3584 = vpop.permute.xlu0 %3583
      %3587 = vset.pattern.permute.xlu0 0
      %3588 = vperm.xlu0 %3587, %v3450
      %v3589 = vpop.permute.xlu0 %3588
      %3592 = vset.pattern.permute.xlu0 0
      %3593 = vperm.xlu0 %3592, %v3451
      %v3594 = vpop.permute.xlu0 %3593
      %3597 = vset.pattern.permute.xlu0 0
      %3598 = vperm.xlu0 %3597, %v3452
      %v3599 = vpop.permute.xlu0 %3598
      %3602 = vset.pattern.permute.xlu0 0
      %3603 = vperm.xlu0 %3602, %v3453
      %v3604 = vpop.permute.xlu0 %3603
      %3607 = vset.pattern.permute.xlu0 0
      %3608 = vperm.xlu0 %3607, %v3454
      %v3609 = vpop.permute.xlu0 %3608
      %3612 = vset.pattern.permute.xlu0 0
      %3613 = vperm.xlu0 %3612, %v3455
      %v3614 = vpop.permute.xlu0 %3613
      %v3616 = vadd.f32 %v3392, %v3459
      %v3617 = vadd.f32 %v3393, %v3464
      %v3618 = vadd.f32 %v3394, %v3469
      %v3619 = vadd.f32 %v3395, %v3474
      %v3620 = vadd.f32 %v3396, %v3479
      %v3621 = vadd.f32 %v3397, %v3484
      %v3622 = vadd.f32 %v3398, %v3489
      %v3623 = vadd.f32 %v3399, %v3494
      %v3624 = vadd.f32 %v3400, %v3499
      %v3625 = vadd.f32 %v3401, %v3504
      %v3626 = vadd.f32 %v3402, %v3509
      %v3627 = vadd.f32 %v3403, %v3514
      %v3628 = vadd.f32 %v3404, %v3519
      %v3629 = vadd.f32 %v3405, %v3524
      %v3630 = vadd.f32 %v3406, %v3529
      %v3631 = vadd.f32 %v3407, %v3534
      %v3632 = vadd.f32 %v3408, %v3539
      %v3633 = vadd.f32 %v3409, %v3544
      %v3634 = vadd.f32 %v3410, %v3549
      %v3635 = vadd.f32 %v3411, %v3554
      %v3636 = vadd.f32 %v3412, %v3559
      %v3637 = vadd.f32 %v3413, %v3564
      %v3638 = vadd.f32 %v3414, %v3569
      %v3639 = vadd.f32 %v3415, %v3574
      %v3640 = vadd.f32 %v3416, %v3579
      %v3641 = vadd.f32 %v3417, %v3584
      %v3642 = vadd.f32 %v3418, %v3589
      %v3643 = vadd.f32 %v3419, %v3594
      %v3644 = vadd.f32 %v3420, %v3599
      %v3645 = vadd.f32 %v3421, %v3604
      %v3646 = vadd.f32 %v3422, %v3609
      %v3647 = vadd.f32 %v3423, %v3614
      %v3648 = vmax.f32 %v3616, 0.0
      %v3649 = vmax.f32 %v3617, 0.0
      %v3650 = vmax.f32 %v3618, 0.0
      %v3651 = vmax.f32 %v3619, 0.0
      %v3652 = vmax.f32 %v3620, 0.0
      %v3653 = vmax.f32 %v3621, 0.0
      %v3654 = vmax.f32 %v3622, 0.0
      %v3655 = vmax.f32 %v3623, 0.0
      %v3656 = vmax.f32 %v3624, 0.0
      %v3657 = vmax.f32 %v3625, 0.0
      %v3658 = vmax.f32 %v3626, 0.0
      %v3659 = vmax.f32 %v3627, 0.0
      %v3660 = vmax.f32 %v3628, 0.0
      %v3661 = vmax.f32 %v3629, 0.0
      %v3662 = vmax.f32 %v3630, 0.0
      %v3663 = vmax.f32 %v3631, 0.0
      %v3664 = vmax.f32 %v3632, 0.0
      %v3665 = vmax.f32 %v3633, 0.0
      %v3666 = vmax.f32 %v3634, 0.0
      %v3667 = vmax.f32 %v3635, 0.0
      %v3668 = vmax.f32 %v3636, 0.0
      %v3669 = vmax.f32 %v3637, 0.0
      %v3670 = vmax.f32 %v3638, 0.0
      %v3671 = vmax.f32 %v3639, 0.0
      %v3672 = vmax.f32 %v3640, 0.0
      %v3673 = vmax.f32 %v3641, 0.0
      %v3674 = vmax.f32 %v3642, 0.0
      %v3675 = vmax.f32 %v3643, 0.0
      %v3676 = vmax.f32 %v3644, 0.0
      %v3677 = vmax.f32 %v3645, 0.0
      %v3678 = vmax.f32 %v3646, 0.0
      %v3679 = vmax.f32 %v3647, 0.0
      %v3680 = vld [vmem:[%s8] sm:$0xff]
      %v3681 = vld [vmem:[%s8 + $0x8] sm:$0xff]
      %v3682 = vld [vmem:[%s8 + $0x10] sm:$0xff]
      %v3683 = vld [vmem:[%s8 + $0x18] sm:$0xff]
      %v3684 = vld [vmem:[%s8 + $0x20] sm:$0xff]
      %v3685 = vld [vmem:[%s8 + $0x28] sm:$0xff]
      %v3686 = vld [vmem:[%s8 + $0x30] sm:$0xff]
      %v3687 = vld [vmem:[%s8 + $0x38] sm:$0xff]
      %v3688 = vld [vmem:[%s8 + $0x40] sm:$0xff]
      %v3689 = vld [vmem:[%s8 + $0x48] sm:$0xff]
      %v3690 = vld [vmem:[%s8 + $0x50] sm:$0xff]
      %v3691 = vld [vmem:[%s8 + $0x58] sm:$0xff]
      %v3692 = vld [vmem:[%s8 + $0x60] sm:$0xff]
      %v3693 = vld [vmem:[%s8 + $0x68] sm:$0xff]
      %v3694 = vld [vmem:[%s8 + $0x70] sm:$0xff]
      %v3695 = vld [vmem:[%s8 + $0x78] sm:$0xff]
      %v3696 = vld [vmem:[%s8 + $0x80] sm:$0xff]
      %v3697 = vld [vmem:[%s8 + $0x88] sm:$0xff]
      %v3698 = vld [vmem:[%s8 + $0x90] sm:$0xff]
      %v3699 = vld [vmem:[%s8 + $0x98] sm:$0xff]
      %v3700 = vld [vmem:[%s8 + $0xa0] sm:$0xff]
      %v3701 = vld [vmem:[%s8 + $0xa8] sm:$0xff]
      %v3702 = vld [vmem:[%s8 + $0xb0] sm:$0xff]
      %v3703 = vld [vmem:[%s8 + $0xb8] sm:$0xff]
      %v3704 = vld [vmem:[%s8 + $0xc0] sm:$0xff]
      %v3705 = vld [vmem:[%s8 + $0xc8] sm:$0xff]
      %v3706 = vld [vmem:[%s8 + $0xd0] sm:$0xff]
      %v3707 = vld [vmem:[%s8 + $0xd8] sm:$0xff]
      %v3708 = vld [vmem:[%s8 + $0xe0] sm:$0xff]
      %v3709 = vld [vmem:[%s8 + $0xe8] sm:$0xff]
      %v3710 = vld [vmem:[%s8 + $0xf0] sm:$0xff]
      %v3711 = vld [vmem:[%s8 + $0xf8] sm:$0xff]
      %v3712 = vld [vmem:[%s8 + $0x100] sm:$0xff]
      %v3713 = vld [vmem:[%s8 + $0x108] sm:$0xff]
      %v3714 = vld [vmem:[%s8 + $0x110] sm:$0xff]
      %v3715 = vld [vmem:[%s8 + $0x118] sm:$0xff]
      %v3716 = vld [vmem:[%s8 + $0x120] sm:$0xff]
      %v3717 = vld [vmem:[%s8 + $0x128] sm:$0xff]
      %v3718 = vld [vmem:[%s8 + $0x130] sm:$0xff]
      %v3719 = vld [vmem:[%s8 + $0x138] sm:$0xff]
      %v3720 = vld [vmem:[%s8 + $0x140] sm:$0xff]
      %v3721 = vld [vmem:[%s8 + $0x148] sm:$0xff]
      %v3722 = vld [vmem:[%s8 + $0x150] sm:$0xff]
      %v3723 = vld [vmem:[%s8 + $0x158] sm:$0xff]
      %v3724 = vld [vmem:[%s8 + $0x160] sm:$0xff]
      %v3725 = vld [vmem:[%s8 + $0x168] sm:$0xff]
      %v3726 = vld [vmem:[%s8 + $0x170] sm:$0xff]
      %v3727 = vld [vmem:[%s8 + $0x178] sm:$0xff]
      %v3728 = vld [vmem:[%s8 + $0x180] sm:$0xff]
      %v3729 = vld [vmem:[%s8 + $0x188] sm:$0xff]
      %v3730 = vld [vmem:[%s8 + $0x190] sm:$0xff]
      %v3731 = vld [vmem:[%s8 + $0x198] sm:$0xff]
      %v3732 = vld [vmem:[%s8 + $0x1a0] sm:$0xff]
      %v3733 = vld [vmem:[%s8 + $0x1a8] sm:$0xff]
      %v3734 = vld [vmem:[%s8 + $0x1b0] sm:$0xff]
      %v3735 = vld [vmem:[%s8 + $0x1b8] sm:$0xff]
      %v3736 = vld [vmem:[%s8 + $0x1c0] sm:$0xff]
      %v3737 = vld [vmem:[%s8 + $0x1c8] sm:$0xff]
      %v3738 = vld [vmem:[%s8 + $0x1d0] sm:$0xff]
      %v3739 = vld [vmem:[%s8 + $0x1d8] sm:$0xff]
      %v3740 = vld [vmem:[%s8 + $0x1e0] sm:$0xff]
      %v3741 = vld [vmem:[%s8 + $0x1e8] sm:$0xff]
      %v3742 = vld [vmem:[%s8 + $0x1f0] sm:$0xff]
      %v3743 = vld [vmem:[%s8 + $0x1f8] sm:$0xff]
      %v3744 = vld [vmem:[%s8 + $0x200] sm:$0xff]
      %v3745 = vld [vmem:[%s8 + $0x208] sm:$0xff]
      %v3746 = vld [vmem:[%s8 + $0x210] sm:$0xff]
      %v3747 = vld [vmem:[%s8 + $0x218] sm:$0xff]
      %v3748 = vld [vmem:[%s8 + $0x220] sm:$0xff]
      %v3749 = vld [vmem:[%s8 + $0x228] sm:$0xff]
      %v3750 = vld [vmem:[%s8 + $0x230] sm:$0xff]
      %v3751 = vld [vmem:[%s8 + $0x238] sm:$0xff]
      %v3752 = vld [vmem:[%s8 + $0x240] sm:$0xff]
      %v3753 = vld [vmem:[%s8 + $0x248] sm:$0xff]
      %v3754 = vld [vmem:[%s8 + $0x250] sm:$0xff]
      %v3755 = vld [vmem:[%s8 + $0x258] sm:$0xff]
      %v3756 = vld [vmem:[%s8 + $0x260] sm:$0xff]
      %v3757 = vld [vmem:[%s8 + $0x268] sm:$0xff]
      %v3758 = vld [vmem:[%s8 + $0x270] sm:$0xff]
      %v3759 = vld [vmem:[%s8 + $0x278] sm:$0xff]
      %v3760 = vld [vmem:[%s8 + $0x280] sm:$0xff]
      %v3761 = vld [vmem:[%s8 + $0x288] sm:$0xff]
      %v3762 = vld [vmem:[%s8 + $0x290] sm:$0xff]
      %v3763 = vld [vmem:[%s8 + $0x298] sm:$0xff]
      %v3764 = vld [vmem:[%s8 + $0x2a0] sm:$0xff]
      %v3765 = vld [vmem:[%s8 + $0x2a8] sm:$0xff]
      %v3766 = vld [vmem:[%s8 + $0x2b0] sm:$0xff]
      %v3767 = vld [vmem:[%s8 + $0x2b8] sm:$0xff]
      %v3768 = vld [vmem:[%s8 + $0x2c0] sm:$0xff]
      %v3769 = vld [vmem:[%s8 + $0x2c8] sm:$0xff]
      %v3770 = vld [vmem:[%s8 + $0x2d0] sm:$0xff]
      %v3771 = vld [vmem:[%s8 + $0x2d8] sm:$0xff]
      %v3772 = vld [vmem:[%s8 + $0x2e0] sm:$0xff]
      %v3773 = vld [vmem:[%s8 + $0x2e8] sm:$0xff]
      %v3774 = vld [vmem:[%s8 + $0x2f0] sm:$0xff]
      %v3775 = vld [vmem:[%s8 + $0x2f8] sm:$0xff]
      %v3776 = vld [vmem:[%s8 + $0x300] sm:$0xff]
      %v3777 = vld [vmem:[%s8 + $0x308] sm:$0xff]
      %v3778 = vld [vmem:[%s8 + $0x310] sm:$0xff]
      %v3779 = vld [vmem:[%s8 + $0x318] sm:$0xff]
      %v3780 = vld [vmem:[%s8 + $0x320] sm:$0xff]
      %v3781 = vld [vmem:[%s8 + $0x328] sm:$0xff]
      %v3782 = vld [vmem:[%s8 + $0x330] sm:$0xff]
      %v3783 = vld [vmem:[%s8 + $0x338] sm:$0xff]
      %v3784 = vld [vmem:[%s8 + $0x340] sm:$0xff]
      %v3785 = vld [vmem:[%s8 + $0x348] sm:$0xff]
      %v3786 = vld [vmem:[%s8 + $0x350] sm:$0xff]
      %v3787 = vld [vmem:[%s8 + $0x358] sm:$0xff]
      %v3788 = vld [vmem:[%s8 + $0x360] sm:$0xff]
      %v3789 = vld [vmem:[%s8 + $0x368] sm:$0xff]
      %v3790 = vld [vmem:[%s8 + $0x370] sm:$0xff]
      %v3791 = vld [vmem:[%s8 + $0x378] sm:$0xff]
      %v3792 = vld [vmem:[%s8 + $0x380] sm:$0xff]
      %v3793 = vld [vmem:[%s8 + $0x388] sm:$0xff]
      %v3794 = vld [vmem:[%s8 + $0x390] sm:$0xff]
      %v3795 = vld [vmem:[%s8 + $0x398] sm:$0xff]
      %v3796 = vld [vmem:[%s8 + $0x3a0] sm:$0xff]
      %v3797 = vld [vmem:[%s8 + $0x3a8] sm:$0xff]
      %v3798 = vld [vmem:[%s8 + $0x3b0] sm:$0xff]
      %v3799 = vld [vmem:[%s8 + $0x3b8] sm:$0xff]
      %v3800 = vld [vmem:[%s8 + $0x3c0] sm:$0xff]
      %v3801 = vld [vmem:[%s8 + $0x3c8] sm:$0xff]
      %v3802 = vld [vmem:[%s8 + $0x3d0] sm:$0xff]
      %v3803 = vld [vmem:[%s8 + $0x3d8] sm:$0xff]
      %v3804 = vld [vmem:[%s8 + $0x3e0] sm:$0xff]
      %v3805 = vld [vmem:[%s8 + $0x3e8] sm:$0xff]
      %v3806 = vld [vmem:[%s8 + $0x3f0] sm:$0xff]
      %v3807 = vld [vmem:[%s8 + $0x3f8] sm:$0xff]
      %v3808 = vld [vmem:[%s8 + $0x400] sm:$0xff]
      %v3809 = vld [vmem:[%s8 + $0x408] sm:$0xff]
      %v3810 = vld [vmem:[%s8 + $0x410] sm:$0xff]
      %v3811 = vld [vmem:[%s8 + $0x418] sm:$0xff]
      %v3812 = vld [vmem:[%s8 + $0x420] sm:$0xff]
      %v3813 = vld [vmem:[%s8 + $0x428] sm:$0xff]
      %v3814 = vld [vmem:[%s8 + $0x430] sm:$0xff]
      %v3815 = vld [vmem:[%s8 + $0x438] sm:$0xff]
      %v3816 = vld [vmem:[%s8 + $0x440] sm:$0xff]
      %v3817 = vld [vmem:[%s8 + $0x448] sm:$0xff]
      %v3818 = vld [vmem:[%s8 + $0x450] sm:$0xff]
      %v3819 = vld [vmem:[%s8 + $0x458] sm:$0xff]
      %v3820 = vld [vmem:[%s8 + $0x460] sm:$0xff]
      %v3821 = vld [vmem:[%s8 + $0x468] sm:$0xff]
      %v3822 = vld [vmem:[%s8 + $0x470] sm:$0xff]
      %v3823 = vld [vmem:[%s8 + $0x478] sm:$0xff]
      %v3824 = vld [vmem:[%s8 + $0x480] sm:$0xff]
      %v3825 = vld [vmem:[%s8 + $0x488] sm:$0xff]
      %v3826 = vld [vmem:[%s8 + $0x490] sm:$0xff]
      %v3827 = vld [vmem:[%s8 + $0x498] sm:$0xff]
      %v3828 = vld [vmem:[%s8 + $0x4a0] sm:$0xff]
      %v3829 = vld [vmem:[%s8 + $0x4a8] sm:$0xff]
      %v3830 = vld [vmem:[%s8 + $0x4b0] sm:$0xff]
      %v3831 = vld [vmem:[%s8 + $0x4b8] sm:$0xff]
      %v3832 = vld [vmem:[%s8 + $0x4c0] sm:$0xff]
      %v3833 = vld [vmem:[%s8 + $0x4c8] sm:$0xff]
      %v3834 = vld [vmem:[%s8 + $0x4d0] sm:$0xff]
      %v3835 = vld [vmem:[%s8 + $0x4d8] sm:$0xff]
      %v3836 = vld [vmem:[%s8 + $0x4e0] sm:$0xff]
      %v3837 = vld [vmem:[%s8 + $0x4e8] sm:$0xff]
      %v3838 = vld [vmem:[%s8 + $0x4f0] sm:$0xff]
      %v3839 = vld [vmem:[%s8 + $0x4f8] sm:$0xff]
      %v3840 = vld [vmem:[%s8 + $0x500] sm:$0xff]
      %v3841 = vld [vmem:[%s8 + $0x508] sm:$0xff]
      %v3842 = vld [vmem:[%s8 + $0x510] sm:$0xff]
      %v3843 = vld [vmem:[%s8 + $0x518] sm:$0xff]
      %v3844 = vld [vmem:[%s8 + $0x520] sm:$0xff]
      %v3845 = vld [vmem:[%s8 + $0x528] sm:$0xff]
      %v3846 = vld [vmem:[%s8 + $0x530] sm:$0xff]
      %v3847 = vld [vmem:[%s8 + $0x538] sm:$0xff]
      %v3848 = vld [vmem:[%s8 + $0x540] sm:$0xff]
      %v3849 = vld [vmem:[%s8 + $0x548] sm:$0xff]
      %v3850 = vld [vmem:[%s8 + $0x550] sm:$0xff]
      %v3851 = vld [vmem:[%s8 + $0x558] sm:$0xff]
      %v3852 = vld [vmem:[%s8 + $0x560] sm:$0xff]
      %v3853 = vld [vmem:[%s8 + $0x568] sm:$0xff]
      %v3854 = vld [vmem:[%s8 + $0x570] sm:$0xff]
      %v3855 = vld [vmem:[%s8 + $0x578] sm:$0xff]
      %v3856 = vld [vmem:[%s8 + $0x580] sm:$0xff]
      %v3857 = vld [vmem:[%s8 + $0x588] sm:$0xff]
      %v3858 = vld [vmem:[%s8 + $0x590] sm:$0xff]
      %v3859 = vld [vmem:[%s8 + $0x598] sm:$0xff]
      %v3860 = vld [vmem:[%s8 + $0x5a0] sm:$0xff]
      %v3861 = vld [vmem:[%s8 + $0x5a8] sm:$0xff]
      %v3862 = vld [vmem:[%s8 + $0x5b0] sm:$0xff]
      %v3863 = vld [vmem:[%s8 + $0x5b8] sm:$0xff]
      %v3864 = vld [vmem:[%s8 + $0x5c0] sm:$0xff]
      %v3865 = vld [vmem:[%s8 + $0x5c8] sm:$0xff]
      %v3866 = vld [vmem:[%s8 + $0x5d0] sm:$0xff]
      %v3867 = vld [vmem:[%s8 + $0x5d8] sm:$0xff]
      %v3868 = vld [vmem:[%s8 + $0x5e0] sm:$0xff]
      %v3869 = vld [vmem:[%s8 + $0x5e8] sm:$0xff]
      %v3870 = vld [vmem:[%s8 + $0x5f0] sm:$0xff]
      %v3871 = vld [vmem:[%s8 + $0x5f8] sm:$0xff]
      %v3872 = vld [vmem:[%s8 + $0x600] sm:$0xff]
      %v3873 = vld [vmem:[%s8 + $0x608] sm:$0xff]
      %v3874 = vld [vmem:[%s8 + $0x610] sm:$0xff]
      %v3875 = vld [vmem:[%s8 + $0x618] sm:$0xff]
      %v3876 = vld [vmem:[%s8 + $0x620] sm:$0xff]
      %v3877 = vld [vmem:[%s8 + $0x628] sm:$0xff]
      %v3878 = vld [vmem:[%s8 + $0x630] sm:$0xff]
      %v3879 = vld [vmem:[%s8 + $0x638] sm:$0xff]
      %v3880 = vld [vmem:[%s8 + $0x640] sm:$0xff]
      %v3881 = vld [vmem:[%s8 + $0x648] sm:$0xff]
      %v3882 = vld [vmem:[%s8 + $0x650] sm:$0xff]
      %v3883 = vld [vmem:[%s8 + $0x658] sm:$0xff]
      %v3884 = vld [vmem:[%s8 + $0x660] sm:$0xff]
      %v3885 = vld [vmem:[%s8 + $0x668] sm:$0xff]
      %v3886 = vld [vmem:[%s8 + $0x670] sm:$0xff]
      %v3887 = vld [vmem:[%s8 + $0x678] sm:$0xff]
      %v3888 = vld [vmem:[%s8 + $0x680] sm:$0xff]
      %v3889 = vld [vmem:[%s8 + $0x688] sm:$0xff]
      %v3890 = vld [vmem:[%s8 + $0x690] sm:$0xff]
      %v3891 = vld [vmem:[%s8 + $0x698] sm:$0xff]
      %v3892 = vld [vmem:[%s8 + $0x6a0] sm:$0xff]
      %v3893 = vld [vmem:[%s8 + $0x6a8] sm:$0xff]
      %v3894 = vld [vmem:[%s8 + $0x6b0] sm:$0xff]
      %v3895 = vld [vmem:[%s8 + $0x6b8] sm:$0xff]
      %v3896 = vld [vmem:[%s8 + $0x6c0] sm:$0xff]
      %v3897 = vld [vmem:[%s8 + $0x6c8] sm:$0xff]
      %v3898 = vld [vmem:[%s8 + $0x6d0] sm:$0xff]
      %v3899 = vld [vmem:[%s8 + $0x6d8] sm:$0xff]
      %v3900 = vld [vmem:[%s8 + $0x6e0] sm:$0xff]
      %v3901 = vld [vmem:[%s8 + $0x6e8] sm:$0xff]
      %v3902 = vld [vmem:[%s8 + $0x6f0] sm:$0xff]
      %v3903 = vld [vmem:[%s8 + $0x6f8] sm:$0xff]
      %v3904 = vld [vmem:[%s8 + $0x700] sm:$0xff]
      %v3905 = vld [vmem:[%s8 + $0x708] sm:$0xff]
      %v3906 = vld [vmem:[%s8 + $0x710] sm:$0xff]
      %v3907 = vld [vmem:[%s8 + $0x718] sm:$0xff]
      %v3908 = vld [vmem:[%s8 + $0x720] sm:$0xff]
      %v3909 = vld [vmem:[%s8 + $0x728] sm:$0xff]
      %v3910 = vld [vmem:[%s8 + $0x730] sm:$0xff]
      %v3911 = vld [vmem:[%s8 + $0x738] sm:$0xff]
      %v3912 = vld [vmem:[%s8 + $0x740] sm:$0xff]
      %v3913 = vld [vmem:[%s8 + $0x748] sm:$0xff]
      %v3914 = vld [vmem:[%s8 + $0x750] sm:$0xff]
      %v3915 = vld [vmem:[%s8 + $0x758] sm:$0xff]
      %v3916 = vld [vmem:[%s8 + $0x760] sm:$0xff]
      %v3917 = vld [vmem:[%s8 + $0x768] sm:$0xff]
      %v3918 = vld [vmem:[%s8 + $0x770] sm:$0xff]
      %v3919 = vld [vmem:[%s8 + $0x778] sm:$0xff]
      %v3920 = vld [vmem:[%s8 + $0x780] sm:$0xff]
      %v3921 = vld [vmem:[%s8 + $0x788] sm:$0xff]
      %v3922 = vld [vmem:[%s8 + $0x790] sm:$0xff]
      %v3923 = vld [vmem:[%s8 + $0x798] sm:$0xff]
      %v3924 = vld [vmem:[%s8 + $0x7a0] sm:$0xff]
      %v3925 = vld [vmem:[%s8 + $0x7a8] sm:$0xff]
      %v3926 = vld [vmem:[%s8 + $0x7b0] sm:$0xff]
      %v3927 = vld [vmem:[%s8 + $0x7b8] sm:$0xff]
      %v3928 = vld [vmem:[%s8 + $0x7c0] sm:$0xff]
      %v3929 = vld [vmem:[%s8 + $0x7c8] sm:$0xff]
      %v3930 = vld [vmem:[%s8 + $0x7d0] sm:$0xff]
      %v3931 = vld [vmem:[%s8 + $0x7d8] sm:$0xff]
      %v3932 = vld [vmem:[%s8 + $0x7e0] sm:$0xff]
      %v3933 = vld [vmem:[%s8 + $0x7e8] sm:$0xff]
      %v3934 = vld [vmem:[%s8 + $0x7f0] sm:$0xff]
      %v3935 = vld [vmem:[%s8 + $0x7f8] sm:$0xff]
      %v3936 = vld [vmem:[%s8 + $0x800] sm:$0xff]
      %v3937 = vld [vmem:[%s8 + $0x808] sm:$0xff]
      %v3938 = vld [vmem:[%s8 + $0x810] sm:$0xff]
      %v3939 = vld [vmem:[%s8 + $0x818] sm:$0xff]
      %v3940 = vld [vmem:[%s8 + $0x820] sm:$0xff]
      %v3941 = vld [vmem:[%s8 + $0x828] sm:$0xff]
      %v3942 = vld [vmem:[%s8 + $0x830] sm:$0xff]
      %v3943 = vld [vmem:[%s8 + $0x838] sm:$0xff]
      %v3944 = vld [vmem:[%s8 + $0x840] sm:$0xff]
      %v3945 = vld [vmem:[%s8 + $0x848] sm:$0xff]
      %v3946 = vld [vmem:[%s8 + $0x850] sm:$0xff]
      %v3947 = vld [vmem:[%s8 + $0x858] sm:$0xff]
      %v3948 = vld [vmem:[%s8 + $0x860] sm:$0xff]
      %v3949 = vld [vmem:[%s8 + $0x868] sm:$0xff]
      %v3950 = vld [vmem:[%s8 + $0x870] sm:$0xff]
      %v3951 = vld [vmem:[%s8 + $0x878] sm:$0xff]
      %v3952 = vld [vmem:[%s8 + $0x880] sm:$0xff]
      %v3953 = vld [vmem:[%s8 + $0x888] sm:$0xff]
      %v3954 = vld [vmem:[%s8 + $0x890] sm:$0xff]
      %v3955 = vld [vmem:[%s8 + $0x898] sm:$0xff]
      %v3956 = vld [vmem:[%s8 + $0x8a0] sm:$0xff]
      %v3957 = vld [vmem:[%s8 + $0x8a8] sm:$0xff]
      %v3958 = vld [vmem:[%s8 + $0x8b0] sm:$0xff]
      %v3959 = vld [vmem:[%s8 + $0x8b8] sm:$0xff]
      %v3960 = vld [vmem:[%s8 + $0x8c0] sm:$0xff]
      %v3961 = vld [vmem:[%s8 + $0x8c8] sm:$0xff]
      %v3962 = vld [vmem:[%s8 + $0x8d0] sm:$0xff]
      %v3963 = vld [vmem:[%s8 + $0x8d8] sm:$0xff]
      %v3964 = vld [vmem:[%s8 + $0x8e0] sm:$0xff]
      %v3965 = vld [vmem:[%s8 + $0x8e8] sm:$0xff]
      %v3966 = vld [vmem:[%s8 + $0x8f0] sm:$0xff]
      %v3967 = vld [vmem:[%s8 + $0x8f8] sm:$0xff]
      %v3968 = vld [vmem:[%s8 + $0x900] sm:$0xff]
      %v3969 = vld [vmem:[%s8 + $0x908] sm:$0xff]
      %v3970 = vld [vmem:[%s8 + $0x910] sm:$0xff]
      %v3971 = vld [vmem:[%s8 + $0x918] sm:$0xff]
      %v3972 = vld [vmem:[%s8 + $0x920] sm:$0xff]
      %v3973 = vld [vmem:[%s8 + $0x928] sm:$0xff]
      %v3974 = vld [vmem:[%s8 + $0x930] sm:$0xff]
      %v3975 = vld [vmem:[%s8 + $0x938] sm:$0xff]
      %v3976 = vld [vmem:[%s8 + $0x940] sm:$0xff]
      %v3977 = vld [vmem:[%s8 + $0x948] sm:$0xff]
      %v3978 = vld [vmem:[%s8 + $0x950] sm:$0xff]
      %v3979 = vld [vmem:[%s8 + $0x958] sm:$0xff]
      %v3980 = vld [vmem:[%s8 + $0x960] sm:$0xff]
      %v3981 = vld [vmem:[%s8 + $0x968] sm:$0xff]
      %v3982 = vld [vmem:[%s8 + $0x970] sm:$0xff]
      %v3983 = vld [vmem:[%s8 + $0x978] sm:$0xff]
      %v3984 = vld [vmem:[%s8 + $0x980] sm:$0xff]
      %v3985 = vld [vmem:[%s8 + $0x988] sm:$0xff]
      %v3986 = vld [vmem:[%s8 + $0x990] sm:$0xff]
      %v3987 = vld [vmem:[%s8 + $0x998] sm:$0xff]
      %v3988 = vld [vmem:[%s8 + $0x9a0] sm:$0xff]
      %v3989 = vld [vmem:[%s8 + $0x9a8] sm:$0xff]
      %v3990 = vld [vmem:[%s8 + $0x9b0] sm:$0xff]
      %v3991 = vld [vmem:[%s8 + $0x9b8] sm:$0xff]
      %v3992 = vld [vmem:[%s8 + $0x9c0] sm:$0xff]
      %v3993 = vld [vmem:[%s8 + $0x9c8] sm:$0xff]
      %v3994 = vld [vmem:[%s8 + $0x9d0] sm:$0xff]
      %v3995 = vld [vmem:[%s8 + $0x9d8] sm:$0xff]
      %v3996 = vld [vmem:[%s8 + $0x9e0] sm:$0xff]
      %v3997 = vld [vmem:[%s8 + $0x9e8] sm:$0xff]
      %v3998 = vld [vmem:[%s8 + $0x9f0] sm:$0xff]
      %v3999 = vld [vmem:[%s8 + $0x9f8] sm:$0xff]
      %v4000 = vld [vmem:[%s8 + $0xa00] sm:$0xff]
      %v4001 = vld [vmem:[%s8 + $0xa08] sm:$0xff]
      %v4002 = vld [vmem:[%s8 + $0xa10] sm:$0xff]
      %v4003 = vld [vmem:[%s8 + $0xa18] sm:$0xff]
      %v4004 = vld [vmem:[%s8 + $0xa20] sm:$0xff]
      %v4005 = vld [vmem:[%s8 + $0xa28] sm:$0xff]
      %v4006 = vld [vmem:[%s8 + $0xa30] sm:$0xff]
      %v4007 = vld [vmem:[%s8 + $0xa38] sm:$0xff]
      %v4008 = vld [vmem:[%s8 + $0xa40] sm:$0xff]
      %v4009 = vld [vmem:[%s8 + $0xa48] sm:$0xff]
      %v4010 = vld [vmem:[%s8 + $0xa50] sm:$0xff]
      %v4011 = vld [vmem:[%s8 + $0xa58] sm:$0xff]
      %v4012 = vld [vmem:[%s8 + $0xa60] sm:$0xff]
      %v4013 = vld [vmem:[%s8 + $0xa68] sm:$0xff]
      %v4014 = vld [vmem:[%s8 + $0xa70] sm:$0xff]
      %v4015 = vld [vmem:[%s8 + $0xa78] sm:$0xff]
      %v4016 = vld [vmem:[%s8 + $0xa80] sm:$0xff]
      %v4017 = vld [vmem:[%s8 + $0xa88] sm:$0xff]
      %v4018 = vld [vmem:[%s8 + $0xa90] sm:$0xff]
      %v4019 = vld [vmem:[%s8 + $0xa98] sm:$0xff]
      %v4020 = vld [vmem:[%s8 + $0xaa0] sm:$0xff]
      %v4021 = vld [vmem:[%s8 + $0xaa8] sm:$0xff]
      %v4022 = vld [vmem:[%s8 + $0xab0] sm:$0xff]
      %v4023 = vld [vmem:[%s8 + $0xab8] sm:$0xff]
      %v4024 = vld [vmem:[%s8 + $0xac0] sm:$0xff]
      %v4025 = vld [vmem:[%s8 + $0xac8] sm:$0xff]
      %v4026 = vld [vmem:[%s8 + $0xad0] sm:$0xff]
      %v4027 = vld [vmem:[%s8 + $0xad8] sm:$0xff]
      %v4028 = vld [vmem:[%s8 + $0xae0] sm:$0xff]
      %v4029 = vld [vmem:[%s8 + $0xae8] sm:$0xff]
      %v4030 = vld [vmem:[%s8 + $0xaf0] sm:$0xff]
      %v4031 = vld [vmem:[%s8 + $0xaf8] sm:$0xff]
      %v4032 = vld [vmem:[%s8 + $0xb00] sm:$0xff]
      %v4033 = vld [vmem:[%s8 + $0xb08] sm:$0xff]
      %v4034 = vld [vmem:[%s8 + $0xb10] sm:$0xff]
      %v4035 = vld [vmem:[%s8 + $0xb18] sm:$0xff]
      %v4036 = vld [vmem:[%s8 + $0xb20] sm:$0xff]
      %v4037 = vld [vmem:[%s8 + $0xb28] sm:$0xff]
      %v4038 = vld [vmem:[%s8 + $0xb30] sm:$0xff]
      %v4039 = vld [vmem:[%s8 + $0xb38] sm:$0xff]
      %v4040 = vld [vmem:[%s8 + $0xb40] sm:$0xff]
      %v4041 = vld [vmem:[%s8 + $0xb48] sm:$0xff]
      %v4042 = vld [vmem:[%s8 + $0xb50] sm:$0xff]
      %v4043 = vld [vmem:[%s8 + $0xb58] sm:$0xff]
      %v4044 = vld [vmem:[%s8 + $0xb60] sm:$0xff]
      %v4045 = vld [vmem:[%s8 + $0xb68] sm:$0xff]
      %v4046 = vld [vmem:[%s8 + $0xb70] sm:$0xff]
      %v4047 = vld [vmem:[%s8 + $0xb78] sm:$0xff]
      %v4048 = vld [vmem:[%s8 + $0xb80] sm:$0xff]
      %v4049 = vld [vmem:[%s8 + $0xb88] sm:$0xff]
      %v4050 = vld [vmem:[%s8 + $0xb90] sm:$0xff]
      %v4051 = vld [vmem:[%s8 + $0xb98] sm:$0xff]
      %v4052 = vld [vmem:[%s8 + $0xba0] sm:$0xff]
      %v4053 = vld [vmem:[%s8 + $0xba8] sm:$0xff]
      %v4054 = vld [vmem:[%s8 + $0xbb0] sm:$0xff]
      %v4055 = vld [vmem:[%s8 + $0xbb8] sm:$0xff]
      %v4056 = vld [vmem:[%s8 + $0xbc0] sm:$0xff]
      %v4057 = vld [vmem:[%s8 + $0xbc8] sm:$0xff]
      %v4058 = vld [vmem:[%s8 + $0xbd0] sm:$0xff]
      %v4059 = vld [vmem:[%s8 + $0xbd8] sm:$0xff]
      %v4060 = vld [vmem:[%s8 + $0xbe0] sm:$0xff]
      %v4061 = vld [vmem:[%s8 + $0xbe8] sm:$0xff]
      %v4062 = vld [vmem:[%s8 + $0xbf0] sm:$0xff]
      %v4063 = vld [vmem:[%s8 + $0xbf8] sm:$0xff]
      %v4064 = vld [vmem:[%s8 + $0xc00] sm:$0xff]
      %v4065 = vld [vmem:[%s8 + $0xc08] sm:$0xff]
      %v4066 = vld [vmem:[%s8 + $0xc10] sm:$0xff]
      %v4067 = vld [vmem:[%s8 + $0xc18] sm:$0xff]
      %v4068 = vld [vmem:[%s8 + $0xc20] sm:$0xff]
      %v4069 = vld [vmem:[%s8 + $0xc28] sm:$0xff]
      %v4070 = vld [vmem:[%s8 + $0xc30] sm:$0xff]
      %v4071 = vld [vmem:[%s8 + $0xc38] sm:$0xff]
      %v4072 = vld [vmem:[%s8 + $0xc40] sm:$0xff]
      %v4073 = vld [vmem:[%s8 + $0xc48] sm:$0xff]
      %v4074 = vld [vmem:[%s8 + $0xc50] sm:$0xff]
      %v4075 = vld [vmem:[%s8 + $0xc58] sm:$0xff]
      %v4076 = vld [vmem:[%s8 + $0xc60] sm:$0xff]
      %v4077 = vld [vmem:[%s8 + $0xc68] sm:$0xff]
      %v4078 = vld [vmem:[%s8 + $0xc70] sm:$0xff]
      %v4079 = vld [vmem:[%s8 + $0xc78] sm:$0xff]
      %v4080 = vld [vmem:[%s8 + $0xc80] sm:$0xff]
      %v4081 = vld [vmem:[%s8 + $0xc88] sm:$0xff]
      %v4082 = vld [vmem:[%s8 + $0xc90] sm:$0xff]
      %v4083 = vld [vmem:[%s8 + $0xc98] sm:$0xff]
      %v4084 = vld [vmem:[%s8 + $0xca0] sm:$0xff]
      %v4085 = vld [vmem:[%s8 + $0xca8] sm:$0xff]
      %v4086 = vld [vmem:[%s8 + $0xcb0] sm:$0xff]
      %v4087 = vld [vmem:[%s8 + $0xcb8] sm:$0xff]
      %v4088 = vld [vmem:[%s8 + $0xcc0] sm:$0xff]
      %v4089 = vld [vmem:[%s8 + $0xcc8] sm:$0xff]
      %v4090 = vld [vmem:[%s8 + $0xcd0] sm:$0xff]
      %v4091 = vld [vmem:[%s8 + $0xcd8] sm:$0xff]
      %v4092 = vld [vmem:[%s8 + $0xce0] sm:$0xff]
      %v4093 = vld [vmem:[%s8 + $0xce8] sm:$0xff]
      %v4094 = vld [vmem:[%s8 + $0xcf0] sm:$0xff]
      %v4095 = vld [vmem:[%s8 + $0xcf8] sm:$0xff]
      %v4096 = vld [vmem:[%s8 + $0xd00] sm:$0xff]
      %v4097 = vld [vmem:[%s8 + $0xd08] sm:$0xff]
      %v4098 = vld [vmem:[%s8 + $0xd10] sm:$0xff]
      %v4099 = vld [vmem:[%s8 + $0xd18] sm:$0xff]
      %v4100 = vld [vmem:[%s8 + $0xd20] sm:$0xff]
      %v4101 = vld [vmem:[%s8 + $0xd28] sm:$0xff]
      %v4102 = vld [vmem:[%s8 + $0xd30] sm:$0xff]
      %v4103 = vld [vmem:[%s8 + $0xd38] sm:$0xff]
      %v4104 = vld [vmem:[%s8 + $0xd40] sm:$0xff]
      %v4105 = vld [vmem:[%s8 + $0xd48] sm:$0xff]
      %v4106 = vld [vmem:[%s8 + $0xd50] sm:$0xff]
      %v4107 = vld [vmem:[%s8 + $0xd58] sm:$0xff]
      %v4108 = vld [vmem:[%s8 + $0xd60] sm:$0xff]
      %v4109 = vld [vmem:[%s8 + $0xd68] sm:$0xff]
      %v4110 = vld [vmem:[%s8 + $0xd70] sm:$0xff]
      %v4111 = vld [vmem:[%s8 + $0xd78] sm:$0xff]
      %v4112 = vld [vmem:[%s8 + $0xd80] sm:$0xff]
      %v4113 = vld [vmem:[%s8 + $0xd88] sm:$0xff]
      %v4114 = vld [vmem:[%s8 + $0xd90] sm:$0xff]
      %v4115 = vld [vmem:[%s8 + $0xd98] sm:$0xff]
      %v4116 = vld [vmem:[%s8 + $0xda0] sm:$0xff]
      %v4117 = vld [vmem:[%s8 + $0xda8] sm:$0xff]
      %v4118 = vld [vmem:[%s8 + $0xdb0] sm:$0xff]
      %v4119 = vld [vmem:[%s8 + $0xdb8] sm:$0xff]
      %v4120 = vld [vmem:[%s8 + $0xdc0] sm:$0xff]
      %v4121 = vld [vmem:[%s8 + $0xdc8] sm:$0xff]
      %v4122 = vld [vmem:[%s8 + $0xdd0] sm:$0xff]
      %v4123 = vld [vmem:[%s8 + $0xdd8] sm:$0xff]
      %v4124 = vld [vmem:[%s8 + $0xde0] sm:$0xff]
      %v4125 = vld [vmem:[%s8 + $0xde8] sm:$0xff]
      %v4126 = vld [vmem:[%s8 + $0xdf0] sm:$0xff]
      %v4127 = vld [vmem:[%s8 + $0xdf8] sm:$0xff]
      %v4128 = vld [vmem:[%s8 + $0xe00] sm:$0xff]
      %v4129 = vld [vmem:[%s8 + $0xe08] sm:$0xff]
      %v4130 = vld [vmem:[%s8 + $0xe10] sm:$0xff]
      %v4131 = vld [vmem:[%s8 + $0xe18] sm:$0xff]
      %v4132 = vld [vmem:[%s8 + $0xe20] sm:$0xff]
      %v4133 = vld [vmem:[%s8 + $0xe28] sm:$0xff]
      %v4134 = vld [vmem:[%s8 + $0xe30] sm:$0xff]
      %v4135 = vld [vmem:[%s8 + $0xe38] sm:$0xff]
      %v4136 = vld [vmem:[%s8 + $0xe40] sm:$0xff]
      %v4137 = vld [vmem:[%s8 + $0xe48] sm:$0xff]
      %v4138 = vld [vmem:[%s8 + $0xe50] sm:$0xff]
      %v4139 = vld [vmem:[%s8 + $0xe58] sm:$0xff]
      %v4140 = vld [vmem:[%s8 + $0xe60] sm:$0xff]
      %v4141 = vld [vmem:[%s8 + $0xe68] sm:$0xff]
      %v4142 = vld [vmem:[%s8 + $0xe70] sm:$0xff]
      %v4143 = vld [vmem:[%s8 + $0xe78] sm:$0xff]
      %v4144 = vld [vmem:[%s8 + $0xe80] sm:$0xff]
      %v4145 = vld [vmem:[%s8 + $0xe88] sm:$0xff]
      %v4146 = vld [vmem:[%s8 + $0xe90] sm:$0xff]
      %v4147 = vld [vmem:[%s8 + $0xe98] sm:$0xff]
      %v4148 = vld [vmem:[%s8 + $0xea0] sm:$0xff]
      %v4149 = vld [vmem:[%s8 + $0xea8] sm:$0xff]
      %v4150 = vld [vmem:[%s8 + $0xeb0] sm:$0xff]
      %v4151 = vld [vmem:[%s8 + $0xeb8] sm:$0xff]
      %v4152 = vld [vmem:[%s8 + $0xec0] sm:$0xff]
      %v4153 = vld [vmem:[%s8 + $0xec8] sm:$0xff]
      %v4154 = vld [vmem:[%s8 + $0xed0] sm:$0xff]
      %v4155 = vld [vmem:[%s8 + $0xed8] sm:$0xff]
      %v4156 = vld [vmem:[%s8 + $0xee0] sm:$0xff]
      %v4157 = vld [vmem:[%s8 + $0xee8] sm:$0xff]
      %v4158 = vld [vmem:[%s8 + $0xef0] sm:$0xff]
      %v4159 = vld [vmem:[%s8 + $0xef8] sm:$0xff]
      %v4160 = vld [vmem:[%s8 + $0xf00] sm:$0xff]
      %v4161 = vld [vmem:[%s8 + $0xf08] sm:$0xff]
      %v4162 = vld [vmem:[%s8 + $0xf10] sm:$0xff]
      %v4163 = vld [vmem:[%s8 + $0xf18] sm:$0xff]
      %v4164 = vld [vmem:[%s8 + $0xf20] sm:$0xff]
      %v4165 = vld [vmem:[%s8 + $0xf28] sm:$0xff]
      %v4166 = vld [vmem:[%s8 + $0xf30] sm:$0xff]
      %v4167 = vld [vmem:[%s8 + $0xf38] sm:$0xff]
      %v4168 = vld [vmem:[%s8 + $0xf40] sm:$0xff]
      %v4169 = vld [vmem:[%s8 + $0xf48] sm:$0xff]
      %v4170 = vld [vmem:[%s8 + $0xf50] sm:$0xff]
      %v4171 = vld [vmem:[%s8 + $0xf58] sm:$0xff]
      %v4172 = vld [vmem:[%s8 + $0xf60] sm:$0xff]
      %v4173 = vld [vmem:[%s8 + $0xf68] sm:$0xff]
      %v4174 = vld [vmem:[%s8 + $0xf70] sm:$0xff]
      %v4175 = vld [vmem:[%s8 + $0xf78] sm:$0xff]
      %v4176 = vld [vmem:[%s8 + $0xf80] sm:$0xff]
      %v4177 = vld [vmem:[%s8 + $0xf88] sm:$0xff]
      %v4178 = vld [vmem:[%s8 + $0xf90] sm:$0xff]
      %v4179 = vld [vmem:[%s8 + $0xf98] sm:$0xff]
      %v4180 = vld [vmem:[%s8 + $0xfa0] sm:$0xff]
      %v4181 = vld [vmem:[%s8 + $0xfa8] sm:$0xff]
      %v4182 = vld [vmem:[%s8 + $0xfb0] sm:$0xff]
      %v4183 = vld [vmem:[%s8 + $0xfb8] sm:$0xff]
      %v4184 = vld [vmem:[%s8 + $0xfc0] sm:$0xff]
      %v4185 = vld [vmem:[%s8 + $0xfc8] sm:$0xff]
      %v4186 = vld [vmem:[%s8 + $0xfd0] sm:$0xff]
      %v4187 = vld [vmem:[%s8 + $0xfd8] sm:$0xff]
      %v4188 = vld [vmem:[%s8 + $0xfe0] sm:$0xff]
      %v4189 = vld [vmem:[%s8 + $0xfe8] sm:$0xff]
      %v4190 = vld [vmem:[%s8 + $0xff0] sm:$0xff]
      %v4191 = vld [vmem:[%s8 + $0xff8] sm:$0xff]
      %v4192 = vld [vmem:[%s9] sm:$0x1]
      %v4194 = vlaneseq
      %v4195 = vshrl.u32 %v4194, 7
      %v4196 = vsub.s32 0, %v4195
      %v4197 = vrot.slane %v4192, %v4196
      %4199 = vmatprep.subr.mxu0 0.0
      %4200 = vmatpush1.msra.mxu0 %v3680
      %4201 = vmatprep.subr.mxu0 0.0
      %4202 = vmatpush1.msra.mxu0 %v3681
      %4203 = vmatprep.subr.mxu0 0.0
      %4204 = vmatpush1.msra.mxu0 %v3682
      %4205 = vmatprep.subr.mxu0 0.0
      %4206 = vmatpush1.msra.mxu0 %v3683
      %4207 = vmatprep.subr.mxu0 0.0
      %4208 = vmatpush1.msra.mxu0 %v3684
      %4209 = vmatprep.subr.mxu0 0.0
      %4210 = vmatpush1.msra.mxu0 %v3685
      %4211 = vmatprep.subr.mxu0 0.0
      %4212 = vmatpush1.msra.mxu0 %v3686
      %4213 = vmatprep.subr.mxu0 0.0
      %4214 = vmatpush1.msra.mxu0 %v3687
      %4215 = vmatprep.subr.mxu0 0.0
      %4216 = vmatpush1.msra.mxu0 %v3688
      %4217 = vmatprep.subr.mxu0 0.0
      %4218 = vmatpush1.msra.mxu0 %v3689
      %4219 = vmatprep.subr.mxu0 0.0
      %4220 = vmatpush1.msra.mxu0 %v3690
      %4221 = vmatprep.subr.mxu0 0.0
      %4222 = vmatpush1.msra.mxu0 %v3691
      %4223 = vmatprep.subr.mxu0 0.0
      %4224 = vmatpush1.msra.mxu0 %v3692
      %4225 = vmatprep.subr.mxu0 0.0
      %4226 = vmatpush1.msra.mxu0 %v3693
      %4227 = vmatprep.subr.mxu0 0.0
      %4228 = vmatpush1.msra.mxu0 %v3694
      %4229 = vmatprep.subr.mxu0 0.0
      %4230 = vmatpush1.msra.mxu0 %v3695
      %4231 = vmatprep.subr.mxu0 0.0
      %4232 = vmatpush1.msra.mxu0 %v3696
      %4233 = vmatprep.subr.mxu0 0.0
      %4234 = vmatpush1.msra.mxu0 %v3697
      %4235 = vmatprep.subr.mxu0 0.0
      %4236 = vmatpush1.msra.mxu0 %v3698
      %4237 = vmatprep.subr.mxu0 0.0
      %4238 = vmatpush1.msra.mxu0 %v3699
      %4239 = vmatprep.subr.mxu0 0.0
      %4240 = vmatpush1.msra.mxu0 %v3700
      %4241 = vmatprep.subr.mxu0 0.0
      %4242 = vmatpush1.msra.mxu0 %v3701
      %4243 = vmatprep.subr.mxu0 0.0
      %4244 = vmatpush1.msra.mxu0 %v3702
      %4245 = vmatprep.subr.mxu0 0.0
      %4246 = vmatpush1.msra.mxu0 %v3703
      %4247 = vmatprep.subr.mxu0 0.0
      %4248 = vmatpush1.msra.mxu0 %v3704
      %4249 = vmatprep.subr.mxu0 0.0
      %4250 = vmatpush1.msra.mxu0 %v3705
      %4251 = vmatprep.subr.mxu0 0.0
      %4252 = vmatpush1.msra.mxu0 %v3706
      %4253 = vmatprep.subr.mxu0 0.0
      %4254 = vmatpush1.msra.mxu0 %v3707
      %4255 = vmatprep.subr.mxu0 0.0
      %4256 = vmatpush1.msra.mxu0 %v3708
      %4257 = vmatprep.subr.mxu0 0.0
      %4258 = vmatpush1.msra.mxu0 %v3709
      %4259 = vmatprep.subr.mxu0 0.0
      %4260 = vmatpush1.msra.mxu0 %v3710
      %4261 = vmatprep.subr.mxu0 0.0
      %4262 = vmatpush1.msra.mxu0 %v3711
      %4263 = vmatprep.mubr.f32.mxu0 %v3649
      %4264 = vmatmul.mubr.f32.gmra.mrb[0].mxu0 %v3648
      %v4265 = vpop.f32.mrb[0].mxu0
      %v4266 = vadd.f32 %v4197, %v4265
      %v4267 = vpop.f32.mrb[0].mxu0
      %4268 = vdwg.mxu0
      %4269 = vmatprep.subr.mxu0 0.0
      %4270 = vmatpush1.msra.mxu0 %v3712
      %4271 = vmatprep.subr.mxu0 0.0
      %4272 = vmatpush1.msra.mxu0 %v3713
      %4273 = vmatprep.subr.mxu0 0.0
      %4274 = vmatpush1.msra.mxu0 %v3714
      %4275 = vmatprep.subr.mxu0 0.0
      %4276 = vmatpush1.msra.mxu0 %v3715
      %4277 = vmatprep.subr.mxu0 0.0
      %4278 = vmatpush1.msra.mxu0 %v3716
      %4279 = vmatprep.subr.mxu0 0.0
      %4280 = vmatpush1.msra.mxu0 %v3717
      %4281 = vmatprep.subr.mxu0 0.0
      %4282 = vmatpush1.msra.mxu0 %v3718
      %4283 = vmatprep.subr.mxu0 0.0
      %4284 = vmatpush1.msra.mxu0 %v3719
      %4285 = vmatprep.subr.mxu0 0.0
      %4286 = vmatpush1.msra.mxu0 %v3720
      %4287 = vmatprep.subr.mxu0 0.0
      %4288 = vmatpush1.msra.mxu0 %v3721
      %4289 = vmatprep.subr.mxu0 0.0
      %4290 = vmatpush1.msra.mxu0 %v3722
      %4291 = vmatprep.subr.mxu0 0.0
      %4292 = vmatpush1.msra.mxu0 %v3723
      %4293 = vmatprep.subr.mxu0 0.0
      %4294 = vmatpush1.msra.mxu0 %v3724
      %4295 = vmatprep.subr.mxu0 0.0
      %4296 = vmatpush1.msra.mxu0 %v3725
      %4297 = vmatprep.subr.mxu0 0.0
      %4298 = vmatpush1.msra.mxu0 %v3726
      %4299 = vmatprep.subr.mxu0 0.0
      %4300 = vmatpush1.msra.mxu0 %v3727
      %4301 = vmatprep.subr.mxu0 0.0
      %4302 = vmatpush1.msra.mxu0 %v3728
      %4303 = vmatprep.subr.mxu0 0.0
      %4304 = vmatpush1.msra.mxu0 %v3729
      %4305 = vmatprep.subr.mxu0 0.0
      %4306 = vmatpush1.msra.mxu0 %v3730
      %4307 = vmatprep.subr.mxu0 0.0
      %4308 = vmatpush1.msra.mxu0 %v3731
      %4309 = vmatprep.subr.mxu0 0.0
      %4310 = vmatpush1.msra.mxu0 %v3732
      %4311 = vmatprep.subr.mxu0 0.0
      %4312 = vmatpush1.msra.mxu0 %v3733
      %4313 = vmatprep.subr.mxu0 0.0
      %4314 = vmatpush1.msra.mxu0 %v3734
      %4315 = vmatprep.subr.mxu0 0.0
      %4316 = vmatpush1.msra.mxu0 %v3735
      %4317 = vmatprep.subr.mxu0 0.0
      %4318 = vmatpush1.msra.mxu0 %v3736
      %4319 = vmatprep.subr.mxu0 0.0
      %4320 = vmatpush1.msra.mxu0 %v3737
      %4321 = vmatprep.subr.mxu0 0.0
      %4322 = vmatpush1.msra.mxu0 %v3738
      %4323 = vmatprep.subr.mxu0 0.0
      %4324 = vmatpush1.msra.mxu0 %v3739
      %4325 = vmatprep.subr.mxu0 0.0
      %4326 = vmatpush1.msra.mxu0 %v3740
      %4327 = vmatprep.subr.mxu0 0.0
      %4328 = vmatpush1.msra.mxu0 %v3741
      %4329 = vmatprep.subr.mxu0 0.0
      %4330 = vmatpush1.msra.mxu0 %v3742
      %4331 = vmatprep.subr.mxu0 0.0
      %4332 = vmatpush1.msra.mxu0 %v3743
      %4333 = vmatprep.mubr.f32.mxu0 %v3651
      %4334 = vmatmul.mubr.f32.gmra.mrb[0].mxu0 %v3650
      %v4335 = vpop.f32.mrb[0].mxu0
      %v4336 = vadd.f32 %v4266, %v4335
      %v4337 = vpop.f32.mrb[0].mxu0
      %4338 = vdwg.mxu0
      %4339 = vmatprep.subr.mxu0 0.0
      %4340 = vmatpush1.msra.mxu0 %v3744
      %4341 = vmatprep.subr.mxu0 0.0
      %4342 = vmatpush1.msra.mxu0 %v3745
      %4343 = vmatprep.subr.mxu0 0.0
      %4344 = vmatpush1.msra.mxu0 %v3746
      %4345 = vmatprep.subr.mxu0 0.0
      %4346 = vmatpush1.msra.mxu0 %v3747
      %4347 = vmatprep.subr.mxu0 0.0
      %4348 = vmatpush1.msra.mxu0 %v3748
      %4349 = vmatprep.subr.mxu0 0.0
      %4350 = vmatpush1.msra.mxu0 %v3749
      %4351 = vmatprep.subr.mxu0 0.0
      %4352 = vmatpush1.msra.mxu0 %v3750
      %4353 = vmatprep.subr.mxu0 0.0
      %4354 = vmatpush1.msra.mxu0 %v3751
      %4355 = vmatprep.subr.mxu0 0.0
      %4356 = vmatpush1.msra.mxu0 %v3752
      %4357 = vmatprep.subr.mxu0 0.0
      %4358 = vmatpush1.msra.mxu0 %v3753
      %4359 = vmatprep.subr.mxu0 0.0
      %4360 = vmatpush1.msra.mxu0 %v3754
      %4361 = vmatprep.subr.mxu0 0.0
      %4362 = vmatpush1.msra.mxu0 %v3755
      %4363 = vmatprep.subr.mxu0 0.0
      %4364 = vmatpush1.msra.mxu0 %v3756
      %4365 = vmatprep.subr.mxu0 0.0
      %4366 = vmatpush1.msra.mxu0 %v3757
      %4367 = vmatprep.subr.mxu0 0.0
      %4368 = vmatpush1.msra.mxu0 %v3758
      %4369 = vmatprep.subr.mxu0 0.0
      %4370 = vmatpush1.msra.mxu0 %v3759
      %4371 = vmatprep.subr.mxu0 0.0
      %4372 = vmatpush1.msra.mxu0 %v3760
      %4373 = vmatprep.subr.mxu0 0.0
      %4374 = vmatpush1.msra.mxu0 %v3761
      %4375 = vmatprep.subr.mxu0 0.0
      %4376 = vmatpush1.msra.mxu0 %v3762
      %4377 = vmatprep.subr.mxu0 0.0
      %4378 = vmatpush1.msra.mxu0 %v3763
      %4379 = vmatprep.subr.mxu0 0.0
      %4380 = vmatpush1.msra.mxu0 %v3764
      %4381 = vmatprep.subr.mxu0 0.0
      %4382 = vmatpush1.msra.mxu0 %v3765
      %4383 = vmatprep.subr.mxu0 0.0
      %4384 = vmatpush1.msra.mxu0 %v3766
      %4385 = vmatprep.subr.mxu0 0.0
      %4386 = vmatpush1.msra.mxu0 %v3767
      %4387 = vmatprep.subr.mxu0 0.0
      %4388 = vmatpush1.msra.mxu0 %v3768
      %4389 = vmatprep.subr.mxu0 0.0
      %4390 = vmatpush1.msra.mxu0 %v3769
      %4391 = vmatprep.subr.mxu0 0.0
      %4392 = vmatpush1.msra.mxu0 %v3770
      %4393 = vmatprep.subr.mxu0 0.0
      %4394 = vmatpush1.msra.mxu0 %v3771
      %4395 = vmatprep.subr.mxu0 0.0
      %4396 = vmatpush1.msra.mxu0 %v3772
      %4397 = vmatprep.subr.mxu0 0.0
      %4398 = vmatpush1.msra.mxu0 %v3773
      %4399 = vmatprep.subr.mxu0 0.0
      %4400 = vmatpush1.msra.mxu0 %v3774
      %4401 = vmatprep.subr.mxu0 0.0
      %4402 = vmatpush1.msra.mxu0 %v3775
      %4403 = vmatprep.mubr.f32.mxu0 %v3653
      %4404 = vmatmul.mubr.f32.gmra.mrb[0].mxu0 %v3652
      %v4405 = vpop.f32.mrb[0].mxu0
      %v4406 = vadd.f32 %v4336, %v4405
      %v4407 = vpop.f32.mrb[0].mxu0
      %4408 = vdwg.mxu0
      %4409 = vmatprep.subr.mxu0 0.0
      %4410 = vmatpush1.msra.mxu0 %v3776
      %4411 = vmatprep.subr.mxu0 0.0
      %4412 = vmatpush1.msra.mxu0 %v3777
      %4413 = vmatprep.subr.mxu0 0.0
      %4414 = vmatpush1.msra.mxu0 %v3778
      %4415 = vmatprep.subr.mxu0 0.0
      %4416 = vmatpush1.msra.mxu0 %v3779
      %4417 = vmatprep.subr.mxu0 0.0
      %4418 = vmatpush1.msra.mxu0 %v3780
      %4419 = vmatprep.subr.mxu0 0.0
      %4420 = vmatpush1.msra.mxu0 %v3781
      %4421 = vmatprep.subr.mxu0 0.0
      %4422 = vmatpush1.msra.mxu0 %v3782
      %4423 = vmatprep.subr.mxu0 0.0
      %4424 = vmatpush1.msra.mxu0 %v3783
      %4425 = vmatprep.subr.mxu0 0.0
      %4426 = vmatpush1.msra.mxu0 %v3784
      %4427 = vmatprep.subr.mxu0 0.0
      %4428 = vmatpush1.msra.mxu0 %v3785
      %4429 = vmatprep.subr.mxu0 0.0
      %4430 = vmatpush1.msra.mxu0 %v3786
      %4431 = vmatprep.subr.mxu0 0.0
      %4432 = vmatpush1.msra.mxu0 %v3787
      %4433 = vmatprep.subr.mxu0 0.0
      %4434 = vmatpush1.msra.mxu0 %v3788
      %4435 = vmatprep.subr.mxu0 0.0
      %4436 = vmatpush1.msra.mxu0 %v3789
      %4437 = vmatprep.subr.mxu0 0.0
      %4438 = vmatpush1.msra.mxu0 %v3790
      %4439 = vmatprep.subr.mxu0 0.0
      %4440 = vmatpush1.msra.mxu0 %v3791
      %4441 = vmatprep.subr.mxu0 0.0
      %4442 = vmatpush1.msra.mxu0 %v3792
      %4443 = vmatprep.subr.mxu0 0.0
      %4444 = vmatpush1.msra.mxu0 %v3793
      %4445 = vmatprep.subr.mxu0 0.0
      %4446 = vmatpush1.msra.mxu0 %v3794
      %4447 = vmatprep.subr.mxu0 0.0
      %4448 = vmatpush1.msra.mxu0 %v3795
      %4449 = vmatprep.subr.mxu0 0.0
      %4450 = vmatpush1.msra.mxu0 %v3796
      %4451 = vmatprep.subr.mxu0 0.0
      %4452 = vmatpush1.msra.mxu0 %v3797
      %4453 = vmatprep.subr.mxu0 0.0
      %4454 = vmatpush1.msra.mxu0 %v3798
      %4455 = vmatprep.subr.mxu0 0.0
      %4456 = vmatpush1.msra.mxu0 %v3799
      %4457 = vmatprep.subr.mxu0 0.0
      %4458 = vmatpush1.msra.mxu0 %v3800
      %4459 = vmatprep.subr.mxu0 0.0
      %4460 = vmatpush1.msra.mxu0 %v3801
      %4461 = vmatprep.subr.mxu0 0.0
      %4462 = vmatpush1.msra.mxu0 %v3802
      %4463 = vmatprep.subr.mxu0 0.0
      %4464 = vmatpush1.msra.mxu0 %v3803
      %4465 = vmatprep.subr.mxu0 0.0
      %4466 = vmatpush1.msra.mxu0 %v3804
      %4467 = vmatprep.subr.mxu0 0.0
      %4468 = vmatpush1.msra.mxu0 %v3805
      %4469 = vmatprep.subr.mxu0 0.0
      %4470 = vmatpush1.msra.mxu0 %v3806
      %4471 = vmatprep.subr.mxu0 0.0
      %4472 = vmatpush1.msra.mxu0 %v3807
      %4473 = vmatprep.mubr.f32.mxu0 %v3655
      %4474 = vmatmul.mubr.f32.gmra.mrb[0].mxu0 %v3654
      %v4475 = vpop.f32.mrb[0].mxu0
      %v4476 = vadd.f32 %v4406, %v4475
      %v4477 = vpop.f32.mrb[0].mxu0
      %4478 = vdwg.mxu0
      %4479 = vmatprep.subr.mxu0 0.0
      %4480 = vmatpush1.msra.mxu0 %v3808
      %4481 = vmatprep.subr.mxu0 0.0
      %4482 = vmatpush1.msra.mxu0 %v3809
      %4483 = vmatprep.subr.mxu0 0.0
      %4484 = vmatpush1.msra.mxu0 %v3810
      %4485 = vmatprep.subr.mxu0 0.0
      %4486 = vmatpush1.msra.mxu0 %v3811
      %4487 = vmatprep.subr.mxu0 0.0
      %4488 = vmatpush1.msra.mxu0 %v3812
      %4489 = vmatprep.subr.mxu0 0.0
      %4490 = vmatpush1.msra.mxu0 %v3813
      %4491 = vmatprep.subr.mxu0 0.0
      %4492 = vmatpush1.msra.mxu0 %v3814
      %4493 = vmatprep.subr.mxu0 0.0
      %4494 = vmatpush1.msra.mxu0 %v3815
      %4495 = vmatprep.subr.mxu0 0.0
      %4496 = vmatpush1.msra.mxu0 %v3816
      %4497 = vmatprep.subr.mxu0 0.0
      %4498 = vmatpush1.msra.mxu0 %v3817
      %4499 = vmatprep.subr.mxu0 0.0
      %4500 = vmatpush1.msra.mxu0 %v3818
      %4501 = vmatprep.subr.mxu0 0.0
      %4502 = vmatpush1.msra.mxu0 %v3819
      %4503 = vmatprep.subr.mxu0 0.0
      %4504 = vmatpush1.msra.mxu0 %v3820
      %4505 = vmatprep.subr.mxu0 0.0
      %4506 = vmatpush1.msra.mxu0 %v3821
      %4507 = vmatprep.subr.mxu0 0.0
      %4508 = vmatpush1.msra.mxu0 %v3822
      %4509 = vmatprep.subr.mxu0 0.0
      %4510 = vmatpush1.msra.mxu0 %v3823
      %4511 = vmatprep.subr.mxu0 0.0
      %4512 = vmatpush1.msra.mxu0 %v3824
      %4513 = vmatprep.subr.mxu0 0.0
      %4514 = vmatpush1.msra.mxu0 %v3825
      %4515 = vmatprep.subr.mxu0 0.0
      %4516 = vmatpush1.msra.mxu0 %v3826
      %4517 = vmatprep.subr.mxu0 0.0
      %4518 = vmatpush1.msra.mxu0 %v3827
      %4519 = vmatprep.subr.mxu0 0.0
      %4520 = vmatpush1.msra.mxu0 %v3828
      %4521 = vmatprep.subr.mxu0 0.0
      %4522 = vmatpush1.msra.mxu0 %v3829
      %4523 = vmatprep.subr.mxu0 0.0
      %4524 = vmatpush1.msra.mxu0 %v3830
      %4525 = vmatprep.subr.mxu0 0.0
      %4526 = vmatpush1.msra.mxu0 %v3831
      %4527 = vmatprep.subr.mxu0 0.0
      %4528 = vmatpush1.msra.mxu0 %v3832
      %4529 = vmatprep.subr.mxu0 0.0
      %4530 = vmatpush1.msra.mxu0 %v3833
      %4531 = vmatprep.subr.mxu0 0.0
      %4532 = vmatpush1.msra.mxu0 %v3834
      %4533 = vmatprep.subr.mxu0 0.0
      %4534 = vmatpush1.msra.mxu0 %v3835
      %4535 = vmatprep.subr.mxu0 0.0
      %4536 = vmatpush1.msra.mxu0 %v3836
      %4537 = vmatprep.subr.mxu0 0.0
      %4538 = vmatpush1.msra.mxu0 %v3837
      %4539 = vmatprep.subr.mxu0 0.0
      %4540 = vmatpush1.msra.mxu0 %v3838
      %4541 = vmatprep.subr.mxu0 0.0
      %4542 = vmatpush1.msra.mxu0 %v3839
      %4543 = vmatprep.mubr.f32.mxu0 %v3657
      %4544 = vmatmul.mubr.f32.gmra.mrb[0].mxu0 %v3656
      %v4545 = vpop.f32.mrb[0].mxu0
      %v4546 = vadd.f32 %v4476, %v4545
      %v4547 = vpop.f32.mrb[0].mxu0
      %4548 = vdwg.mxu0
      %4549 = vmatprep.subr.mxu0 0.0
      %4550 = vmatpush1.msra.mxu0 %v3840
      %4551 = vmatprep.subr.mxu0 0.0
      %4552 = vmatpush1.msra.mxu0 %v3841
      %4553 = vmatprep.subr.mxu0 0.0
      %4554 = vmatpush1.msra.mxu0 %v3842
      %4555 = vmatprep.subr.mxu0 0.0
      %4556 = vmatpush1.msra.mxu0 %v3843
      %4557 = vmatprep.subr.mxu0 0.0
      %4558 = vmatpush1.msra.mxu0 %v3844
      %4559 = vmatprep.subr.mxu0 0.0
      %4560 = vmatpush1.msra.mxu0 %v3845
      %4561 = vmatprep.subr.mxu0 0.0
      %4562 = vmatpush1.msra.mxu0 %v3846
      %4563 = vmatprep.subr.mxu0 0.0
      %4564 = vmatpush1.msra.mxu0 %v3847
      %4565 = vmatprep.subr.mxu0 0.0
      %4566 = vmatpush1.msra.mxu0 %v3848
      %4567 = vmatprep.subr.mxu0 0.0
      %4568 = vmatpush1.msra.mxu0 %v3849
      %4569 = vmatprep.subr.mxu0 0.0
      %4570 = vmatpush1.msra.mxu0 %v3850
      %4571 = vmatprep.subr.mxu0 0.0
      %4572 = vmatpush1.msra.mxu0 %v3851
      %4573 = vmatprep.subr.mxu0 0.0
      %4574 = vmatpush1.msra.mxu0 %v3852
      %4575 = vmatprep.subr.mxu0 0.0
      %4576 = vmatpush1.msra.mxu0 %v3853
      %4577 = vmatprep.subr.mxu0 0.0
      %4578 = vmatpush1.msra.mxu0 %v3854
      %4579 = vmatprep.subr.mxu0 0.0
      %4580 = vmatpush1.msra.mxu0 %v3855
      %4581 = vmatprep.subr.mxu0 0.0
      %4582 = vmatpush1.msra.mxu0 %v3856
      %4583 = vmatprep.subr.mxu0 0.0
      %4584 = vmatpush1.msra.mxu0 %v3857
      %4585 = vmatprep.subr.mxu0 0.0
      %4586 = vmatpush1.msra.mxu0 %v3858
      %4587 = vmatprep.subr.mxu0 0.0
      %4588 = vmatpush1.msra.mxu0 %v3859
      %4589 = vmatprep.subr.mxu0 0.0
      %4590 = vmatpush1.msra.mxu0 %v3860
      %4591 = vmatprep.subr.mxu0 0.0
      %4592 = vmatpush1.msra.mxu0 %v3861
      %4593 = vmatprep.subr.mxu0 0.0
      %4594 = vmatpush1.msra.mxu0 %v3862
      %4595 = vmatprep.subr.mxu0 0.0
      %4596 = vmatpush1.msra.mxu0 %v3863
      %4597 = vmatprep.subr.mxu0 0.0
      %4598 = vmatpush1.msra.mxu0 %v3864
      %4599 = vmatprep.subr.mxu0 0.0
      %4600 = vmatpush1.msra.mxu0 %v3865
      %4601 = vmatprep.subr.mxu0 0.0
      %4602 = vmatpush1.msra.mxu0 %v3866
      %4603 = vmatprep.subr.mxu0 0.0
      %4604 = vmatpush1.msra.mxu0 %v3867
      %4605 = vmatprep.subr.mxu0 0.0
      %4606 = vmatpush1.msra.mxu0 %v3868
      %4607 = vmatprep.subr.mxu0 0.0
      %4608 = vmatpush1.msra.mxu0 %v3869
      %4609 = vmatprep.subr.mxu0 0.0
      %4610 = vmatpush1.msra.mxu0 %v3870
      %4611 = vmatprep.subr.mxu0 0.0
      %4612 = vmatpush1.msra.mxu0 %v3871
      %4613 = vmatprep.mubr.f32.mxu0 %v3659
      %4614 = vmatmul.mubr.f32.gmra.mrb[0].mxu0 %v3658
      %v4615 = vpop.f32.mrb[0].mxu0
      %v4616 = vadd.f32 %v4546, %v4615
      %v4617 = vpop.f32.mrb[0].mxu0
      %4618 = vdwg.mxu0
      %4619 = vmatprep.subr.mxu0 0.0
      %4620 = vmatpush1.msra.mxu0 %v3872
      %4621 = vmatprep.subr.mxu0 0.0
      %4622 = vmatpush1.msra.mxu0 %v3873
      %4623 = vmatprep.subr.mxu0 0.0
      %4624 = vmatpush1.msra.mxu0 %v3874
      %4625 = vmatprep.subr.mxu0 0.0
      %4626 = vmatpush1.msra.mxu0 %v3875
      %4627 = vmatprep.subr.mxu0 0.0
      %4628 = vmatpush1.msra.mxu0 %v3876
      %4629 = vmatprep.subr.mxu0 0.0
      %4630 = vmatpush1.msra.mxu0 %v3877
      %4631 = vmatprep.subr.mxu0 0.0
      %4632 = vmatpush1.msra.mxu0 %v3878
      %4633 = vmatprep.subr.mxu0 0.0
      %4634 = vmatpush1.msra.mxu0 %v3879
      %4635 = vmatprep.subr.mxu0 0.0
      %4636 = vmatpush1.msra.mxu0 %v3880
      %4637 = vmatprep.subr.mxu0 0.0
      %4638 = vmatpush1.msra.mxu0 %v3881
      %4639 = vmatprep.subr.mxu0 0.0
      %4640 = vmatpush1.msra.mxu0 %v3882
      %4641 = vmatprep.subr.mxu0 0.0
      %4642 = vmatpush1.msra.mxu0 %v3883
      %4643 = vmatprep.subr.mxu0 0.0
      %4644 = vmatpush1.msra.mxu0 %v3884
      %4645 = vmatprep.subr.mxu0 0.0
      %4646 = vmatpush1.msra.mxu0 %v3885
      %4647 = vmatprep.subr.mxu0 0.0
      %4648 = vmatpush1.msra.mxu0 %v3886
      %4649 = vmatprep.subr.mxu0 0.0
      %4650 = vmatpush1.msra.mxu0 %v3887
      %4651 = vmatprep.subr.mxu0 0.0
      %4652 = vmatpush1.msra.mxu0 %v3888
      %4653 = vmatprep.subr.mxu0 0.0
      %4654 = vmatpush1.msra.mxu0 %v3889
      %4655 = vmatprep.subr.mxu0 0.0
      %4656 = vmatpush1.msra.mxu0 %v3890
      %4657 = vmatprep.subr.mxu0 0.0
      %4658 = vmatpush1.msra.mxu0 %v3891
      %4659 = vmatprep.subr.mxu0 0.0
      %4660 = vmatpush1.msra.mxu0 %v3892
      %4661 = vmatprep.subr.mxu0 0.0
      %4662 = vmatpush1.msra.mxu0 %v3893
      %4663 = vmatprep.subr.mxu0 0.0
      %4664 = vmatpush1.msra.mxu0 %v3894
      %4665 = vmatprep.subr.mxu0 0.0
      %4666 = vmatpush1.msra.mxu0 %v3895
      %4667 = vmatprep.subr.mxu0 0.0
      %4668 = vmatpush1.msra.mxu0 %v3896
      %4669 = vmatprep.subr.mxu0 0.0
      %4670 = vmatpush1.msra.mxu0 %v3897
      %4671 = vmatprep.subr.mxu0 0.0
      %4672 = vmatpush1.msra.mxu0 %v3898
      %4673 = vmatprep.subr.mxu0 0.0
      %4674 = vmatpush1.msra.mxu0 %v3899
      %4675 = vmatprep.subr.mxu0 0.0
      %4676 = vmatpush1.msra.mxu0 %v3900
      %4677 = vmatprep.subr.mxu0 0.0
      %4678 = vmatpush1.msra.mxu0 %v3901
      %4679 = vmatprep.subr.mxu0 0.0
      %4680 = vmatpush1.msra.mxu0 %v3902
      %4681 = vmatprep.subr.mxu0 0.0
      %4682 = vmatpush1.msra.mxu0 %v3903
      %4683 = vmatprep.mubr.f32.mxu0 %v3661
      %4684 = vmatmul.mubr.f32.gmra.mrb[0].mxu0 %v3660
      %v4685 = vpop.f32.mrb[0].mxu0
      %v4686 = vadd.f32 %v4616, %v4685
      %v4687 = vpop.f32.mrb[0].mxu0
      %4688 = vdwg.mxu0
      %4689 = vmatprep.subr.mxu0 0.0
      %4690 = vmatpush1.msra.mxu0 %v3904
      %4691 = vmatprep.subr.mxu0 0.0
      %4692 = vmatpush1.msra.mxu0 %v3905
      %4693 = vmatprep.subr.mxu0 0.0
      %4694 = vmatpush1.msra.mxu0 %v3906
      %4695 = vmatprep.subr.mxu0 0.0
      %4696 = vmatpush1.msra.mxu0 %v3907
      %4697 = vmatprep.subr.mxu0 0.0
      %4698 = vmatpush1.msra.mxu0 %v3908
      %4699 = vmatprep.subr.mxu0 0.0
      %4700 = vmatpush1.msra.mxu0 %v3909
      %4701 = vmatprep.subr.mxu0 0.0
      %4702 = vmatpush1.msra.mxu0 %v3910
      %4703 = vmatprep.subr.mxu0 0.0
      %4704 = vmatpush1.msra.mxu0 %v3911
      %4705 = vmatprep.subr.mxu0 0.0
      %4706 = vmatpush1.msra.mxu0 %v3912
      %4707 = vmatprep.subr.mxu0 0.0
      %4708 = vmatpush1.msra.mxu0 %v3913
      %4709 = vmatprep.subr.mxu0 0.0
      %4710 = vmatpush1.msra.mxu0 %v3914
      %4711 = vmatprep.subr.mxu0 0.0
      %4712 = vmatpush1.msra.mxu0 %v3915
      %4713 = vmatprep.subr.mxu0 0.0
      %4714 = vmatpush1.msra.mxu0 %v3916
      %4715 = vmatprep.subr.mxu0 0.0
      %4716 = vmatpush1.msra.mxu0 %v3917
      %4717 = vmatprep.subr.mxu0 0.0
      %4718 = vmatpush1.msra.mxu0 %v3918
      %4719 = vmatprep.subr.mxu0 0.0
      %4720 = vmatpush1.msra.mxu0 %v3919
      %4721 = vmatprep.subr.mxu0 0.0
      %4722 = vmatpush1.msra.mxu0 %v3920
      %4723 = vmatprep.subr.mxu0 0.0
      %4724 = vmatpush1.msra.mxu0 %v3921
      %4725 = vmatprep.subr.mxu0 0.0
      %4726 = vmatpush1.msra.mxu0 %v3922
      %4727 = vmatprep.subr.mxu0 0.0
      %4728 = vmatpush1.msra.mxu0 %v3923
      %4729 = vmatprep.subr.mxu0 0.0
      %4730 = vmatpush1.msra.mxu0 %v3924
      %4731 = vmatprep.subr.mxu0 0.0
      %4732 = vmatpush1.msra.mxu0 %v3925
      %4733 = vmatprep.subr.mxu0 0.0
      %4734 = vmatpush1.msra.mxu0 %v3926
      %4735 = vmatprep.subr.mxu0 0.0
      %4736 = vmatpush1.msra.mxu0 %v3927
      %4737 = vmatprep.subr.mxu0 0.0
      %4738 = vmatpush1.msra.mxu0 %v3928
      %4739 = vmatprep.subr.mxu0 0.0
      %4740 = vmatpush1.msra.mxu0 %v3929
      %4741 = vmatprep.subr.mxu0 0.0
      %4742 = vmatpush1.msra.mxu0 %v3930
      %4743 = vmatprep.subr.mxu0 0.0
      %4744 = vmatpush1.msra.mxu0 %v3931
      %4745 = vmatprep.subr.mxu0 0.0
      %4746 = vmatpush1.msra.mxu0 %v3932
      %4747 = vmatprep.subr.mxu0 0.0
      %4748 = vmatpush1.msra.mxu0 %v3933
      %4749 = vmatprep.subr.mxu0 0.0
      %4750 = vmatpush1.msra.mxu0 %v3934
      %4751 = vmatprep.subr.mxu0 0.0
      %4752 = vmatpush1.msra.mxu0 %v3935
      %4753 = vmatprep.mubr.f32.mxu0 %v3663
      %4754 = vmatmul.mubr.f32.gmra.mrb[0].mxu0 %v3662
      %v4755 = vpop.f32.mrb[0].mxu0
      %v4756 = vadd.f32 %v4686, %v4755
      %v4757 = vpop.f32.mrb[0].mxu0
      %4758 = vdwg.mxu0
      %4759 = vmatprep.subr.mxu0 0.0
      %4760 = vmatpush1.msra.mxu0 %v3936
      %4761 = vmatprep.subr.mxu0 0.0
      %4762 = vmatpush1.msra.mxu0 %v3937
      %4763 = vmatprep.subr.mxu0 0.0
      %4764 = vmatpush1.msra.mxu0 %v3938
      %4765 = vmatprep.subr.mxu0 0.0
      %4766 = vmatpush1.msra.mxu0 %v3939
      %4767 = vmatprep.subr.mxu0 0.0
      %4768 = vmatpush1.msra.mxu0 %v3940
      %4769 = vmatprep.subr.mxu0 0.0
      %4770 = vmatpush1.msra.mxu0 %v3941
      %4771 = vmatprep.subr.mxu0 0.0
      %4772 = vmatpush1.msra.mxu0 %v3942
      %4773 = vmatprep.subr.mxu0 0.0
      %4774 = vmatpush1.msra.mxu0 %v3943
      %4775 = vmatprep.subr.mxu0 0.0
      %4776 = vmatpush1.msra.mxu0 %v3944
      %4777 = vmatprep.subr.mxu0 0.0
      %4778 = vmatpush1.msra.mxu0 %v3945
      %4779 = vmatprep.subr.mxu0 0.0
      %4780 = vmatpush1.msra.mxu0 %v3946
      %4781 = vmatprep.subr.mxu0 0.0
      %4782 = vmatpush1.msra.mxu0 %v3947
      %4783 = vmatprep.subr.mxu0 0.0
      %4784 = vmatpush1.msra.mxu0 %v3948
      %4785 = vmatprep.subr.mxu0 0.0
      %4786 = vmatpush1.msra.mxu0 %v3949
      %4787 = vmatprep.subr.mxu0 0.0
      %4788 = vmatpush1.msra.mxu0 %v3950
      %4789 = vmatprep.subr.mxu0 0.0
      %4790 = vmatpush1.msra.mxu0 %v3951
      %4791 = vmatprep.subr.mxu0 0.0
      %4792 = vmatpush1.msra.mxu0 %v3952
      %4793 = vmatprep.subr.mxu0 0.0
      %4794 = vmatpush1.msra.mxu0 %v3953
      %4795 = vmatprep.subr.mxu0 0.0
      %4796 = vmatpush1.msra.mxu0 %v3954
      %4797 = vmatprep.subr.mxu0 0.0
      %4798 = vmatpush1.msra.mxu0 %v3955
      %4799 = vmatprep.subr.mxu0 0.0
      %4800 = vmatpush1.msra.mxu0 %v3956
      %4801 = vmatprep.subr.mxu0 0.0
      %4802 = vmatpush1.msra.mxu0 %v3957
      %4803 = vmatprep.subr.mxu0 0.0
      %4804 = vmatpush1.msra.mxu0 %v3958
      %4805 = vmatprep.subr.mxu0 0.0
      %4806 = vmatpush1.msra.mxu0 %v3959
      %4807 = vmatprep.subr.mxu0 0.0
      %4808 = vmatpush1.msra.mxu0 %v3960
      %4809 = vmatprep.subr.mxu0 0.0
      %4810 = vmatpush1.msra.mxu0 %v3961
      %4811 = vmatprep.subr.mxu0 0.0
      %4812 = vmatpush1.msra.mxu0 %v3962
      %4813 = vmatprep.subr.mxu0 0.0
      %4814 = vmatpush1.msra.mxu0 %v3963
      %4815 = vmatprep.subr.mxu0 0.0
      %4816 = vmatpush1.msra.mxu0 %v3964
      %4817 = vmatprep.subr.mxu0 0.0
      %4818 = vmatpush1.msra.mxu0 %v3965
      %4819 = vmatprep.subr.mxu0 0.0
      %4820 = vmatpush1.msra.mxu0 %v3966
      %4821 = vmatprep.subr.mxu0 0.0
      %4822 = vmatpush1.msra.mxu0 %v3967
      %4823 = vmatprep.mubr.f32.mxu0 %v3665
      %4824 = vmatmul.mubr.f32.gmra.mrb[0].mxu0 %v3664
      %v4825 = vpop.f32.mrb[0].mxu0
      %v4826 = vadd.f32 %v4756, %v4825
      %v4827 = vpop.f32.mrb[0].mxu0
      %4828 = vdwg.mxu0
      %4829 = vmatprep.subr.mxu0 0.0
      %4830 = vmatpush1.msra.mxu0 %v3968
      %4831 = vmatprep.subr.mxu0 0.0
      %4832 = vmatpush1.msra.mxu0 %v3969
      %4833 = vmatprep.subr.mxu0 0.0
      %4834 = vmatpush1.msra.mxu0 %v3970
      %4835 = vmatprep.subr.mxu0 0.0
      %4836 = vmatpush1.msra.mxu0 %v3971
      %4837 = vmatprep.subr.mxu0 0.0
      %4838 = vmatpush1.msra.mxu0 %v3972
      %4839 = vmatprep.subr.mxu0 0.0
      %4840 = vmatpush1.msra.mxu0 %v3973
      %4841 = vmatprep.subr.mxu0 0.0
      %4842 = vmatpush1.msra.mxu0 %v3974
      %4843 = vmatprep.subr.mxu0 0.0
      %4844 = vmatpush1.msra.mxu0 %v3975
      %4845 = vmatprep.subr.mxu0 0.0
      %4846 = vmatpush1.msra.mxu0 %v3976
      %4847 = vmatprep.subr.mxu0 0.0
      %4848 = vmatpush1.msra.mxu0 %v3977
      %4849 = vmatprep.subr.mxu0 0.0
      %4850 = vmatpush1.msra.mxu0 %v3978
      %4851 = vmatprep.subr.mxu0 0.0
      %4852 = vmatpush1.msra.mxu0 %v3979
      %4853 = vmatprep.subr.mxu0 0.0
      %4854 = vmatpush1.msra.mxu0 %v3980
      %4855 = vmatprep.subr.mxu0 0.0
      %4856 = vmatpush1.msra.mxu0 %v3981
      %4857 = vmatprep.subr.mxu0 0.0
      %4858 = vmatpush1.msra.mxu0 %v3982
      %4859 = vmatprep.subr.mxu0 0.0
      %4860 = vmatpush1.msra.mxu0 %v3983
      %4861 = vmatprep.subr.mxu0 0.0
      %4862 = vmatpush1.msra.mxu0 %v3984
      %4863 = vmatprep.subr.mxu0 0.0
      %4864 = vmatpush1.msra.mxu0 %v3985
      %4865 = vmatprep.subr.mxu0 0.0
      %4866 = vmatpush1.msra.mxu0 %v3986
      %4867 = vmatprep.subr.mxu0 0.0
      %4868 = vmatpush1.msra.mxu0 %v3987
      %4869 = vmatprep.subr.mxu0 0.0
      %4870 = vmatpush1.msra.mxu0 %v3988
      %4871 = vmatprep.subr.mxu0 0.0
      %4872 = vmatpush1.msra.mxu0 %v3989
      %4873 = vmatprep.subr.mxu0 0.0
      %4874 = vmatpush1.msra.mxu0 %v3990
      %4875 = vmatprep.subr.mxu0 0.0
      %4876 = vmatpush1.msra.mxu0 %v3991
      %4877 = vmatprep.subr.mxu0 0.0
      %4878 = vmatpush1.msra.mxu0 %v3992
      %4879 = vmatprep.subr.mxu0 0.0
      %4880 = vmatpush1.msra.mxu0 %v3993
      %4881 = vmatprep.subr.mxu0 0.0
      %4882 = vmatpush1.msra.mxu0 %v3994
      %4883 = vmatprep.subr.mxu0 0.0
      %4884 = vmatpush1.msra.mxu0 %v3995
      %4885 = vmatprep.subr.mxu0 0.0
      %4886 = vmatpush1.msra.mxu0 %v3996
      %4887 = vmatprep.subr.mxu0 0.0
      %4888 = vmatpush1.msra.mxu0 %v3997
      %4889 = vmatprep.subr.mxu0 0.0
      %4890 = vmatpush1.msra.mxu0 %v3998
      %4891 = vmatprep.subr.mxu0 0.0
      %4892 = vmatpush1.msra.mxu0 %v3999
      %4893 = vmatprep.mubr.f32.mxu0 %v3667
      %4894 = vmatmul.mubr.f32.gmra.mrb[0].mxu0 %v3666
      %v4895 = vpop.f32.mrb[0].mxu0
      %v4896 = vadd.f32 %v4826, %v4895
      %v4897 = vpop.f32.mrb[0].mxu0
      %4898 = vdwg.mxu0
      %4899 = vmatprep.subr.mxu0 0.0
      %4900 = vmatpush1.msra.mxu0 %v4000
      %4901 = vmatprep.subr.mxu0 0.0
      %4902 = vmatpush1.msra.mxu0 %v4001
      %4903 = vmatprep.subr.mxu0 0.0
      %4904 = vmatpush1.msra.mxu0 %v4002
      %4905 = vmatprep.subr.mxu0 0.0
      %4906 = vmatpush1.msra.mxu0 %v4003
      %4907 = vmatprep.subr.mxu0 0.0
      %4908 = vmatpush1.msra.mxu0 %v4004
      %4909 = vmatprep.subr.mxu0 0.0
      %4910 = vmatpush1.msra.mxu0 %v4005
      %4911 = vmatprep.subr.mxu0 0.0
      %4912 = vmatpush1.msra.mxu0 %v4006
      %4913 = vmatprep.subr.mxu0 0.0
      %4914 = vmatpush1.msra.mxu0 %v4007
      %4915 = vmatprep.subr.mxu0 0.0
      %4916 = vmatpush1.msra.mxu0 %v4008
      %4917 = vmatprep.subr.mxu0 0.0
      %4918 = vmatpush1.msra.mxu0 %v4009
      %4919 = vmatprep.subr.mxu0 0.0
      %4920 = vmatpush1.msra.mxu0 %v4010
      %4921 = vmatprep.subr.mxu0 0.0
      %4922 = vmatpush1.msra.mxu0 %v4011
      %4923 = vmatprep.subr.mxu0 0.0
      %4924 = vmatpush1.msra.mxu0 %v4012
      %4925 = vmatprep.subr.mxu0 0.0
      %4926 = vmatpush1.msra.mxu0 %v4013
      %4927 = vmatprep.subr.mxu0 0.0
      %4928 = vmatpush1.msra.mxu0 %v4014
      %4929 = vmatprep.subr.mxu0 0.0
      %4930 = vmatpush1.msra.mxu0 %v4015
      %4931 = vmatprep.subr.mxu0 0.0
      %4932 = vmatpush1.msra.mxu0 %v4016
      %4933 = vmatprep.subr.mxu0 0.0
      %4934 = vmatpush1.msra.mxu0 %v4017
      %4935 = vmatprep.subr.mxu0 0.0
      %4936 = vmatpush1.msra.mxu0 %v4018
      %4937 = vmatprep.subr.mxu0 0.0
      %4938 = vmatpush1.msra.mxu0 %v4019
      %4939 = vmatprep.subr.mxu0 0.0
      %4940 = vmatpush1.msra.mxu0 %v4020
      %4941 = vmatprep.subr.mxu0 0.0
      %4942 = vmatpush1.msra.mxu0 %v4021
      %4943 = vmatprep.subr.mxu0 0.0
      %4944 = vmatpush1.msra.mxu0 %v4022
      %4945 = vmatprep.subr.mxu0 0.0
      %4946 = vmatpush1.msra.mxu0 %v4023
      %4947 = vmatprep.subr.mxu0 0.0
      %4948 = vmatpush1.msra.mxu0 %v4024
      %4949 = vmatprep.subr.mxu0 0.0
      %4950 = vmatpush1.msra.mxu0 %v4025
      %4951 = vmatprep.subr.mxu0 0.0
      %4952 = vmatpush1.msra.mxu0 %v4026
      %4953 = vmatprep.subr.mxu0 0.0
      %4954 = vmatpush1.msra.mxu0 %v4027
      %4955 = vmatprep.subr.mxu0 0.0
      %4956 = vmatpush1.msra.mxu0 %v4028
      %4957 = vmatprep.subr.mxu0 0.0
      %4958 = vmatpush1.msra.mxu0 %v4029
      %4959 = vmatprep.subr.mxu0 0.0
      %4960 = vmatpush1.msra.mxu0 %v4030
      %4961 = vmatprep.subr.mxu0 0.0
      %4962 = vmatpush1.msra.mxu0 %v4031
      %4963 = vmatprep.mubr.f32.mxu0 %v3669
      %4964 = vmatmul.mubr.f32.gmra.mrb[0].mxu0 %v3668
      %v4965 = vpop.f32.mrb[0].mxu0
      %v4966 = vadd.f32 %v4896, %v4965
      %v4967 = vpop.f32.mrb[0].mxu0
      %4968 = vdwg.mxu0
      %4969 = vmatprep.subr.mxu0 0.0
      %4970 = vmatpush1.msra.mxu0 %v4032
      %4971 = vmatprep.subr.mxu0 0.0
      %4972 = vmatpush1.msra.mxu0 %v4033
      %4973 = vmatprep.subr.mxu0 0.0
      %4974 = vmatpush1.msra.mxu0 %v4034
      %4975 = vmatprep.subr.mxu0 0.0
      %4976 = vmatpush1.msra.mxu0 %v4035
      %4977 = vmatprep.subr.mxu0 0.0
      %4978 = vmatpush1.msra.mxu0 %v4036
      %4979 = vmatprep.subr.mxu0 0.0
      %4980 = vmatpush1.msra.mxu0 %v4037
      %4981 = vmatprep.subr.mxu0 0.0
      %4982 = vmatpush1.msra.mxu0 %v4038
      %4983 = vmatprep.subr.mxu0 0.0
      %4984 = vmatpush1.msra.mxu0 %v4039
      %4985 = vmatprep.subr.mxu0 0.0
      %4986 = vmatpush1.msra.mxu0 %v4040
      %4987 = vmatprep.subr.mxu0 0.0
      %4988 = vmatpush1.msra.mxu0 %v4041
      %4989 = vmatprep.subr.mxu0 0.0
      %4990 = vmatpush1.msra.mxu0 %v4042
      %4991 = vmatprep.subr.mxu0 0.0
      %4992 = vmatpush1.msra.mxu0 %v4043
      %4993 = vmatprep.subr.mxu0 0.0
      %4994 = vmatpush1.msra.mxu0 %v4044
      %4995 = vmatprep.subr.mxu0 0.0
      %4996 = vmatpush1.msra.mxu0 %v4045
      %4997 = vmatprep.subr.mxu0 0.0
      %4998 = vmatpush1.msra.mxu0 %v4046
      %4999 = vmatprep.subr.mxu0 0.0
      %5000 = vmatpush1.msra.mxu0 %v4047
      %5001 = vmatprep.subr.mxu0 0.0
      %5002 = vmatpush1.msra.mxu0 %v4048
      %5003 = vmatprep.subr.mxu0 0.0
      %5004 = vmatpush1.msra.mxu0 %v4049
      %5005 = vmatprep.subr.mxu0 0.0
      %5006 = vmatpush1.msra.mxu0 %v4050
      %5007 = vmatprep.subr.mxu0 0.0
      %5008 = vmatpush1.msra.mxu0 %v4051
      %5009 = vmatprep.subr.mxu0 0.0
      %5010 = vmatpush1.msra.mxu0 %v4052
      %5011 = vmatprep.subr.mxu0 0.0
      %5012 = vmatpush1.msra.mxu0 %v4053
      %5013 = vmatprep.subr.mxu0 0.0
      %5014 = vmatpush1.msra.mxu0 %v4054
      %5015 = vmatprep.subr.mxu0 0.0
      %5016 = vmatpush1.msra.mxu0 %v4055
      %5017 = vmatprep.subr.mxu0 0.0
      %5018 = vmatpush1.msra.mxu0 %v4056
      %5019 = vmatprep.subr.mxu0 0.0
      %5020 = vmatpush1.msra.mxu0 %v4057
      %5021 = vmatprep.subr.mxu0 0.0
      %5022 = vmatpush1.msra.mxu0 %v4058
      %5023 = vmatprep.subr.mxu0 0.0
      %5024 = vmatpush1.msra.mxu0 %v4059
      %5025 = vmatprep.subr.mxu0 0.0
      %5026 = vmatpush1.msra.mxu0 %v4060
      %5027 = vmatprep.subr.mxu0 0.0
      %5028 = vmatpush1.msra.mxu0 %v4061
      %5029 = vmatprep.subr.mxu0 0.0
      %5030 = vmatpush1.msra.mxu0 %v4062
      %5031 = vmatprep.subr.mxu0 0.0
      %5032 = vmatpush1.msra.mxu0 %v4063
      %5033 = vmatprep.mubr.f32.mxu0 %v3671
      %5034 = vmatmul.mubr.f32.gmra.mrb[0].mxu0 %v3670
      %v5035 = vpop.f32.mrb[0].mxu0
      %v5036 = vadd.f32 %v4966, %v5035
      %v5037 = vpop.f32.mrb[0].mxu0
      %5038 = vdwg.mxu0
      %5039 = vmatprep.subr.mxu0 0.0
      %5040 = vmatpush1.msra.mxu0 %v4064
      %5041 = vmatprep.subr.mxu0 0.0
      %5042 = vmatpush1.msra.mxu0 %v4065
      %5043 = vmatprep.subr.mxu0 0.0
      %5044 = vmatpush1.msra.mxu0 %v4066
      %5045 = vmatprep.subr.mxu0 0.0
      %5046 = vmatpush1.msra.mxu0 %v4067
      %5047 = vmatprep.subr.mxu0 0.0
      %5048 = vmatpush1.msra.mxu0 %v4068
      %5049 = vmatprep.subr.mxu0 0.0
      %5050 = vmatpush1.msra.mxu0 %v4069
      %5051 = vmatprep.subr.mxu0 0.0
      %5052 = vmatpush1.msra.mxu0 %v4070
      %5053 = vmatprep.subr.mxu0 0.0
      %5054 = vmatpush1.msra.mxu0 %v4071
      %5055 = vmatprep.subr.mxu0 0.0
      %5056 = vmatpush1.msra.mxu0 %v4072
      %5057 = vmatprep.subr.mxu0 0.0
      %5058 = vmatpush1.msra.mxu0 %v4073
      %5059 = vmatprep.subr.mxu0 0.0
      %5060 = vmatpush1.msra.mxu0 %v4074
      %5061 = vmatprep.subr.mxu0 0.0
      %5062 = vmatpush1.msra.mxu0 %v4075
      %5063 = vmatprep.subr.mxu0 0.0
      %5064 = vmatpush1.msra.mxu0 %v4076
      %5065 = vmatprep.subr.mxu0 0.0
      %5066 = vmatpush1.msra.mxu0 %v4077
      %5067 = vmatprep.subr.mxu0 0.0
      %5068 = vmatpush1.msra.mxu0 %v4078
      %5069 = vmatprep.subr.mxu0 0.0
      %5070 = vmatpush1.msra.mxu0 %v4079
      %5071 = vmatprep.subr.mxu0 0.0
      %5072 = vmatpush1.msra.mxu0 %v4080
      %5073 = vmatprep.subr.mxu0 0.0
      %5074 = vmatpush1.msra.mxu0 %v4081
      %5075 = vmatprep.subr.mxu0 0.0
      %5076 = vmatpush1.msra.mxu0 %v4082
      %5077 = vmatprep.subr.mxu0 0.0
      %5078 = vmatpush1.msra.mxu0 %v4083
      %5079 = vmatprep.subr.mxu0 0.0
      %5080 = vmatpush1.msra.mxu0 %v4084
      %5081 = vmatprep.subr.mxu0 0.0
      %5082 = vmatpush1.msra.mxu0 %v4085
      %5083 = vmatprep.subr.mxu0 0.0
      %5084 = vmatpush1.msra.mxu0 %v4086
      %5085 = vmatprep.subr.mxu0 0.0
      %5086 = vmatpush1.msra.mxu0 %v4087
      %5087 = vmatprep.subr.mxu0 0.0
      %5088 = vmatpush1.msra.mxu0 %v4088
      %5089 = vmatprep.subr.mxu0 0.0
      %5090 = vmatpush1.msra.mxu0 %v4089
      %5091 = vmatprep.subr.mxu0 0.0
      %5092 = vmatpush1.msra.mxu0 %v4090
      %5093 = vmatprep.subr.mxu0 0.0
      %5094 = vmatpush1.msra.mxu0 %v4091
      %5095 = vmatprep.subr.mxu0 0.0
      %5096 = vmatpush1.msra.mxu0 %v4092
      %5097 = vmatprep.subr.mxu0 0.0
      %5098 = vmatpush1.msra.mxu0 %v4093
      %5099 = vmatprep.subr.mxu0 0.0
      %5100 = vmatpush1.msra.mxu0 %v4094
      %5101 = vmatprep.subr.mxu0 0.0
      %5102 = vmatpush1.msra.mxu0 %v4095
      %5103 = vmatprep.mubr.f32.mxu0 %v3673
      %5104 = vmatmul.mubr.f32.gmra.mrb[0].mxu0 %v3672
      %v5105 = vpop.f32.mrb[0].mxu0
      %v5106 = vadd.f32 %v5036, %v5105
      %v5107 = vpop.f32.mrb[0].mxu0
      %5108 = vdwg.mxu0
      %5109 = vmatprep.subr.mxu0 0.0
      %5110 = vmatpush1.msra.mxu0 %v4096
      %5111 = vmatprep.subr.mxu0 0.0
      %5112 = vmatpush1.msra.mxu0 %v4097
      %5113 = vmatprep.subr.mxu0 0.0
      %5114 = vmatpush1.msra.mxu0 %v4098
      %5115 = vmatprep.subr.mxu0 0.0
      %5116 = vmatpush1.msra.mxu0 %v4099
      %5117 = vmatprep.subr.mxu0 0.0
      %5118 = vmatpush1.msra.mxu0 %v4100
      %5119 = vmatprep.subr.mxu0 0.0
      %5120 = vmatpush1.msra.mxu0 %v4101
      %5121 = vmatprep.subr.mxu0 0.0
      %5122 = vmatpush1.msra.mxu0 %v4102
      %5123 = vmatprep.subr.mxu0 0.0
      %5124 = vmatpush1.msra.mxu0 %v4103
      %5125 = vmatprep.subr.mxu0 0.0
      %5126 = vmatpush1.msra.mxu0 %v4104
      %5127 = vmatprep.subr.mxu0 0.0
      %5128 = vmatpush1.msra.mxu0 %v4105
      %5129 = vmatprep.subr.mxu0 0.0
      %5130 = vmatpush1.msra.mxu0 %v4106
      %5131 = vmatprep.subr.mxu0 0.0
      %5132 = vmatpush1.msra.mxu0 %v4107
      %5133 = vmatprep.subr.mxu0 0.0
      %5134 = vmatpush1.msra.mxu0 %v4108
      %5135 = vmatprep.subr.mxu0 0.0
      %5136 = vmatpush1.msra.mxu0 %v4109
      %5137 = vmatprep.subr.mxu0 0.0
      %5138 = vmatpush1.msra.mxu0 %v4110
      %5139 = vmatprep.subr.mxu0 0.0
      %5140 = vmatpush1.msra.mxu0 %v4111
      %5141 = vmatprep.subr.mxu0 0.0
      %5142 = vmatpush1.msra.mxu0 %v4112
      %5143 = vmatprep.subr.mxu0 0.0
      %5144 = vmatpush1.msra.mxu0 %v4113
      %5145 = vmatprep.subr.mxu0 0.0
      %5146 = vmatpush1.msra.mxu0 %v4114
      %5147 = vmatprep.subr.mxu0 0.0
      %5148 = vmatpush1.msra.mxu0 %v4115
      %5149 = vmatprep.subr.mxu0 0.0
      %5150 = vmatpush1.msra.mxu0 %v4116
      %5151 = vmatprep.subr.mxu0 0.0
      %5152 = vmatpush1.msra.mxu0 %v4117
      %5153 = vmatprep.subr.mxu0 0.0
      %5154 = vmatpush1.msra.mxu0 %v4118
      %5155 = vmatprep.subr.mxu0 0.0
      %5156 = vmatpush1.msra.mxu0 %v4119
      %5157 = vmatprep.subr.mxu0 0.0
      %5158 = vmatpush1.msra.mxu0 %v4120
      %5159 = vmatprep.subr.mxu0 0.0
      %5160 = vmatpush1.msra.mxu0 %v4121
      %5161 = vmatprep.subr.mxu0 0.0
      %5162 = vmatpush1.msra.mxu0 %v4122
      %5163 = vmatprep.subr.mxu0 0.0
      %5164 = vmatpush1.msra.mxu0 %v4123
      %5165 = vmatprep.subr.mxu0 0.0
      %5166 = vmatpush1.msra.mxu0 %v4124
      %5167 = vmatprep.subr.mxu0 0.0
      %5168 = vmatpush1.msra.mxu0 %v4125
      %5169 = vmatprep.subr.mxu0 0.0
      %5170 = vmatpush1.msra.mxu0 %v4126
      %5171 = vmatprep.subr.mxu0 0.0
      %5172 = vmatpush1.msra.mxu0 %v4127
      %5173 = vmatprep.mubr.f32.mxu0 %v3675
      %5174 = vmatmul.mubr.f32.gmra.mrb[0].mxu0 %v3674
      %v5175 = vpop.f32.mrb[0].mxu0
      %v5176 = vadd.f32 %v5106, %v5175
      %v5177 = vpop.f32.mrb[0].mxu0
      %5178 = vdwg.mxu0
      %5179 = vmatprep.subr.mxu0 0.0
      %5180 = vmatpush1.msra.mxu0 %v4128
      %5181 = vmatprep.subr.mxu0 0.0
      %5182 = vmatpush1.msra.mxu0 %v4129
      %5183 = vmatprep.subr.mxu0 0.0
      %5184 = vmatpush1.msra.mxu0 %v4130
      %5185 = vmatprep.subr.mxu0 0.0
      %5186 = vmatpush1.msra.mxu0 %v4131
      %5187 = vmatprep.subr.mxu0 0.0
      %5188 = vmatpush1.msra.mxu0 %v4132
      %5189 = vmatprep.subr.mxu0 0.0
      %5190 = vmatpush1.msra.mxu0 %v4133
      %5191 = vmatprep.subr.mxu0 0.0
      %5192 = vmatpush1.msra.mxu0 %v4134
      %5193 = vmatprep.subr.mxu0 0.0
      %5194 = vmatpush1.msra.mxu0 %v4135
      %5195 = vmatprep.subr.mxu0 0.0
      %5196 = vmatpush1.msra.mxu0 %v4136
      %5197 = vmatprep.subr.mxu0 0.0
      %5198 = vmatpush1.msra.mxu0 %v4137
      %5199 = vmatprep.subr.mxu0 0.0
      %5200 = vmatpush1.msra.mxu0 %v4138
      %5201 = vmatprep.subr.mxu0 0.0
      %5202 = vmatpush1.msra.mxu0 %v4139
      %5203 = vmatprep.subr.mxu0 0.0
      %5204 = vmatpush1.msra.mxu0 %v4140
      %5205 = vmatprep.subr.mxu0 0.0
      %5206 = vmatpush1.msra.mxu0 %v4141
      %5207 = vmatprep.subr.mxu0 0.0
      %5208 = vmatpush1.msra.mxu0 %v4142
      %5209 = vmatprep.subr.mxu0 0.0
      %5210 = vmatpush1.msra.mxu0 %v4143
      %5211 = vmatprep.subr.mxu0 0.0
      %5212 = vmatpush1.msra.mxu0 %v4144
      %5213 = vmatprep.subr.mxu0 0.0
      %5214 = vmatpush1.msra.mxu0 %v4145
      %5215 = vmatprep.subr.mxu0 0.0
      %5216 = vmatpush1.msra.mxu0 %v4146
      %5217 = vmatprep.subr.mxu0 0.0
      %5218 = vmatpush1.msra.mxu0 %v4147
      %5219 = vmatprep.subr.mxu0 0.0
      %5220 = vmatpush1.msra.mxu0 %v4148
      %5221 = vmatprep.subr.mxu0 0.0
      %5222 = vmatpush1.msra.mxu0 %v4149
      %5223 = vmatprep.subr.mxu0 0.0
      %5224 = vmatpush1.msra.mxu0 %v4150
      %5225 = vmatprep.subr.mxu0 0.0
      %5226 = vmatpush1.msra.mxu0 %v4151
      %5227 = vmatprep.subr.mxu0 0.0
      %5228 = vmatpush1.msra.mxu0 %v4152
      %5229 = vmatprep.subr.mxu0 0.0
      %5230 = vmatpush1.msra.mxu0 %v4153
      %5231 = vmatprep.subr.mxu0 0.0
      %5232 = vmatpush1.msra.mxu0 %v4154
      %5233 = vmatprep.subr.mxu0 0.0
      %5234 = vmatpush1.msra.mxu0 %v4155
      %5235 = vmatprep.subr.mxu0 0.0
      %5236 = vmatpush1.msra.mxu0 %v4156
      %5237 = vmatprep.subr.mxu0 0.0
      %5238 = vmatpush1.msra.mxu0 %v4157
      %5239 = vmatprep.subr.mxu0 0.0
      %5240 = vmatpush1.msra.mxu0 %v4158
      %5241 = vmatprep.subr.mxu0 0.0
      %5242 = vmatpush1.msra.mxu0 %v4159
      %5243 = vmatprep.mubr.f32.mxu0 %v3677
      %5244 = vmatmul.mubr.f32.gmra.mrb[0].mxu0 %v3676
      %v5245 = vpop.f32.mrb[0].mxu0
      %v5246 = vadd.f32 %v5176, %v5245
      %v5247 = vpop.f32.mrb[0].mxu0
      %5248 = vdwg.mxu0
      %5249 = vmatprep.subr.mxu0 0.0
      %5250 = vmatpush1.msra.mxu0 %v4160
      %5251 = vmatprep.subr.mxu0 0.0
      %5252 = vmatpush1.msra.mxu0 %v4161
      %5253 = vmatprep.subr.mxu0 0.0
      %5254 = vmatpush1.msra.mxu0 %v4162
      %5255 = vmatprep.subr.mxu0 0.0
      %5256 = vmatpush1.msra.mxu0 %v4163
      %5257 = vmatprep.subr.mxu0 0.0
      %5258 = vmatpush1.msra.mxu0 %v4164
      %5259 = vmatprep.subr.mxu0 0.0
      %5260 = vmatpush1.msra.mxu0 %v4165
      %5261 = vmatprep.subr.mxu0 0.0
      %5262 = vmatpush1.msra.mxu0 %v4166
      %5263 = vmatprep.subr.mxu0 0.0
      %5264 = vmatpush1.msra.mxu0 %v4167
      %5265 = vmatprep.subr.mxu0 0.0
      %5266 = vmatpush1.msra.mxu0 %v4168
      %5267 = vmatprep.subr.mxu0 0.0
      %5268 = vmatpush1.msra.mxu0 %v4169
      %5269 = vmatprep.subr.mxu0 0.0
      %5270 = vmatpush1.msra.mxu0 %v4170
      %5271 = vmatprep.subr.mxu0 0.0
      %5272 = vmatpush1.msra.mxu0 %v4171
      %5273 = vmatprep.subr.mxu0 0.0
      %5274 = vmatpush1.msra.mxu0 %v4172
      %5275 = vmatprep.subr.mxu0 0.0
      %5276 = vmatpush1.msra.mxu0 %v4173
      %5277 = vmatprep.subr.mxu0 0.0
      %5278 = vmatpush1.msra.mxu0 %v4174
      %5279 = vmatprep.subr.mxu0 0.0
      %5280 = vmatpush1.msra.mxu0 %v4175
      %5281 = vmatprep.subr.mxu0 0.0
      %5282 = vmatpush1.msra.mxu0 %v4176
      %5283 = vmatprep.subr.mxu0 0.0
      %5284 = vmatpush1.msra.mxu0 %v4177
      %5285 = vmatprep.subr.mxu0 0.0
      %5286 = vmatpush1.msra.mxu0 %v4178
      %5287 = vmatprep.subr.mxu0 0.0
      %5288 = vmatpush1.msra.mxu0 %v4179
      %5289 = vmatprep.subr.mxu0 0.0
      %5290 = vmatpush1.msra.mxu0 %v4180
      %5291 = vmatprep.subr.mxu0 0.0
      %5292 = vmatpush1.msra.mxu0 %v4181
      %5293 = vmatprep.subr.mxu0 0.0
      %5294 = vmatpush1.msra.mxu0 %v4182
      %5295 = vmatprep.subr.mxu0 0.0
      %5296 = vmatpush1.msra.mxu0 %v4183
      %5297 = vmatprep.subr.mxu0 0.0
      %5298 = vmatpush1.msra.mxu0 %v4184
      %5299 = vmatprep.subr.mxu0 0.0
      %5300 = vmatpush1.msra.mxu0 %v4185
      %5301 = vmatprep.subr.mxu0 0.0
      %5302 = vmatpush1.msra.mxu0 %v4186
      %5303 = vmatprep.subr.mxu0 0.0
      %5304 = vmatpush1.msra.mxu0 %v4187
      %5305 = vmatprep.subr.mxu0 0.0
      %5306 = vmatpush1.msra.mxu0 %v4188
      %5307 = vmatprep.subr.mxu0 0.0
      %5308 = vmatpush1.msra.mxu0 %v4189
      %5309 = vmatprep.subr.mxu0 0.0
      %5310 = vmatpush1.msra.mxu0 %v4190
      %5311 = vmatprep.subr.mxu0 0.0
      %5312 = vmatpush1.msra.mxu0 %v4191
      %5313 = vmatprep.mubr.f32.mxu0 %v3679
      %5314 = vmatmul.mubr.f32.gmra.mrb[0].mxu0 %v3678
      %v5315 = vpop.f32.mrb[0].mxu0
      %v5316 = vadd.f32 %v5246, %v5315
      %v5317 = vpop.f32.mrb[0].mxu0
      %5318 = vdwg.mxu0
      %v5319 = vmax.f32 %v5316, 0.0
      %v5320 = vld [vmem:[%s10] sm:$0xff]
      %v5321 = vld [vmem:[%s10 + $0x8] sm:$0xff]
      %v5322 = vld [vmem:[%s10 + $0x10] sm:$0xff]
      %v5323 = vld [vmem:[%s10 + $0x18] sm:$0xff]
      %v5324 = vld [vmem:[%s11] sm:$0x1]
      %v5326 = vlaneseq
      %v5327 = vshrl.u32 %v5326, 7
      %v5328 = vsub.s32 0, %v5327
      %v5329 = vrot.slane %v5324, %v5328
      %vm5331 = vcmask 261120
      %v5333 = vsel %vm5331, %v5319, 0
      %5335 = vmatprep.subr.mxu0 0.0
      %5336 = vmatpush1.msra.mxu0 %v5320
      %5337 = vmatprep.subr.mxu0 0.0
      %5338 = vmatpush1.msra.mxu0 %v5321
      %5339 = vmatprep.subr.mxu0 0.0
      %5340 = vmatpush1.msra.mxu0 %v5322
      %5341 = vmatprep.subr.mxu0 0.0
      %5342 = vmatpush1.msra.mxu0 %v5323
      %5343 = vmatprep.subr.mxu0 0.0
      %5344 = vmatpush1.msra.mxu0 0.0
      %5345 = vmatprep.subr.mxu0 0.0
      %5346 = vmatpush1.msra.mxu0 0.0
      %5347 = vmatprep.subr.mxu0 0.0
      %5348 = vmatpush1.msra.mxu0 0.0
      %5349 = vmatprep.subr.mxu0 0.0
      %5350 = vmatpush1.msra.mxu0 0.0
      %5351 = vmatprep.subr.mxu0 0.0
      %5352 = vmatpush1.msra.mxu0 0.0
      %5353 = vmatprep.subr.mxu0 0.0
      %5354 = vmatpush1.msra.mxu0 0.0
      %5355 = vmatprep.subr.mxu0 0.0
      %5356 = vmatpush1.msra.mxu0 0.0
      %5357 = vmatprep.subr.mxu0 0.0
      %5358 = vmatpush1.msra.mxu0 0.0
      %5359 = vmatprep.subr.mxu0 0.0
      %5360 = vmatpush1.msra.mxu0 0.0
      %5361 = vmatprep.subr.mxu0 0.0
      %5362 = vmatpush1.msra.mxu0 0.0
      %5363 = vmatprep.subr.mxu0 0.0
      %5364 = vmatpush1.msra.mxu0 0.0
      %5365 = vmatprep.subr.mxu0 0.0
      %5366 = vmatpush1.msra.mxu0 0.0
      %5367 = vmatprep.subr.mxu0 0.0
      %5368 = vmatpush1.msra.mxu0 0.0
      %5369 = vmatprep.subr.mxu0 0.0
      %5370 = vmatpush1.msra.mxu0 0.0
      %5371 = vmatprep.subr.mxu0 0.0
      %5372 = vmatpush1.msra.mxu0 0.0
      %5373 = vmatprep.subr.mxu0 0.0
      %5374 = vmatpush1.msra.mxu0 0.0
      %5375 = vmatprep.subr.mxu0 0.0
      %5376 = vmatpush1.msra.mxu0 0.0
      %5377 = vmatprep.subr.mxu0 0.0
      %5378 = vmatpush1.msra.mxu0 0.0
      %5379 = vmatprep.subr.mxu0 0.0
      %5380 = vmatpush1.msra.mxu0 0.0
      %5381 = vmatprep.subr.mxu0 0.0
      %5382 = vmatpush1.msra.mxu0 0.0
      %5383 = vmatprep.subr.mxu0 0.0
      %5384 = vmatpush1.msra.mxu0 0.0
      %5385 = vmatprep.subr.mxu0 0.0
      %5386 = vmatpush1.msra.mxu0 0.0
      %5387 = vmatprep.subr.mxu0 0.0
      %5388 = vmatpush1.msra.mxu0 0.0
      %5389 = vmatprep.subr.mxu0 0.0
      %5390 = vmatpush1.msra.mxu0 0.0
      %5391 = vmatprep.subr.mxu0 0.0
      %5392 = vmatpush1.msra.mxu0 0.0
      %5393 = vmatprep.subr.mxu0 0.0
      %5394 = vmatpush1.msra.mxu0 0.0
      %5395 = vmatprep.subr.mxu0 0.0
      %5396 = vmatpush1.msra.mxu0 0.0
      %5397 = vmatprep.subr.mxu0 0.0
      %5398 = vmatpush1.msra.mxu0 0.0
      %5399 = vmatprep.mubr.f32.mxu0 0.0
      %5400 = vmatmul.mubr.f32.gmra.mrb[0].mxu0 %v5333
      %v5401 = vpop.f32.mrb[0].mxu0
      %v5402 = vadd.f32 %v5329, %v5401
      %v5403 = vpop.f32.mrb[0].mxu0
      %5404 = vdwg.mxu0
      %v5405 = vld [vmem:[%s12] sm:$0xff]
      %v5406 = vld [vmem:[%s12 + $0x8] sm:$0xff]
      %v5407 = vld [vmem:[%s12 + $0x10] sm:$0xff]
      %v5408 = vld [vmem:[%s12 + $0x18] sm:$0xff]
      %v5409 = vld [vmem:[%s13] sm:$0x1]
      %v5411 = vlaneseq
      %v5412 = vshrl.u32 %v5411, 7
      %v5413 = vsub.s32 0, %v5412
      %v5414 = vrot.slane %v5409, %v5413
      %v5417 = vsel %vm5331, %v5402, 0
      %5419 = vmatprep.subr.mxu0 0.0
      %5420 = vmatpush1.msra.mxu0 %v5405
      %5421 = vmatprep.subr.mxu0 0.0
      %5422 = vmatpush1.msra.mxu0 %v5406
      %5423 = vmatprep.subr.mxu0 0.0
      %5424 = vmatpush1.msra.mxu0 %v5407
      %5425 = vmatprep.subr.mxu0 0.0
      %5426 = vmatpush1.msra.mxu0 %v5408
      %5427 = vmatprep.subr.mxu0 0.0
      %5428 = vmatpush1.msra.mxu0 0.0
      %5429 = vmatprep.subr.mxu0 0.0
      %5430 = vmatpush1.msra.mxu0 0.0
      %5431 = vmatprep.subr.mxu0 0.0
      %5432 = vmatpush1.msra.mxu0 0.0
      %5433 = vmatprep.subr.mxu0 0.0
      %5434 = vmatpush1.msra.mxu0 0.0
      %5435 = vmatprep.subr.mxu0 0.0
      %5436 = vmatpush1.msra.mxu0 0.0
      %5437 = vmatprep.subr.mxu0 0.0
      %5438 = vmatpush1.msra.mxu0 0.0
      %5439 = vmatprep.subr.mxu0 0.0
      %5440 = vmatpush1.msra.mxu0 0.0
      %5441 = vmatprep.subr.mxu0 0.0
      %5442 = vmatpush1.msra.mxu0 0.0
      %5443 = vmatprep.subr.mxu0 0.0
      %5444 = vmatpush1.msra.mxu0 0.0
      %5445 = vmatprep.subr.mxu0 0.0
      %5446 = vmatpush1.msra.mxu0 0.0
      %5447 = vmatprep.subr.mxu0 0.0
      %5448 = vmatpush1.msra.mxu0 0.0
      %5449 = vmatprep.subr.mxu0 0.0
      %5450 = vmatpush1.msra.mxu0 0.0
      %5451 = vmatprep.subr.mxu0 0.0
      %5452 = vmatpush1.msra.mxu0 0.0
      %5453 = vmatprep.subr.mxu0 0.0
      %5454 = vmatpush1.msra.mxu0 0.0
      %5455 = vmatprep.subr.mxu0 0.0
      %5456 = vmatpush1.msra.mxu0 0.0
      %5457 = vmatprep.subr.mxu0 0.0
      %5458 = vmatpush1.msra.mxu0 0.0
      %5459 = vmatprep.subr.mxu0 0.0
      %5460 = vmatpush1.msra.mxu0 0.0
      %5461 = vmatprep.subr.mxu0 0.0
      %5462 = vmatpush1.msra.mxu0 0.0
      %5463 = vmatprep.subr.mxu0 0.0
      %5464 = vmatpush1.msra.mxu0 0.0
      %5465 = vmatprep.subr.mxu0 0.0
      %5466 = vmatpush1.msra.mxu0 0.0
      %5467 = vmatprep.subr.mxu0 0.0
      %5468 = vmatpush1.msra.mxu0 0.0
      %5469 = vmatprep.subr.mxu0 0.0
      %5470 = vmatpush1.msra.mxu0 0.0
      %5471 = vmatprep.subr.mxu0 0.0
      %5472 = vmatpush1.msra.mxu0 0.0
      %5473 = vmatprep.subr.mxu0 0.0
      %5474 = vmatpush1.msra.mxu0 0.0
      %5475 = vmatprep.subr.mxu0 0.0
      %5476 = vmatpush1.msra.mxu0 0.0
      %5477 = vmatprep.subr.mxu0 0.0
      %5478 = vmatpush1.msra.mxu0 0.0
      %5479 = vmatprep.subr.mxu0 0.0
      %5480 = vmatpush1.msra.mxu0 0.0
      %5481 = vmatprep.subr.mxu0 0.0
      %5482 = vmatpush1.msra.mxu0 0.0
      %5483 = vmatprep.mubr.f32.mxu0 0.0
      %5484 = vmatmul.mubr.f32.gmra.mrb[0].mxu0 %v5417
      %v5485 = vpop.f32.mrb[0].mxu0
      %v5486 = vadd.f32 %v5414, %v5485
      %v5487 = vpop.f32.mrb[0].mxu0
      %5488 = vdwg.mxu0
      %v5489 = vmax.f32 %v5486, 0.0
      %v5490 = vld [vmem:[%s14] sm:$0xff]
      %v5491 = vld [vmem:[%s14 + $0x8] sm:$0xff]
      %v5492 = vld [vmem:[%s14 + $0x10] sm:$0xff]
      %v5493 = vld [vmem:[%s14 + $0x18] sm:$0xff]
      %v5494 = vld [vmem:[%s15] sm:$0x1]
      %v5496 = vlaneseq
      %v5497 = vshrl.u32 %v5496, 7
      %v5498 = vsub.s32 0, %v5497
      %v5499 = vrot.slane %v5494, %v5498
      %v5502 = vsel %vm5331, %v5489, 0
      %5504 = vmatprep.subr.mxu0 0.0
      %5505 = vmatpush1.msra.mxu0 %v5490
      %5506 = vmatprep.subr.mxu0 0.0
      %5507 = vmatpush1.msra.mxu0 %v5491
      %5508 = vmatprep.subr.mxu0 0.0
      %5509 = vmatpush1.msra.mxu0 %v5492
      %5510 = vmatprep.subr.mxu0 0.0
      %5511 = vmatpush1.msra.mxu0 %v5493
      %5512 = vmatprep.subr.mxu0 0.0
      %5513 = vmatpush1.msra.mxu0 0.0
      %5514 = vmatprep.subr.mxu0 0.0
      %5515 = vmatpush1.msra.mxu0 0.0
      %5516 = vmatprep.subr.mxu0 0.0
      %5517 = vmatpush1.msra.mxu0 0.0
      %5518 = vmatprep.subr.mxu0 0.0
      %5519 = vmatpush1.msra.mxu0 0.0
      %5520 = vmatprep.subr.mxu0 0.0
      %5521 = vmatpush1.msra.mxu0 0.0
      %5522 = vmatprep.subr.mxu0 0.0
      %5523 = vmatpush1.msra.mxu0 0.0
      %5524 = vmatprep.subr.mxu0 0.0
      %5525 = vmatpush1.msra.mxu0 0.0
      %5526 = vmatprep.subr.mxu0 0.0
      %5527 = vmatpush1.msra.mxu0 0.0
      %5528 = vmatprep.subr.mxu0 0.0
      %5529 = vmatpush1.msra.mxu0 0.0
      %5530 = vmatprep.subr.mxu0 0.0
      %5531 = vmatpush1.msra.mxu0 0.0
      %5532 = vmatprep.subr.mxu0 0.0
      %5533 = vmatpush1.msra.mxu0 0.0
      %5534 = vmatprep.subr.mxu0 0.0
      %5535 = vmatpush1.msra.mxu0 0.0
      %5536 = vmatprep.subr.mxu0 0.0
      %5537 = vmatpush1.msra.mxu0 0.0
      %5538 = vmatprep.subr.mxu0 0.0
      %5539 = vmatpush1.msra.mxu0 0.0
      %5540 = vmatprep.subr.mxu0 0.0
      %5541 = vmatpush1.msra.mxu0 0.0
      %5542 = vmatprep.subr.mxu0 0.0
      %5543 = vmatpush1.msra.mxu0 0.0
      %5544 = vmatprep.subr.mxu0 0.0
      %5545 = vmatpush1.msra.mxu0 0.0
      %5546 = vmatprep.subr.mxu0 0.0
      %5547 = vmatpush1.msra.mxu0 0.0
      %5548 = vmatprep.subr.mxu0 0.0
      %5549 = vmatpush1.msra.mxu0 0.0
      %5550 = vmatprep.subr.mxu0 0.0
      %5551 = vmatpush1.msra.mxu0 0.0
      %5552 = vmatprep.subr.mxu0 0.0
      %5553 = vmatpush1.msra.mxu0 0.0
      %5554 = vmatprep.subr.mxu0 0.0
      %5555 = vmatpush1.msra.mxu0 0.0
      %5556 = vmatprep.subr.mxu0 0.0
      %5557 = vmatpush1.msra.mxu0 0.0
      %5558 = vmatprep.subr.mxu0 0.0
      %5559 = vmatpush1.msra.mxu0 0.0
      %5560 = vmatprep.subr.mxu0 0.0
      %5561 = vmatpush1.msra.mxu0 0.0
      %5562 = vmatprep.subr.mxu0 0.0
      %5563 = vmatpush1.msra.mxu0 0.0
      %5564 = vmatprep.subr.mxu0 0.0
      %5565 = vmatpush1.msra.mxu0 0.0
      %5566 = vmatprep.subr.mxu0 0.0
      %5567 = vmatpush1.msra.mxu0 0.0
      %5568 = vmatprep.mubr.f32.mxu0 0.0
      %5569 = vmatmul.mubr.f32.gmra.mrb[0].mxu0 %v5502
      %v5570 = vpop.f32.mrb[0].mxu0
      %v5571 = vadd.f32 %v5499, %v5570
      %v5572 = vpop.f32.mrb[0].mxu0
      %5573 = vdwg.mxu0
      %5574 = vst [vmem:[%s519] sm:$0xff] %v5571
      %p5575 = scmp.lt.s32.totalorder %s27, 1
      %s5576 = scalar_select %p5575, %s27, 1
      %s5577 = smul.addr %s5576, 8
      %s5578 = scalar_lea.vmem %s16, %s5577
      // Predicated region
      $region85: #{fwd.1} parent=83 // pred_check
        %p5579 = pneg %p386
      $region86: #{fwd.1} parent=83 // pred_check_branch
        %5581 = sbr.rel (%p5579) target = $region88
      $region87: #{fwd.1} parent=83 // pred_region
        _
      $region88: #{fwd.1} parent=83 // pred_fallthru
        _
    $region84: #{fwd.1} parent=5 // pred_fallthru
      _
    %p5582 = scmp.le.s32.totalorder 2, %s22
    // Predicated region
    $region89: #{fwd.1} parent=5 // pred_check
      %p5583 = pneg %p5582
    $region90: #{fwd.1} parent=5 // pred_check_branch
      %5585 = sbr.rel (%p5583) target = $region92
    $region91: #{fwd.1} parent=5 // pred_region
      %s5586 = ssub.s32 %s22, 2
      // Predicated region
      $region93: #{fwd.1} parent=91 // pred_check
        %p5587 = pneg %p392
      $region94: #{fwd.1} parent=91 // pred_check_branch
        %5589 = sbr.rel (%p5587) target = $region96
      $region95: #{fwd.1} parent=91 // pred_region
        %p5590 = scmp.lt.s32.totalorder %s28, 1
        %s5591 = scalar_select %p5590, %s28, 1
        %s5592 = smul.addr %s5591, 8
        %s5593 = scalar_lea.vmem %s16, %s5592
      $region96: #{fwd.1} parent=91 // pred_fallthru
        _
    $region92: #{fwd.1} parent=5 // pred_fallthru
      _
  $region6: #{fwd.1} parent=0 // loop_footer
    %s26 = sadd.s32 1, %s22
  $region7: #{fwd.1} parent=0 // loop_footer_branch
    %21 = sbr.rel target = $region3
  $region8: #{fwd.1} parent=0 // loop_exit
    _

</llo_original>
